<compile_context>
chip_gen: v7x
topology: tpu7x:2x2x1
jax: 0.10.0
libtpu: 0.0.40
codegen_flags: <defaults>
</compile_context>

<pallas_src>
import math
import functools

import numpy as np
import jax
import jax.numpy as jnp
from jax.experimental import pallas as pl
from jax.experimental.pallas import tpu as pltpu

_BF16 = jnp.bfloat16   # MXU operand dtype (accumulation and all VPU/EUP math stay f32)


# ----------------------------------------------------------------------------- glue (XLA side)
def unfold3x3(x, stride):
    """PyTorch nn.Unfold(kernel=(3,3), stride=stride, padding=1) on NCHW.
    Returns (B, C*9, L) with channel ordering c*9 + kh*3 + kw (torch convention)."""
    B, C, H, W = x.shape
    xp = jnp.pad(x, ((0, 0), (0, 0), (1, 1), (1, 1)))
    Ho = (H + 2 - 3) // stride + 1
    Wo = (W + 2 - 3) // stride + 1
    cols = []
    for kh in range(3):
        for kw in range(3):
            cols.append(xp[:, :,
                           kh:kh + (Ho - 1) * stride + 1:stride,
                           kw:kw + (Wo - 1) * stride + 1:stride])
    col = jnp.stack(cols, axis=2)                 # (B, C, 9, Ho, Wo)
    return col.reshape(B, C * 9, Ho * Wo)


def _unfold_selector_taps(s, s2):
    """(9, s2*s2, s*s) 0/1 gather matrices for a 3x3/stride-2/pad-1 unfold on an s x s
    token grid: tap (kh,kw), output (oi,oj) selects token (2*oi+kh-1)*s + (2*oj+kw-1)."""
    S = np.zeros((9, s2 * s2, s * s), np.float32)
    for kh in range(3):
        for kw in range(3):
            k = kh * 3 + kw
            for oi in range(s2):
                for oj in range(s2):
                    hi, wi = 2 * oi + kh - 1, 2 * oj + kw - 1
                    if 0 <= hi < s and 0 <= wi < s:
                        S[k, oi * s2 + oj, hi * s + wi] = 1.0
    return S


def _gelu_tanh(x):
    # TODO(synk): PyTorch nn.GELU defaults to the exact erf form; tanh approximation used
    # because erf lowering on Mosaic is not guaranteed.
    c = math.sqrt(2.0 / math.pi)
    return 0.5 * x * (1.0 + jnp.tanh(c * (x + 0.044715 * x * x * x)))


def _choose_block_batch(B, T, row_target=1024):
    """Largest per-step batch tile with Bb*T rows <= row_target, preferring >=2 grid steps
    so both v7x TensorCores get work on the parallel axis."""
    divs = [d for d in range(1, B + 1) if B % d == 0 and d * T <= row_target]
    if not divs:
        return 1
    pref = [d for d in divs if B // d >= 2]
    return max(pref) if pref else max(divs)


def _const_index_map(ndim):
    if ndim == 2:
        return lambda b: (0, 0)
    return lambda b: (0, 0, 0)


# ----------------------------------------------------------------------------- fused kernel
def t2t_kernel(tok_ref, g1_ref, be1_ref, ww_ref, wb_ref, wp_ref, bp_ref,
               g2_ref, be2_ref, w1_ref, b1_ref, w2_ref, b2_ref,
               wproj_ref, bproj_ref, s_ref, o_ref, *, emb, m, T, Bb):
    """Token_performer + soft_split2 + project, one (Bb, T, dim) batch tile per grid step."""
    dim = tok_ref.shape[-1]

    # ---------------- LayerNorm 1 (single-pass sum / sum-of-squares, f32 VPU math)
    x = tok_ref[...].reshape(Bb * T, dim).astype(jnp.float32)
    mu = jnp.sum(x, axis=-1, keepdims=True) * (1.0 / dim)
    ex2 = jnp.sum(x * x, axis=-1, keepdims=True) * (1.0 / dim)
    xn = (x - mu) * jax.lax.rsqrt(ex2 - mu * mu + 1e-5) * g1_ref[0] + be1_ref[0]

    # ---------------- fused [k|q|v|wtz_k|wtz_q]: one wide MXU issue
    # (random-feature matrix pre-folded into the kqv weights at init; k/q/v order matches
    #  torch.split of the fused Linear)
    kqvw = jnp.dot(xn.astype(_BF16), ww_ref[...],
                   preferred_element_type=jnp.float32) + wb_ref[0]      # (Bb*T, 3*emb+2*m)
    k = kqvw[:, 0:emb]
    q = kqvw[:, emb:2 * emb]
    v = kqvw[:, 2 * emb:3 * emb]
    wtzk = kqvw[:, 3 * emb:3 * emb + m]
    wtzq = kqvw[:, 3 * emb + m:3 * emb + 2 * m]

    inv_sqrt_m = 1.0 / math.sqrt(m)
    kp = jnp.exp(wtzk - 0.5 * jnp.sum(k * k, axis=-1, keepdims=True)) * inv_sqrt_m
    qp = jnp.exp(wtzq - 0.5 * jnp.sum(q * q, axis=-1, keepdims=True)) * inv_sqrt_m

    # ---------------- performer attention (per-sample reductions, batched over Bb)
    kp3 = kp.reshape(Bb, T, m)
    qp3 = qp.reshape(Bb, T, m)
    v3 = v.reshape(Bb, T, emb)
    ks = jnp.sum(kp3, axis=1, keepdims=True)                             # (Bb, 1, m)
    D = jnp.sum(qp3 * ks, axis=-1, keepdims=True)                        # (Bb, T, 1)
    ktv = jax.lax.dot_general(kp3.astype(_BF16), v3.astype(_BF16),
                              (((1,), (1,)), ((0,), (0,))),
                              preferred_element_type=jnp.float32)        # (Bb, m, emb)
    y_att = jax.lax.dot_general(qp3.astype(_BF16), ktv.astype(_BF16),
                                (((2,), (1,)), ((0,), (0,))),
                                preferred_element_type=jnp.float32)      # (Bb, T, emb)
    y_att = y_att * pl.reciprocal(D + 1e-8, approx=True)                 # EUP, not a VALU divide
    y_att = y_att.reshape(Bb * T, emb)
    # skip connection uses v (as in Token_performer); dropout = identity
    y = v + jnp.dot(y_att.astype(_BF16), wp_ref[...],
                    preferred_element_type=jnp.float32) + bp_ref[0]

    # ---------------- LayerNorm 2 + MLP residual
    mu2 = jnp.sum(y, axis=-1, keepdims=True) * (1.0 / emb)
    ey2 = jnp.sum(y * y, axis=-1, keepdims=True) * (1.0 / emb)
    yn = (y - mu2) * jax.lax.rsqrt(ey2 - mu2 * mu2 + 1e-5) * g2_ref[0] + be2_ref[0]
    h = jnp.dot(yn.astype(_BF16), w1_ref[...],
                preferred_element_type=jnp.float32) + b1_ref[0]
    h = _gelu_tanh(h)
    h = jnp.dot(h.astype(_BF16), w2_ref[...],
                preferred_element_type=jnp.float32) + b2_ref[0]
    yt = (y + h).astype(_BF16).reshape(Bb, T, emb)                       # performer output

    # ---------------- soft_split2 + project: gather-then-project on the T2 output rows only
    for b in range(Bb):
        acc = None
        for tap in range(9):
            g = jnp.dot(s_ref[tap], yt[b],
                        preferred_element_type=jnp.float32)              # (T2, emb) 0/1 gather
            part = jnp.dot(g.astype(_BF16), wproj_ref[tap],
                           preferred_element_type=jnp.float32)           # (T2, Ep)
            acc = part if acc is None else acc + part
        o_ref[b] = (acc + bproj_ref[0]).astype(o_ref.dtype)


# ----------------------------------------------------------------------------- wrappers
def t2t_attention_project(tokens, p):
    """attention2 (Token_performer) + soft_split2 + project, fused into one pallas_call."""
    B, T, dim = tokens.shape
    emb = p['wp'].shape[0]
    m = (p['wkqv_wide'].shape[1] - 3 * emb) // 2
    E = p['bproj'].shape[1]
    Ep = p['wproj_taps'].shape[2]
    s = int(math.isqrt(T))                       # token grid side after soft_split1
    s2 = (s - 1) // 2 + 1                        # 3x3 / stride 2 / pad 1
    T2 = s2 * s2
    Bb = _choose_block_batch(B, T)

    S = jnp.asarray(_unfold_selector_taps(s, s2), _BF16)    # (9, T2, T) exact 0/1, bf16

    bproj = p['bproj']
    if Ep != E:
        bproj = jnp.pad(bproj, ((0, 0), (0, Ep - E)))        # lane-dense store padding

    param_args = [p['g1'], p['be1'], p['wkqv_wide'], p['bkqv_wide'],
                  p['wp'], p['bp'], p['g2'], p['be2'],
                  p['w1m'], p['b1m'], p['w2m'], p['b2m'],
                  p['wproj_taps'], bproj, S]

    in_specs = [pl.BlockSpec((Bb, T, dim), lambda b: (b, 0, 0))]
    # TODO(synk): constant-index parameter blocks are still double-buffered by the default
    # pipeline; single-buffer them (pl.Buffered(1) / manual scratch staging) if VMEM headroom
    # becomes load-bearing at larger configs.
    for a in param_args:
        in_specs.append(pl.BlockSpec(a.shape, _const_index_map(a.ndim)))

    out = pl.pallas_call(
        functools.partial(t2t_kernel, emb=emb, m=m, T=T, Bb=Bb),
        out_shape=jax.ShapeDtypeStruct((B, T2, Ep), jnp.float32),
        grid=(B // Bb,),
        in_specs=in_specs,
        out_specs=pl.BlockSpec((Bb, T2, Ep), lambda b: (b, 0, 0)),
        compiler_params=pltpu.CompilerParams(dimension_semantics=("parallel",)),
    )(tokens, *param_args)
    return out[:, :, :E] if Ep != E else out


def t2t_forward(x, params):
    """T2T_module.forward(x) with random_shuffle_forward=False, cls_token=None, bbox_token=None."""
    # soft_split1: Unfold(3,3) stride 2 pad 1, then transpose(1,2); tokens handed to the
    # kernel in bf16 to halve HBM read traffic of the dominant input.
    # TODO(synk): for v5e, move this unfold inside the kernel to avoid the 9x-duplicated HBM tensor.
    tokens = jnp.transpose(unfold3x3(x, stride=2), (0, 2, 1)).astype(_BF16)   # (B, L1, C*9)
    return t2t_attention_project(tokens, params)


# ----------------------------------------------------------------------------- params
def init_params(key, in_chans, token_dim, embed_dim, kernel_ratio=0.5):
    dim = in_chans * 3 * 3
    emb = token_dim
    m = int(emb * kernel_ratio)
    keys = jax.random.split(key, 8)

    def lin(k, fan_in, fan_out):
        sc = 1.0 / math.sqrt(fan_in)
        kw, kb = jax.random.split(k)
        return (jax.random.uniform(kw, (fan_in, fan_out), jnp.float32, -sc, sc),
                jax.random.uniform(kb, (1, fan_out), jnp.float32, -sc, sc))

    wk, bk = lin(keys[0], dim, emb)
    wq, bq = lin(keys[1], dim, emb)
    wv, bv = lin(keys[2], dim, emb)
    wrf = (jax.nn.initializers.orthogonal()(keys[3], (m, emb), jnp.float32)
           * math.sqrt(m))                                      # frozen random features (m, emb)
    wrf_t = jnp.transpose(wrf)                                  # (emb, m)
    wp, bp = lin(keys[4], emb, emb)
    w1m, b1m = lin(keys[5], emb, emb)
    w2m, b2m = lin(keys[6], emb, emb)
    wproj, bproj = lin(keys[7], token_dim * 3 * 3, embed_dim)   # rows ordered c*9 + k (torch unfold order)

    # wide fused weight: [Wk | Wq | Wv | Wk@wrf^T | Wq@wrf^T] -> prm_exp matmul pre-folded
    wkqv_wide = jnp.concatenate([wk, wq, wv, wk @ wrf_t, wq @ wrf_t], axis=1)   # (dim, 3*emb+2*m)
    bkqv_wide = jnp.concatenate([bk, bq, bv, bk @ wrf_t, bq @ wrf_t], axis=1)   # (1, 3*emb+2*m)

    # project weight regrouped per unfold tap: row c*9+k of the Linear -> wproj_taps[k, c, :],
    # last dim padded to a multiple of 128 for lane-dense (unmasked) output stores.
    Ep = ((embed_dim + 127) // 128) * 128
    wproj_taps = jnp.transpose(wproj.reshape(emb, 9, embed_dim), (1, 0, 2))     # (9, emb, E)
    if Ep != embed_dim:
        wproj_taps = jnp.pad(wproj_taps, ((0, 0), (0, 0), (0, Ep - embed_dim)))

    return dict(
        g1=jnp.ones((1, dim), jnp.float32), be1=jnp.zeros((1, dim), jnp.float32),
        wkqv_wide=wkqv_wide.astype(_BF16), bkqv_wide=bkqv_wide,
        wp=wp.astype(_BF16), bp=bp,
        g2=jnp.ones((1, emb), jnp.float32), be2=jnp.zeros((1, emb), jnp.float32),
        w1m=w1m.astype(_BF16), b1m=b1m, w2m=w2m.astype(_BF16), b2m=b2m,
        wproj_taps=wproj_taps.astype(_BF16),
        bproj=bproj,
    )


# ----------------------------------------------------------------------------- main
if __name__ == "__main__":
    key = jax.random.PRNGKey(0)
    k_x, k_p = jax.random.split(key)

    B, C, H, W = 2, 4, 16, 16            # small shapes: in_chans=4, 16x16 feature map
    token_dim, embed_dim = 16, 32        # kernel_ratio=0.5 -> m=8

    x = jax.random.normal(k_x, (B, C, H, W), jnp.float32)
    params = init_params(k_p, C, token_dim, embed_dim)

    out = jax.jit(t2t_forward)(x, params)
    out = jax.block_until_ready(out)

    # 16x16 -> unfold s2 -> 8x8 tokens -> unfold s2 -> 4x4 tokens -> embed_dim
    assert out.shape == (B, 16, embed_dim), out.shape
    assert out.dtype == jnp.float32
    assert bool(jnp.all(jnp.isfinite(out)))
    print("KERNEL_OK")
</pallas_src>

<mosaic_0001>
module attributes {stable_mosaic.version = 11 : i64} {
  func.func @t2t_kernel(%arg0: i32, %arg1: memref<1x64x36xbf16, #tpu.memory_space<vmem>>, %arg2: memref<1x36xf32, #tpu.memory_space<vmem>>, %arg3: memref<1x36xf32, #tpu.memory_space<vmem>>, %arg4: memref<36x64xbf16, #tpu.memory_space<vmem>>, %arg5: memref<1x64xf32, #tpu.memory_space<vmem>>, %arg6: memref<16x16xbf16, #tpu.memory_space<vmem>>, %arg7: memref<1x16xf32, #tpu.memory_space<vmem>>, %arg8: memref<1x16xf32, #tpu.memory_space<vmem>>, %arg9: memref<1x16xf32, #tpu.memory_space<vmem>>, %arg10: memref<16x16xbf16, #tpu.memory_space<vmem>>, %arg11: memref<1x16xf32, #tpu.memory_space<vmem>>, %arg12: memref<16x16xbf16, #tpu.memory_space<vmem>>, %arg13: memref<1x16xf32, #tpu.memory_space<vmem>>, %arg14: memref<9x16x128xbf16, #tpu.memory_space<vmem>>, %arg15: memref<1x128xf32, #tpu.memory_space<vmem>>, %arg16: memref<9x16x64xbf16, #tpu.memory_space<vmem>>, %arg17: memref<1x16x128xf32, #tpu.memory_space<vmem>>) attributes {dimension_semantics = [#tpu.dimension_semantics<parallel>], iteration_bounds = array<i64: 2>, scalar_prefetch = 0 : i64, scratch_operands = 0 : i64, tpu.core_type = #tpu.core_type<tc>, window_params = [{transform_indices = @transform_0, window_bounds = array<i64: 1, 64, 36>}, {pipeline_mode = #tpu.pipeline_mode<synchronous>, transform_indices = @transform_1, window_bounds = array<i64: 1, 36>}, {pipeline_mode = #tpu.pipeline_mode<synchronous>, transform_indices = @transform_2, window_bounds = array<i64: 1, 36>}, {pipeline_mode = #tpu.pipeline_mode<synchronous>, transform_indices = @transform_3, window_bounds = array<i64: 36, 64>}, {pipeline_mode = #tpu.pipeline_mode<synchronous>, transform_indices = @transform_4, window_bounds = array<i64: 1, 64>}, {pipeline_mode = #tpu.pipeline_mode<synchronous>, transform_indices = @transform_5, window_bounds = array<i64: 16, 16>}, {pipeline_mode = #tpu.pipeline_mode<synchronous>, transform_indices = @transform_6, window_bounds = array<i64: 1, 16>}, {pipeline_mode = #tpu.pipeline_mode<synchronous>, transform_indices = @transform_7, window_bounds = array<i64: 1, 16>}, {pipeline_mode = #tpu.pipeline_mode<synchronous>, transform_indices = @transform_8, window_bounds = array<i64: 1, 16>}, {pipeline_mode = #tpu.pipeline_mode<synchronous>, transform_indices = @transform_9, window_bounds = array<i64: 16, 16>}, {pipeline_mode = #tpu.pipeline_mode<synchronous>, transform_indices = @transform_10, window_bounds = array<i64: 1, 16>}, {pipeline_mode = #tpu.pipeline_mode<synchronous>, transform_indices = @transform_11, window_bounds = array<i64: 16, 16>}, {pipeline_mode = #tpu.pipeline_mode<synchronous>, transform_indices = @transform_12, window_bounds = array<i64: 1, 16>}, {pipeline_mode = #tpu.pipeline_mode<synchronous>, transform_indices = @transform_13, window_bounds = array<i64: 9, 16, 128>}, {pipeline_mode = #tpu.pipeline_mode<synchronous>, transform_indices = @transform_14, window_bounds = array<i64: 1, 128>}, {pipeline_mode = #tpu.pipeline_mode<synchronous>, transform_indices = @transform_15, window_bounds = array<i64: 9, 16, 64>}, {transform_indices = @transform_16, window_bounds = array<i64: 1, 16, 128>}]} {
    %c0 = arith.constant 0 : index
    %c0_0 = arith.constant 0 : index
    %c0_1 = arith.constant 0 : index
    %0 = vector.load %arg1[%c0, %c0_0, %c0_1] : memref<1x64x36xbf16, #tpu.memory_space<vmem>>, vector<1x64x36xbf16>
    %1 = vector.shape_cast %0 : vector<1x64x36xbf16> to vector<64x36xbf16>
    %2 = arith.extf %1 : vector<64x36xbf16> to vector<64x36xf32>
    %cst = arith.constant dense<0.000000e+00> : vector<64xf32>
    %3 = vector.multi_reduction <add>, %2, %cst [1] : vector<64x36xf32> to vector<64xf32>
    %4 = vector.shape_cast %3 : vector<64xf32> to vector<64x1xf32>
    %cst_2 = arith.constant 0.027777778 : f32
    %5 = vector.broadcast %cst_2 : f32 to vector<64x1xf32>
    %6 = arith.mulf %4, %5 : vector<64x1xf32>
    %7 = arith.mulf %2, %2 : vector<64x36xf32>
    %cst_3 = arith.constant dense<0.000000e+00> : vector<64xf32>
    %8 = vector.multi_reduction <add>, %7, %cst_3 [1] : vector<64x36xf32> to vector<64xf32>
    %9 = vector.shape_cast %8 : vector<64xf32> to vector<64x1xf32>
    %cst_4 = arith.constant 0.027777778 : f32
    %10 = vector.broadcast %cst_4 : f32 to vector<64x1xf32>
    %11 = arith.mulf %9, %10 : vector<64x1xf32>
    %12 = vector.broadcast %6 : vector<64x1xf32> to vector<64x36xf32>
    %13 = arith.subf %2, %12 : vector<64x36xf32>
    %14 = arith.mulf %6, %6 : vector<64x1xf32>
    %15 = arith.subf %11, %14 : vector<64x1xf32>
    %cst_5 = arith.constant 9.99999974E-6 : f32
    %16 = vector.broadcast %cst_5 : f32 to vector<64x1xf32>
    %17 = arith.addf %15, %16 : vector<64x1xf32>
    %18 = math.rsqrt %17 : vector<64x1xf32>
    %19 = vector.broadcast %18 : vector<64x1xf32> to vector<64x36xf32>
    %20 = arith.mulf %13, %19 : vector<64x36xf32>
    %c0_6 = arith.constant 0 : index
    %c0_7 = arith.constant 0 : index
    %21 = vector.load %arg2[%c0_6, %c0_7] : memref<1x36xf32, #tpu.memory_space<vmem>>, vector<1x36xf32>
    %22 = vector.shape_cast %21 : vector<1x36xf32> to vector<36xf32>
    %23 = vector.shape_cast %22 : vector<36xf32> to vector<1x36xf32>
    %24 = vector.broadcast %23 : vector<1x36xf32> to vector<64x36xf32>
    %25 = arith.mulf %20, %24 : vector<64x36xf32>
    %c0_8 = arith.constant 0 : index
    %c0_9 = arith.constant 0 : index
    %26 = vector.load %arg3[%c0_8, %c0_9] : memref<1x36xf32, #tpu.memory_space<vmem>>, vector<1x36xf32>
    %27 = vector.shape_cast %26 : vector<1x36xf32> to vector<36xf32>
    %28 = vector.shape_cast %27 : vector<36xf32> to vector<1x36xf32>
    %29 = vector.broadcast %28 : vector<1x36xf32> to vector<64x36xf32>
    %30 = arith.addf %25, %29 : vector<64x36xf32>
    %31 = arith.truncf %30 : vector<64x36xf32> to vector<64x36xbf16>
    %c0_10 = arith.constant 0 : index
    %c0_11 = arith.constant 0 : index
    %32 = vector.load %arg4[%c0_10, %c0_11] : memref<36x64xbf16, #tpu.memory_space<vmem>>, vector<36x64xbf16>
    %cst_12 = arith.constant dense<0.000000e+00> : vector<64x64xf32>
    %33 = tpu.matmul %31, %32, %cst_12 {dimension_numbers = #tpu.dot_dimension_numbers<[1], [0], [0], [1], [0, 0, 1, 1], [], []>} : vector<64x36xbf16>, vector<36x64xbf16>, vector<64x64xf32> -> vector<64x64xf32>
    %c0_13 = arith.constant 0 : index
    %c0_14 = arith.constant 0 : index
    %34 = vector.load %arg5[%c0_13, %c0_14] : memref<1x64xf32, #tpu.memory_space<vmem>>, vector<1x64xf32>
    %35 = vector.shape_cast %34 : vector<1x64xf32> to vector<64xf32>
    %36 = vector.shape_cast %35 : vector<64xf32> to vector<1x64xf32>
    %37 = vector.broadcast %36 : vector<1x64xf32> to vector<64x64xf32>
    %38 = arith.addf %33, %37 : vector<64x64xf32>
    %39 = vector.extract_strided_slice %38 {offsets = [0, 0], sizes = [64, 16], strides = [1, 1]} : vector<64x64xf32> to vector<64x16xf32>
    %40 = vector.extract_strided_slice %38 {offsets = [0, 16], sizes = [64, 16], strides = [1, 1]} : vector<64x64xf32> to vector<64x16xf32>
    %41 = vector.extract_strided_slice %38 {offsets = [0, 32], sizes = [64, 16], strides = [1, 1]} : vector<64x64xf32> to vector<64x16xf32>
    %42 = vector.extract_strided_slice %38 {offsets = [0, 48], sizes = [64, 8], strides = [1, 1]} : vector<64x64xf32> to vector<64x8xf32>
    %43 = vector.extract_strided_slice %38 {offsets = [0, 56], sizes = [64, 8], strides = [1, 1]} : vector<64x64xf32> to vector<64x8xf32>
    %44 = arith.mulf %39, %39 : vector<64x16xf32>
    %cst_15 = arith.constant dense<0.000000e+00> : vector<64xf32>
    %45 = vector.multi_reduction <add>, %44, %cst_15 [1] : vector<64x16xf32> to vector<64xf32>
    %46 = vector.shape_cast %45 : vector<64xf32> to vector<64x1xf32>
    %cst_16 = arith.constant 5.000000e-01 : f32
    %47 = vector.broadcast %cst_16 : f32 to vector<64x1xf32>
    %48 = arith.mulf %47, %46 : vector<64x1xf32>
    %49 = vector.broadcast %48 : vector<64x1xf32> to vector<64x8xf32>
    %50 = arith.subf %42, %49 : vector<64x8xf32>
    %51 = math.exp %50 : vector<64x8xf32>
    %cst_17 = arith.constant 0.353553385 : f32
    %52 = vector.broadcast %cst_17 : f32 to vector<64x8xf32>
    %53 = arith.mulf %51, %52 : vector<64x8xf32>
    %54 = arith.mulf %40, %40 : vector<64x16xf32>
    %cst_18 = arith.constant dense<0.000000e+00> : vector<64xf32>
    %55 = vector.multi_reduction <add>, %54, %cst_18 [1] : vector<64x16xf32> to vector<64xf32>
    %56 = vector.shape_cast %55 : vector<64xf32> to vector<64x1xf32>
    %cst_19 = arith.constant 5.000000e-01 : f32
    %57 = vector.broadcast %cst_19 : f32 to vector<64x1xf32>
    %58 = arith.mulf %57, %56 : vector<64x1xf32>
    %59 = vector.broadcast %58 : vector<64x1xf32> to vector<64x8xf32>
    %60 = arith.subf %43, %59 : vector<64x8xf32>
    %61 = math.exp %60 : vector<64x8xf32>
    %cst_20 = arith.constant 0.353553385 : f32
    %62 = vector.broadcast %cst_20 : f32 to vector<64x8xf32>
    %63 = arith.mulf %61, %62 : vector<64x8xf32>
    %64 = vector.shape_cast %53 : vector<64x8xf32> to vector<1x64x8xf32>
    %65 = vector.shape_cast %63 : vector<64x8xf32> to vector<1x64x8xf32>
    %66 = vector.shape_cast %41 : vector<64x16xf32> to vector<1x64x16xf32>
    %cst_21 = arith.constant dense<0.000000e+00> : vector<1x8xf32>
    %67 = vector.multi_reduction <add>, %64, %cst_21 [1] : vector<1x64x8xf32> to vector<1x8xf32>
    %68 = vector.shape_cast %67 : vector<1x8xf32> to vector<1x1x8xf32>
    %69 = vector.broadcast %68 : vector<1x1x8xf32> to vector<1x64x8xf32>
    %70 = arith.mulf %65, %69 : vector<1x64x8xf32>
    %cst_22 = arith.constant dense<0.000000e+00> : vector<1x64xf32>
    %71 = vector.multi_reduction <add>, %70, %cst_22 [2] : vector<1x64x8xf32> to vector<1x64xf32>
    %72 = vector.shape_cast %71 : vector<1x64xf32> to vector<1x64x1xf32>
    %73 = arith.truncf %64 : vector<1x64x8xf32> to vector<1x64x8xbf16>
    %74 = arith.truncf %66 : vector<1x64x16xf32> to vector<1x64x16xbf16>
    %cst_23 = arith.constant dense<0.000000e+00> : vector<1x8x16xf32>
    %75 = tpu.matmul %73, %74, %cst_23 {dimension_numbers = #tpu.dot_dimension_numbers<[1], [1], [2], [2], [0, 0, 0, 2, 1, 2], [0], [0]>} : vector<1x64x8xbf16>, vector<1x64x16xbf16>, vector<1x8x16xf32> -> vector<1x8x16xf32>
    %76 = arith.truncf %65 : vector<1x64x8xf32> to vector<1x64x8xbf16>
    %77 = arith.truncf %75 : vector<1x8x16xf32> to vector<1x8x16xbf16>
    %cst_24 = arith.constant dense<0.000000e+00> : vector<1x64x16xf32>
    %78 = tpu.matmul %76, %77, %cst_24 {dimension_numbers = #tpu.dot_dimension_numbers<[2], [1], [1], [2], [0, 0, 0, 1, 1, 2], [0], [0]>} : vector<1x64x8xbf16>, vector<1x8x16xbf16>, vector<1x64x16xf32> -> vector<1x64x16xf32>
    %cst_25 = arith.constant 9.99999993E-9 : f32
    %79 = vector.broadcast %cst_25 : f32 to vector<1x64x1xf32>
    %80 = arith.addf %72, %79 : vector<1x64x1xf32>
    %81 = tpu.reciprocal %80 {approx = true} : vector<1x64x1xf32> -> vector<1x64x1xf32>
    %82 = vector.broadcast %81 : vector<1x64x1xf32> to vector<1x64x16xf32>
    %83 = arith.mulf %78, %82 : vector<1x64x16xf32>
    %84 = vector.shape_cast %83 : vector<1x64x16xf32> to vector<64x16xf32>
    %85 = arith.truncf %84 : vector<64x16xf32> to vector<64x16xbf16>
    %c0_26 = arith.constant 0 : index
    %c0_27 = arith.constant 0 : index
    %86 = vector.load %arg6[%c0_26, %c0_27] : memref<16x16xbf16, #tpu.memory_space<vmem>>, vector<16x16xbf16>
    %cst_28 = arith.constant dense<0.000000e+00> : vector<64x16xf32>
    %87 = tpu.matmul %85, %86, %cst_28 {dimension_numbers = #tpu.dot_dimension_numbers<[1], [0], [0], [1], [0, 0, 1, 1], [], []>} : vector<64x16xbf16>, vector<16x16xbf16>, vector<64x16xf32> -> vector<64x16xf32>
    %88 = arith.addf %41, %87 : vector<64x16xf32>
    %c0_29 = arith.constant 0 : index
    %c0_30 = arith.constant 0 : index
    %89 = vector.load %arg7[%c0_29, %c0_30] : memref<1x16xf32, #tpu.memory_space<vmem>>, vector<1x16xf32>
    %90 = vector.shape_cast %89 : vector<1x16xf32> to vector<16xf32>
    %91 = vector.shape_cast %90 : vector<16xf32> to vector<1x16xf32>
    %92 = vector.broadcast %91 : vector<1x16xf32> to vector<64x16xf32>
    %93 = arith.addf %88, %92 : vector<64x16xf32>
    %cst_31 = arith.constant dense<0.000000e+00> : vector<64xf32>
    %94 = vector.multi_reduction <add>, %93, %cst_31 [1] : vector<64x16xf32> to vector<64xf32>
    %95 = vector.shape_cast %94 : vector<64xf32> to vector<64x1xf32>
    %cst_32 = arith.constant 6.250000e-02 : f32
    %96 = vector.broadcast %cst_32 : f32 to vector<64x1xf32>
    %97 = arith.mulf %95, %96 : vector<64x1xf32>
    %98 = arith.mulf %93, %93 : vector<64x16xf32>
    %cst_33 = arith.constant dense<0.000000e+00> : vector<64xf32>
    %99 = vector.multi_reduction <add>, %98, %cst_33 [1] : vector<64x16xf32> to vector<64xf32>
    %100 = vector.shape_cast %99 : vector<64xf32> to vector<64x1xf32>
    %cst_34 = arith.constant 6.250000e-02 : f32
    %101 = vector.broadcast %cst_34 : f32 to vector<64x1xf32>
    %102 = arith.mulf %100, %101 : vector<64x1xf32>
    %103 = vector.broadcast %97 : vector<64x1xf32> to vector<64x16xf32>
    %104 = arith.subf %93, %103 : vector<64x16xf32>
    %105 = arith.mulf %97, %97 : vector<64x1xf32>
    %106 = arith.subf %102, %105 : vector<64x1xf32>
    %cst_35 = arith.constant 9.99999974E-6 : f32
    %107 = vector.broadcast %cst_35 : f32 to vector<64x1xf32>
    %108 = arith.addf %106, %107 : vector<64x1xf32>
    %109 = math.rsqrt %108 : vector<64x1xf32>
    %110 = vector.broadcast %109 : vector<64x1xf32> to vector<64x16xf32>
    %111 = arith.mulf %104, %110 : vector<64x16xf32>
    %c0_36 = arith.constant 0 : index
    %c0_37 = arith.constant 0 : index
    %112 = vector.load %arg8[%c0_36, %c0_37] : memref<1x16xf32, #tpu.memory_space<vmem>>, vector<1x16xf32>
    %113 = vector.shape_cast %112 : vector<1x16xf32> to vector<16xf32>
    %114 = vector.shape_cast %113 : vector<16xf32> to vector<1x16xf32>
    %115 = vector.broadcast %114 : vector<1x16xf32> to vector<64x16xf32>
    %116 = arith.mulf %111, %115 : vector<64x16xf32>
    %c0_38 = arith.constant 0 : index
    %c0_39 = arith.constant 0 : index
    %117 = vector.load %arg9[%c0_38, %c0_39] : memref<1x16xf32, #tpu.memory_space<vmem>>, vector<1x16xf32>
    %118 = vector.shape_cast %117 : vector<1x16xf32> to vector<16xf32>
    %119 = vector.shape_cast %118 : vector<16xf32> to vector<1x16xf32>
    %120 = vector.broadcast %119 : vector<1x16xf32> to vector<64x16xf32>
    %121 = arith.addf %116, %120 : vector<64x16xf32>
    %122 = arith.truncf %121 : vector<64x16xf32> to vector<64x16xbf16>
    %c0_40 = arith.constant 0 : index
    %c0_41 = arith.constant 0 : index
    %123 = vector.load %arg10[%c0_40, %c0_41] : memref<16x16xbf16, #tpu.memory_space<vmem>>, vector<16x16xbf16>
    %cst_42 = arith.constant dense<0.000000e+00> : vector<64x16xf32>
    %124 = tpu.matmul %122, %123, %cst_42 {dimension_numbers = #tpu.dot_dimension_numbers<[1], [0], [0], [1], [0, 0, 1, 1], [], []>} : vector<64x16xbf16>, vector<16x16xbf16>, vector<64x16xf32> -> vector<64x16xf32>
    %c0_43 = arith.constant 0 : index
    %c0_44 = arith.constant 0 : index
    %125 = vector.load %arg11[%c0_43, %c0_44] : memref<1x16xf32, #tpu.memory_space<vmem>>, vector<1x16xf32>
    %126 = vector.shape_cast %125 : vector<1x16xf32> to vector<16xf32>
    %127 = vector.shape_cast %126 : vector<16xf32> to vector<1x16xf32>
    %128 = vector.broadcast %127 : vector<1x16xf32> to vector<64x16xf32>
    %129 = arith.addf %124, %128 : vector<64x16xf32>
    %cst_45 = arith.constant 5.000000e-01 : f32
    %130 = vector.broadcast %cst_45 : f32 to vector<64x16xf32>
    %131 = arith.mulf %130, %129 : vector<64x16xf32>
    %cst_46 = arith.constant 4.471500e-02 : f32
    %132 = vector.broadcast %cst_46 : f32 to vector<64x16xf32>
    %133 = arith.mulf %132, %129 : vector<64x16xf32>
    %134 = arith.mulf %133, %129 : vector<64x16xf32>
    %135 = arith.mulf %134, %129 : vector<64x16xf32>
    %136 = arith.addf %129, %135 : vector<64x16xf32>
    %cst_47 = arith.constant 0.797884583 : f32
    %137 = vector.broadcast %cst_47 : f32 to vector<64x16xf32>
    %138 = arith.mulf %137, %136 : vector<64x16xf32>
    %139 = math.tanh %138 : vector<64x16xf32>
    %cst_48 = arith.constant 1.000000e+00 : f32
    %140 = vector.broadcast %cst_48 : f32 to vector<64x16xf32>
    %141 = arith.addf %140, %139 : vector<64x16xf32>
    %142 = arith.mulf %131, %141 : vector<64x16xf32>
    %143 = arith.truncf %142 : vector<64x16xf32> to vector<64x16xbf16>
    %c0_49 = arith.constant 0 : index
    %c0_50 = arith.constant 0 : index
    %144 = vector.load %arg12[%c0_49, %c0_50] : memref<16x16xbf16, #tpu.memory_space<vmem>>, vector<16x16xbf16>
    %cst_51 = arith.constant dense<0.000000e+00> : vector<64x16xf32>
    %145 = tpu.matmul %143, %144, %cst_51 {dimension_numbers = #tpu.dot_dimension_numbers<[1], [0], [0], [1], [0, 0, 1, 1], [], []>} : vector<64x16xbf16>, vector<16x16xbf16>, vector<64x16xf32> -> vector<64x16xf32>
    %c0_52 = arith.constant 0 : index
    %c0_53 = arith.constant 0 : index
    %146 = vector.load %arg13[%c0_52, %c0_53] : memref<1x16xf32, #tpu.memory_space<vmem>>, vector<1x16xf32>
    %147 = vector.shape_cast %146 : vector<1x16xf32> to vector<16xf32>
    %148 = vector.shape_cast %147 : vector<16xf32> to vector<1x16xf32>
    %149 = vector.broadcast %148 : vector<1x16xf32> to vector<64x16xf32>
    %150 = arith.addf %145, %149 : vector<64x16xf32>
    %151 = arith.addf %93, %150 : vector<64x16xf32>
    %152 = arith.truncf %151 : vector<64x16xf32> to vector<64x16xbf16>
    %153 = vector.shape_cast %152 : vector<64x16xbf16> to vector<1x64x16xbf16>
    %c0_54 = arith.constant 0 : index
    %c0_55 = arith.constant 0 : index
    %c0_56 = arith.constant 0 : index
    %154 = vector.load %arg16[%c0_54, %c0_55, %c0_56] : memref<9x16x64xbf16, #tpu.memory_space<vmem>>, vector<1x16x64xbf16>
    %155 = vector.shape_cast %154 : vector<1x16x64xbf16> to vector<16x64xbf16>
    %156 = vector.shape_cast %153 : vector<1x64x16xbf16> to vector<64x16xbf16>
    %cst_57 = arith.constant dense<0.000000e+00> : vector<16x16xf32>
    %157 = tpu.matmul %155, %156, %cst_57 {dimension_numbers = #tpu.dot_dimension_numbers<[1], [0], [0], [1], [0, 0, 1, 1], [], []>} : vector<16x64xbf16>, vector<64x16xbf16>, vector<16x16xf32> -> vector<16x16xf32>
    %158 = arith.truncf %157 : vector<16x16xf32> to vector<16x16xbf16>
    %c0_58 = arith.constant 0 : index
    %c0_59 = arith.constant 0 : index
    %c0_60 = arith.constant 0 : index
    %159 = vector.load %arg14[%c0_58, %c0_59, %c0_60] : memref<9x16x128xbf16, #tpu.memory_space<vmem>>, vector<1x16x128xbf16>
    %160 = vector.shape_cast %159 : vector<1x16x128xbf16> to vector<16x128xbf16>
    %cst_61 = arith.constant dense<0.000000e+00> : vector<16x128xf32>
    %161 = tpu.matmul %158, %160, %cst_61 {dimension_numbers = #tpu.dot_dimension_numbers<[1], [0], [0], [1], [0, 0, 1, 1], [], []>} : vector<16x16xbf16>, vector<16x128xbf16>, vector<16x128xf32> -> vector<16x128xf32>
    %c1 = arith.constant 1 : index
    %c0_62 = arith.constant 0 : index
    %c0_63 = arith.constant 0 : index
    %162 = vector.load %arg16[%c1, %c0_62, %c0_63] : memref<9x16x64xbf16, #tpu.memory_space<vmem>>, vector<1x16x64xbf16>
    %163 = vector.shape_cast %162 : vector<1x16x64xbf16> to vector<16x64xbf16>
    %164 = vector.shape_cast %153 : vector<1x64x16xbf16> to vector<64x16xbf16>
    %cst_64 = arith.constant dense<0.000000e+00> : vector<16x16xf32>
    %165 = tpu.matmul %163, %164, %cst_64 {dimension_numbers = #tpu.dot_dimension_numbers<[1], [0], [0], [1], [0, 0, 1, 1], [], []>} : vector<16x64xbf16>, vector<64x16xbf16>, vector<16x16xf32> -> vector<16x16xf32>
    %166 = arith.truncf %165 : vector<16x16xf32> to vector<16x16xbf16>
    %c1_65 = arith.constant 1 : index
    %c0_66 = arith.constant 0 : index
    %c0_67 = arith.constant 0 : index
    %167 = vector.load %arg14[%c1_65, %c0_66, %c0_67] : memref<9x16x128xbf16, #tpu.memory_space<vmem>>, vector<1x16x128xbf16>
    %168 = vector.shape_cast %167 : vector<1x16x128xbf16> to vector<16x128xbf16>
    %cst_68 = arith.constant dense<0.000000e+00> : vector<16x128xf32>
    %169 = tpu.matmul %166, %168, %cst_68 {dimension_numbers = #tpu.dot_dimension_numbers<[1], [0], [0], [1], [0, 0, 1, 1], [], []>} : vector<16x16xbf16>, vector<16x128xbf16>, vector<16x128xf32> -> vector<16x128xf32>
    %170 = arith.addf %161, %169 : vector<16x128xf32>
    %c2 = arith.constant 2 : index
    %c0_69 = arith.constant 0 : index
    %c0_70 = arith.constant 0 : index
    %171 = vector.load %arg16[%c2, %c0_69, %c0_70] : memref<9x16x64xbf16, #tpu.memory_space<vmem>>, vector<1x16x64xbf16>
    %172 = vector.shape_cast %171 : vector<1x16x64xbf16> to vector<16x64xbf16>
    %173 = vector.shape_cast %153 : vector<1x64x16xbf16> to vector<64x16xbf16>
    %cst_71 = arith.constant dense<0.000000e+00> : vector<16x16xf32>
    %174 = tpu.matmul %172, %173, %cst_71 {dimension_numbers = #tpu.dot_dimension_numbers<[1], [0], [0], [1], [0, 0, 1, 1], [], []>} : vector<16x64xbf16>, vector<64x16xbf16>, vector<16x16xf32> -> vector<16x16xf32>
    %175 = arith.truncf %174 : vector<16x16xf32> to vector<16x16xbf16>
    %c2_72 = arith.constant 2 : index
    %c0_73 = arith.constant 0 : index
    %c0_74 = arith.constant 0 : index
    %176 = vector.load %arg14[%c2_72, %c0_73, %c0_74] : memref<9x16x128xbf16, #tpu.memory_space<vmem>>, vector<1x16x128xbf16>
    %177 = vector.shape_cast %176 : vector<1x16x128xbf16> to vector<16x128xbf16>
    %cst_75 = arith.constant dense<0.000000e+00> : vector<16x128xf32>
    %178 = tpu.matmul %175, %177, %cst_75 {dimension_numbers = #tpu.dot_dimension_numbers<[1], [0], [0], [1], [0, 0, 1, 1], [], []>} : vector<16x16xbf16>, vector<16x128xbf16>, vector<16x128xf32> -> vector<16x128xf32>
    %179 = arith.addf %170, %178 : vector<16x128xf32>
    %c3 = arith.constant 3 : index
    %c0_76 = arith.constant 0 : index
    %c0_77 = arith.constant 0 : index
    %180 = vector.load %arg16[%c3, %c0_76, %c0_77] : memref<9x16x64xbf16, #tpu.memory_space<vmem>>, vector<1x16x64xbf16>
    %181 = vector.shape_cast %180 : vector<1x16x64xbf16> to vector<16x64xbf16>
    %182 = vector.shape_cast %153 : vector<1x64x16xbf16> to vector<64x16xbf16>
    %cst_78 = arith.constant dense<0.000000e+00> : vector<16x16xf32>
    %183 = tpu.matmul %181, %182, %cst_78 {dimension_numbers = #tpu.dot_dimension_numbers<[1], [0], [0], [1], [0, 0, 1, 1], [], []>} : vector<16x64xbf16>, vector<64x16xbf16>, vector<16x16xf32> -> vector<16x16xf32>
    %184 = arith.truncf %183 : vector<16x16xf32> to vector<16x16xbf16>
    %c3_79 = arith.constant 3 : index
    %c0_80 = arith.constant 0 : index
    %c0_81 = arith.constant 0 : index
    %185 = vector.load %arg14[%c3_79, %c0_80, %c0_81] : memref<9x16x128xbf16, #tpu.memory_space<vmem>>, vector<1x16x128xbf16>
    %186 = vector.shape_cast %185 : vector<1x16x128xbf16> to vector<16x128xbf16>
    %cst_82 = arith.constant dense<0.000000e+00> : vector<16x128xf32>
    %187 = tpu.matmul %184, %186, %cst_82 {dimension_numbers = #tpu.dot_dimension_numbers<[1], [0], [0], [1], [0, 0, 1, 1], [], []>} : vector<16x16xbf16>, vector<16x128xbf16>, vector<16x128xf32> -> vector<16x128xf32>
    %188 = arith.addf %179, %187 : vector<16x128xf32>
    %c4 = arith.constant 4 : index
    %c0_83 = arith.constant 0 : index
    %c0_84 = arith.constant 0 : index
    %189 = vector.load %arg16[%c4, %c0_83, %c0_84] : memref<9x16x64xbf16, #tpu.memory_space<vmem>>, vector<1x16x64xbf16>
    %190 = vector.shape_cast %189 : vector<1x16x64xbf16> to vector<16x64xbf16>
    %191 = vector.shape_cast %153 : vector<1x64x16xbf16> to vector<64x16xbf16>
    %cst_85 = arith.constant dense<0.000000e+00> : vector<16x16xf32>
    %192 = tpu.matmul %190, %191, %cst_85 {dimension_numbers = #tpu.dot_dimension_numbers<[1], [0], [0], [1], [0, 0, 1, 1], [], []>} : vector<16x64xbf16>, vector<64x16xbf16>, vector<16x16xf32> -> vector<16x16xf32>
    %193 = arith.truncf %192 : vector<16x16xf32> to vector<16x16xbf16>
    %c4_86 = arith.constant 4 : index
    %c0_87 = arith.constant 0 : index
    %c0_88 = arith.constant 0 : index
    %194 = vector.load %arg14[%c4_86, %c0_87, %c0_88] : memref<9x16x128xbf16, #tpu.memory_space<vmem>>, vector<1x16x128xbf16>
    %195 = vector.shape_cast %194 : vector<1x16x128xbf16> to vector<16x128xbf16>
    %cst_89 = arith.constant dense<0.000000e+00> : vector<16x128xf32>
    %196 = tpu.matmul %193, %195, %cst_89 {dimension_numbers = #tpu.dot_dimension_numbers<[1], [0], [0], [1], [0, 0, 1, 1], [], []>} : vector<16x16xbf16>, vector<16x128xbf16>, vector<16x128xf32> -> vector<16x128xf32>
    %197 = arith.addf %188, %196 : vector<16x128xf32>
    %c5 = arith.constant 5 : index
    %c0_90 = arith.constant 0 : index
    %c0_91 = arith.constant 0 : index
    %198 = vector.load %arg16[%c5, %c0_90, %c0_91] : memref<9x16x64xbf16, #tpu.memory_space<vmem>>, vector<1x16x64xbf16>
    %199 = vector.shape_cast %198 : vector<1x16x64xbf16> to vector<16x64xbf16>
    %200 = vector.shape_cast %153 : vector<1x64x16xbf16> to vector<64x16xbf16>
    %cst_92 = arith.constant dense<0.000000e+00> : vector<16x16xf32>
    %201 = tpu.matmul %199, %200, %cst_92 {dimension_numbers = #tpu.dot_dimension_numbers<[1], [0], [0], [1], [0, 0, 1, 1], [], []>} : vector<16x64xbf16>, vector<64x16xbf16>, vector<16x16xf32> -> vector<16x16xf32>
    %202 = arith.truncf %201 : vector<16x16xf32> to vector<16x16xbf16>
    %c5_93 = arith.constant 5 : index
    %c0_94 = arith.constant 0 : index
    %c0_95 = arith.constant 0 : index
    %203 = vector.load %arg14[%c5_93, %c0_94, %c0_95] : memref<9x16x128xbf16, #tpu.memory_space<vmem>>, vector<1x16x128xbf16>
    %204 = vector.shape_cast %203 : vector<1x16x128xbf16> to vector<16x128xbf16>
    %cst_96 = arith.constant dense<0.000000e+00> : vector<16x128xf32>
    %205 = tpu.matmul %202, %204, %cst_96 {dimension_numbers = #tpu.dot_dimension_numbers<[1], [0], [0], [1], [0, 0, 1, 1], [], []>} : vector<16x16xbf16>, vector<16x128xbf16>, vector<16x128xf32> -> vector<16x128xf32>
    %206 = arith.addf %197, %205 : vector<16x128xf32>
    %c6 = arith.constant 6 : index
    %c0_97 = arith.constant 0 : index
    %c0_98 = arith.constant 0 : index
    %207 = vector.load %arg16[%c6, %c0_97, %c0_98] : memref<9x16x64xbf16, #tpu.memory_space<vmem>>, vector<1x16x64xbf16>
    %208 = vector.shape_cast %207 : vector<1x16x64xbf16> to vector<16x64xbf16>
    %209 = vector.shape_cast %153 : vector<1x64x16xbf16> to vector<64x16xbf16>
    %cst_99 = arith.constant dense<0.000000e+00> : vector<16x16xf32>
    %210 = tpu.matmul %208, %209, %cst_99 {dimension_numbers = #tpu.dot_dimension_numbers<[1], [0], [0], [1], [0, 0, 1, 1], [], []>} : vector<16x64xbf16>, vector<64x16xbf16>, vector<16x16xf32> -> vector<16x16xf32>
    %211 = arith.truncf %210 : vector<16x16xf32> to vector<16x16xbf16>
    %c6_100 = arith.constant 6 : index
    %c0_101 = arith.constant 0 : index
    %c0_102 = arith.constant 0 : index
    %212 = vector.load %arg14[%c6_100, %c0_101, %c0_102] : memref<9x16x128xbf16, #tpu.memory_space<vmem>>, vector<1x16x128xbf16>
    %213 = vector.shape_cast %212 : vector<1x16x128xbf16> to vector<16x128xbf16>
    %cst_103 = arith.constant dense<0.000000e+00> : vector<16x128xf32>
    %214 = tpu.matmul %211, %213, %cst_103 {dimension_numbers = #tpu.dot_dimension_numbers<[1], [0], [0], [1], [0, 0, 1, 1], [], []>} : vector<16x16xbf16>, vector<16x128xbf16>, vector<16x128xf32> -> vector<16x128xf32>
    %215 = arith.addf %206, %214 : vector<16x128xf32>
    %c7 = arith.constant 7 : index
    %c0_104 = arith.constant 0 : index
    %c0_105 = arith.constant 0 : index
    %216 = vector.load %arg16[%c7, %c0_104, %c0_105] : memref<9x16x64xbf16, #tpu.memory_space<vmem>>, vector<1x16x64xbf16>
    %217 = vector.shape_cast %216 : vector<1x16x64xbf16> to vector<16x64xbf16>
    %218 = vector.shape_cast %153 : vector<1x64x16xbf16> to vector<64x16xbf16>
    %cst_106 = arith.constant dense<0.000000e+00> : vector<16x16xf32>
    %219 = tpu.matmul %217, %218, %cst_106 {dimension_numbers = #tpu.dot_dimension_numbers<[1], [0], [0], [1], [0, 0, 1, 1], [], []>} : vector<16x64xbf16>, vector<64x16xbf16>, vector<16x16xf32> -> vector<16x16xf32>
    %220 = arith.truncf %219 : vector<16x16xf32> to vector<16x16xbf16>
    %c7_107 = arith.constant 7 : index
    %c0_108 = arith.constant 0 : index
    %c0_109 = arith.constant 0 : index
    %221 = vector.load %arg14[%c7_107, %c0_108, %c0_109] : memref<9x16x128xbf16, #tpu.memory_space<vmem>>, vector<1x16x128xbf16>
    %222 = vector.shape_cast %221 : vector<1x16x128xbf16> to vector<16x128xbf16>
    %cst_110 = arith.constant dense<0.000000e+00> : vector<16x128xf32>
    %223 = tpu.matmul %220, %222, %cst_110 {dimension_numbers = #tpu.dot_dimension_numbers<[1], [0], [0], [1], [0, 0, 1, 1], [], []>} : vector<16x16xbf16>, vector<16x128xbf16>, vector<16x128xf32> -> vector<16x128xf32>
    %224 = arith.addf %215, %223 : vector<16x128xf32>
    %c8 = arith.constant 8 : index
    %c0_111 = arith.constant 0 : index
    %c0_112 = arith.constant 0 : index
    %225 = vector.load %arg16[%c8, %c0_111, %c0_112] : memref<9x16x64xbf16, #tpu.memory_space<vmem>>, vector<1x16x64xbf16>
    %226 = vector.shape_cast %225 : vector<1x16x64xbf16> to vector<16x64xbf16>
    %227 = vector.shape_cast %153 : vector<1x64x16xbf16> to vector<64x16xbf16>
    %cst_113 = arith.constant dense<0.000000e+00> : vector<16x16xf32>
    %228 = tpu.matmul %226, %227, %cst_113 {dimension_numbers = #tpu.dot_dimension_numbers<[1], [0], [0], [1], [0, 0, 1, 1], [], []>} : vector<16x64xbf16>, vector<64x16xbf16>, vector<16x16xf32> -> vector<16x16xf32>
    %229 = arith.truncf %228 : vector<16x16xf32> to vector<16x16xbf16>
    %c8_114 = arith.constant 8 : index
    %c0_115 = arith.constant 0 : index
    %c0_116 = arith.constant 0 : index
    %230 = vector.load %arg14[%c8_114, %c0_115, %c0_116] : memref<9x16x128xbf16, #tpu.memory_space<vmem>>, vector<1x16x128xbf16>
    %231 = vector.shape_cast %230 : vector<1x16x128xbf16> to vector<16x128xbf16>
    %cst_117 = arith.constant dense<0.000000e+00> : vector<16x128xf32>
    %232 = tpu.matmul %229, %231, %cst_117 {dimension_numbers = #tpu.dot_dimension_numbers<[1], [0], [0], [1], [0, 0, 1, 1], [], []>} : vector<16x16xbf16>, vector<16x128xbf16>, vector<16x128xf32> -> vector<16x128xf32>
    %233 = arith.addf %224, %232 : vector<16x128xf32>
    %c0_118 = arith.constant 0 : index
    %c0_119 = arith.constant 0 : index
    %234 = vector.load %arg15[%c0_118, %c0_119] : memref<1x128xf32, #tpu.memory_space<vmem>>, vector<1x128xf32>
    %235 = vector.shape_cast %234 : vector<1x128xf32> to vector<128xf32>
    %236 = vector.shape_cast %235 : vector<128xf32> to vector<1x128xf32>
    %237 = vector.broadcast %236 : vector<1x128xf32> to vector<16x128xf32>
    %238 = arith.addf %233, %237 : vector<16x128xf32>
    %c0_120 = arith.constant 0 : index
    %c0_121 = arith.constant 0 : index
    %c0_122 = arith.constant 0 : index
    %239 = vector.load %arg17[%c0_120, %c0_121, %c0_122] : memref<1x16x128xf32, #tpu.memory_space<vmem>>, vector<1x16x128xf32>
    %240 = vector.shape_cast %239 : vector<1x16x128xf32> to vector<16x128xf32>
    %241 = vector.shape_cast %238 : vector<16x128xf32> to vector<1x16x128xf32>
    tpu.vector_store %arg17[%c0_120, %c0_121, %c0_122], %241 {strides = array<i32>} : memref<1x16x128xf32, #tpu.memory_space<vmem>>, vector<1x16x128xf32>,
    return
  }
  func.func @transform_0(%arg0: i32) -> (i32, i32, i32) {
    %c0_i32 = arith.constant 0 : i32
    %c0_i32_0 = arith.constant 0 : i32
    %c0_i32_1 = arith.constant 0 : i32
    return %arg0, %c0_i32, %c0_i32_0 : i32, i32, i32
  }
  func.func @transform_1(%arg0: i32) -> (i32, i32) {
    %c0_i32 = arith.constant 0 : i32
    %c0_i32_0 = arith.constant 0 : i32
    %c0_i32_1 = arith.constant 0 : i32
    return %c0_i32, %c0_i32_0 : i32, i32
  }
  func.func @transform_2(%arg0: i32) -> (i32, i32) {
    %c0_i32 = arith.constant 0 : i32
    %c0_i32_0 = arith.constant 0 : i32
    %c0_i32_1 = arith.constant 0 : i32
    return %c0_i32, %c0_i32_0 : i32, i32
  }
  func.func @transform_3(%arg0: i32) -> (i32, i32) {
    %c0_i32 = arith.constant 0 : i32
    %c0_i32_0 = arith.constant 0 : i32
    %c0_i32_1 = arith.constant 0 : i32
    return %c0_i32, %c0_i32_0 : i32, i32
  }
  func.func @transform_4(%arg0: i32) -> (i32, i32) {
    %c0_i32 = arith.constant 0 : i32
    %c0_i32_0 = arith.constant 0 : i32
    %c0_i32_1 = arith.constant 0 : i32
    return %c0_i32, %c0_i32_0 : i32, i32
  }
  func.func @transform_5(%arg0: i32) -> (i32, i32) {
    %c0_i32 = arith.constant 0 : i32
    %c0_i32_0 = arith.constant 0 : i32
    %c0_i32_1 = arith.constant 0 : i32
    return %c0_i32, %c0_i32_0 : i32, i32
  }
  func.func @transform_6(%arg0: i32) -> (i32, i32) {
    %c0_i32 = arith.constant 0 : i32
    %c0_i32_0 = arith.constant 0 : i32
    %c0_i32_1 = arith.constant 0 : i32
    return %c0_i32, %c0_i32_0 : i32, i32
  }
  func.func @transform_7(%arg0: i32) -> (i32, i32) {
    %c0_i32 = arith.constant 0 : i32
    %c0_i32_0 = arith.constant 0 : i32
    %c0_i32_1 = arith.constant 0 : i32
    return %c0_i32, %c0_i32_0 : i32, i32
  }
  func.func @transform_8(%arg0: i32) -> (i32, i32) {
    %c0_i32 = arith.constant 0 : i32
    %c0_i32_0 = arith.constant 0 : i32
    %c0_i32_1 = arith.constant 0 : i32
    return %c0_i32, %c0_i32_0 : i32, i32
  }
  func.func @transform_9(%arg0: i32) -> (i32, i32) {
    %c0_i32 = arith.constant 0 : i32
    %c0_i32_0 = arith.constant 0 : i32
    %c0_i32_1 = arith.constant 0 : i32
    return %c0_i32, %c0_i32_0 : i32, i32
  }
  func.func @transform_10(%arg0: i32) -> (i32, i32) {
    %c0_i32 = arith.constant 0 : i32
    %c0_i32_0 = arith.constant 0 : i32
    %c0_i32_1 = arith.constant 0 : i32
    return %c0_i32, %c0_i32_0 : i32, i32
  }
  func.func @transform_11(%arg0: i32) -> (i32, i32) {
    %c0_i32 = arith.constant 0 : i32
    %c0_i32_0 = arith.constant 0 : i32
    %c0_i32_1 = arith.constant 0 : i32
    return %c0_i32, %c0_i32_0 : i32, i32
  }
  func.func @transform_12(%arg0: i32) -> (i32, i32) {
    %c0_i32 = arith.constant 0 : i32
    %c0_i32_0 = arith.constant 0 : i32
    %c0_i32_1 = arith.constant 0 : i32
    return %c0_i32, %c0_i32_0 : i32, i32
  }
  func.func @transform_13(%arg0: i32) -> (i32, i32, i32) {
    %c0_i32 = arith.constant 0 : i32
    %c0_i32_0 = arith.constant 0 : i32
    %c0_i32_1 = arith.constant 0 : i32
    %c0_i32_2 = arith.constant 0 : i32
    return %c0_i32, %c0_i32_0, %c0_i32_1 : i32, i32, i32
  }
  func.func @transform_14(%arg0: i32) -> (i32, i32) {
    %c0_i32 = arith.constant 0 : i32
    %c0_i32_0 = arith.constant 0 : i32
    %c0_i32_1 = arith.constant 0 : i32
    return %c0_i32, %c0_i32_0 : i32, i32
  }
  func.func @transform_15(%arg0: i32) -> (i32, i32, i32) {
    %c0_i32 = arith.constant 0 : i32
    %c0_i32_0 = arith.constant 0 : i32
    %c0_i32_1 = arith.constant 0 : i32
    %c0_i32_2 = arith.constant 0 : i32
    return %c0_i32, %c0_i32_0, %c0_i32_1 : i32, i32, i32
  }
  func.func @transform_16(%arg0: i32) -> (i32, i32, i32) {
    %c0_i32 = arith.constant 0 : i32
    %c0_i32_0 = arith.constant 0 : i32
    %c0_i32_1 = arith.constant 0 : i32
    return %arg0, %c0_i32, %c0_i32_0 : i32, i32, i32
  }
}

</mosaic_0001>

<llo_original>
// kernel: t2t_forward.1
$region0: #{t2t_forward.1}
  #allocation0 [shape = 'u32[]', space=smem, size = 0x4, offset = 0x4, fixed_abs, tag = 'smem constant byte address 0x4 - core index']
  #allocation1 [shape = 'u32[144,128]{1,0:T(1,128)}', space=vmem, size = 0x12000, scoped, tag = 'internal scratch']
  %s0 = inlined_call_operand.vmem [shape: bf16[2,64,36], index: 0, kind: input, shape index: {}]
  %s1 = inlined_call_operand.vmem [shape: f32[1,36], index: 1, kind: input, shape index: {}]
  %s2 = inlined_call_operand.vmem [shape: f32[1,36], index: 2, kind: input, shape index: {}]
  %s3 = inlined_call_operand.vmem [shape: bf16[36,64], index: 3, kind: input, shape index: {}]
  %s4 = inlined_call_operand.vmem [shape: f32[1,64], index: 4, kind: input, shape index: {}]
  %s5 = inlined_call_operand.vmem [shape: bf16[16,16], index: 5, kind: input, shape index: {}]
  %s6 = inlined_call_operand.vmem [shape: f32[1,16], index: 6, kind: input, shape index: {}]
  %s7 = inlined_call_operand.vmem [shape: f32[1,16], index: 7, kind: input, shape index: {}]
  %s8 = inlined_call_operand.vmem [shape: f32[1,16], index: 8, kind: input, shape index: {}]
  %s9 = inlined_call_operand.vmem [shape: bf16[16,16], index: 9, kind: input, shape index: {}]
  %s10 = inlined_call_operand.vmem [shape: f32[1,16], index: 10, kind: input, shape index: {}]
  %s11 = inlined_call_operand.vmem [shape: bf16[16,16], index: 11, kind: input, shape index: {}]
  %s12 = inlined_call_operand.vmem [shape: f32[1,16], index: 12, kind: input, shape index: {}]
  %s13 = inlined_call_operand.vmem [shape: bf16[9,16,128], index: 13, kind: input, shape index: {}]
  %s14 = inlined_call_operand.vmem [shape: f32[1,128], index: 14, kind: input, shape index: {}]
  %s15 = inlined_call_operand.vmem [shape: bf16[9,16,64], index: 15, kind: input, shape index: {}]
  %s16 = inlined_call_operand.hbm [shape: f32[2,16,128], index: 16, kind: output, shape index: {}]
  %s17 = sld [smem:[#allocation0]]
  $region97: #{t2t_forward.1} parent=0
    _
  %s19 = ssub.s32 1, %s17
  %s20 = scalar_select 0, %s19, %s17
  $region1: #{t2t_forward.1} parent=0
    #allocation2 [shape = 'u8[16384]{0}', space=vmem, size = 0x4000, scoped, tag = 'output window, operand 0']
    #allocation3 [shape = 's32[2]{0}', space=sflag, size = 0x8, scoped, tag = 'scoped memory for t2t_forward.1']
    %21 = vsyncpa [#allocation3], 0
    %s22 = scalar_lea.sflag [#allocation3], 1
    %23 = vsyncpa %s22, 0
    loop: start=0, step=1, limit=4
    $region2: #{t2t_forward.1} parent=1 // loop_pre_header
      _
    $region3: #{t2t_forward.1} parent=1 // loop_header
      %s25 = sphi 0, %s29
      %p26 = scmp.ge.s32.totalorder %s25, 4
      %s35 = sphi 0, %s37
      %s38 = sphi 0, %s35
      %s39 = sphi 0, %s38
      %s55 = sphi 0, %s39
      %s59 = sphi 0, %s59
      %s61 = sphi 0, %s59
      %s62 = sphi 0, %s61
      %s76 = sphi 0, %s62
      %s80 = sphi 0, %s80
      %s82 = sphi 0, %s80
      %s83 = sphi 0, %s82
      %s97 = sphi 0, %s83
      %s101 = sphi 0, %s101
      %s103 = sphi 0, %s101
      %s104 = sphi 0, %s103
      %s118 = sphi 0, %s104
      %s122 = sphi 0, %s122
      %s124 = sphi 0, %s122
      %s125 = sphi 0, %s124
      %s139 = sphi 0, %s125
      %s143 = sphi 0, %s143
      %s145 = sphi 0, %s143
      %s146 = sphi 0, %s145
      %s160 = sphi 0, %s146
      %s164 = sphi 0, %s164
      %s166 = sphi 0, %s164
      %s167 = sphi 0, %s166
      %s181 = sphi 0, %s167
      %s185 = sphi 0, %s185
      %s187 = sphi 0, %s185
      %s188 = sphi 0, %s187
      %s202 = sphi 0, %s188
      %s206 = sphi 0, %s206
      %s208 = sphi 0, %s206
      %s209 = sphi 0, %s208
      %s223 = sphi 0, %s209
      %s227 = sphi 0, %s227
      %s229 = sphi 0, %s227
      %s230 = sphi 0, %s229
      %s244 = sphi 0, %s230
      %s248 = sphi 0, %s248
      %s250 = sphi 0, %s248
      %s251 = sphi 0, %s250
      %s265 = sphi 0, %s251
      %s269 = sphi 0, %s269
      %s271 = sphi 0, %s269
      %s272 = sphi 0, %s271
      %s286 = sphi 0, %s272
      %s290 = sphi 0, %s290
      %s292 = sphi 0, %s290
      %s293 = sphi 0, %s292
      %s307 = sphi 0, %s293
      %s311 = sphi 0, %s311
      %s313 = sphi 0, %s311
      %s314 = sphi 0, %s313
      %s328 = sphi 0, %s314
      %s332 = sphi 0, %s332
      %s334 = sphi 0, %s332
      %s335 = sphi 0, %s334
      %s349 = sphi 0, %s335
      %s353 = sphi 0, %s353
      %s355 = sphi 0, %s353
      %s356 = sphi 0, %s355
      %s370 = sphi 0, %s356
      %s376 = sphi 0, %s378
      %s379 = sphi 0, %s376
      %s380 = sphi 0, %s379
      %s396 = sphi 0, %s380
    $region4: #{t2t_forward.1} parent=1 // loop_header_branch
      %28 = sbr.rel (%p26) target = $region8
    $region5: #{t2t_forward.1} parent=1 // loop_body
      %s30 = ssub.s32 %s25, 1
      %s31 = ssub.s32 %s25, 2
      %s32 = sadd.s32 %s25, 1
      %s33 = ssub.s32 %s25, %s32
      %p34 = scmp.eq.s32.totalorder %s33, 0
      %s36 = sadd.s32 %s35, 1
      %s37 = scalar_select %p34, %s35, %s36
      %p40 = pneg %p34
      %p41 = scmp.eq.s32.totalorder %s25, 1
      %p42 = por %p40, %p41
      %p43 = scmp.ne.s32.totalorder %s35, %s38
      %p44 = scmp.eq.s32.totalorder %s25, 0
      %p45 = por %p43, %p44
      %p46 = scmp.ne.s32.totalorder %s35, %s38
      %p47 = scmp.eq.s32.totalorder %s30, 1
      %p48 = por %p46, %p47
      %p49 = scmp.ne.s32.totalorder %s38, %s39
      %p50 = scmp.eq.s32.totalorder %s30, 0
      %p51 = por %p49, %p50
      %p52 = scmp.ne.s32.totalorder %s38, %s39
      %p53 = scmp.eq.s32.totalorder %s31, 1
      %p54 = por %p52, %p53
      %p56 = scmp.ne.s32.totalorder %s39, %s55
      %p57 = scmp.eq.s32.totalorder %s31, 0
      %p58 = por %p56, %p57
      %s60 = sadd.s32 %s59, 1
      %p63 = scmp.eq.s32.totalorder %s25, 1
      %p64 = scmp.ne.s32.totalorder %s59, %s61
      %p65 = scmp.eq.s32.totalorder %s25, 0
      %p66 = por %p64, %p65
      %p67 = scmp.ne.s32.totalorder %s59, %s61
      %p68 = scmp.eq.s32.totalorder %s30, 1
      %p69 = por %p67, %p68
      %p70 = scmp.ne.s32.totalorder %s61, %s62
      %p71 = scmp.eq.s32.totalorder %s30, 0
      %p72 = por %p70, %p71
      %p73 = scmp.ne.s32.totalorder %s61, %s62
      %p74 = scmp.eq.s32.totalorder %s31, 1
      %p75 = por %p73, %p74
      %p77 = scmp.ne.s32.totalorder %s62, %s76
      %p78 = scmp.eq.s32.totalorder %s31, 0
      %p79 = por %p77, %p78
      %s81 = sadd.s32 %s80, 1
      %p84 = scmp.eq.s32.totalorder %s25, 1
      %p85 = scmp.ne.s32.totalorder %s80, %s82
      %p86 = scmp.eq.s32.totalorder %s25, 0
      %p87 = por %p85, %p86
      %p88 = scmp.ne.s32.totalorder %s80, %s82
      %p89 = scmp.eq.s32.totalorder %s30, 1
      %p90 = por %p88, %p89
      %p91 = scmp.ne.s32.totalorder %s82, %s83
      %p92 = scmp.eq.s32.totalorder %s30, 0
      %p93 = por %p91, %p92
      %p94 = scmp.ne.s32.totalorder %s82, %s83
      %p95 = scmp.eq.s32.totalorder %s31, 1
      %p96 = por %p94, %p95
      %p98 = scmp.ne.s32.totalorder %s83, %s97
      %p99 = scmp.eq.s32.totalorder %s31, 0
      %p100 = por %p98, %p99
      %s102 = sadd.s32 %s101, 1
      %p105 = scmp.eq.s32.totalorder %s25, 1
      %p106 = scmp.ne.s32.totalorder %s101, %s103
      %p107 = scmp.eq.s32.totalorder %s25, 0
      %p108 = por %p106, %p107
      %p109 = scmp.ne.s32.totalorder %s101, %s103
      %p110 = scmp.eq.s32.totalorder %s30, 1
      %p111 = por %p109, %p110
      %p112 = scmp.ne.s32.totalorder %s103, %s104
      %p113 = scmp.eq.s32.totalorder %s30, 0
      %p114 = por %p112, %p113
      %p115 = scmp.ne.s32.totalorder %s103, %s104
      %p116 = scmp.eq.s32.totalorder %s31, 1
      %p117 = por %p115, %p116
      %p119 = scmp.ne.s32.totalorder %s104, %s118
      %p120 = scmp.eq.s32.totalorder %s31, 0
      %p121 = por %p119, %p120
      %s123 = sadd.s32 %s122, 1
      %p126 = scmp.eq.s32.totalorder %s25, 1
      %p127 = scmp.ne.s32.totalorder %s122, %s124
      %p128 = scmp.eq.s32.totalorder %s25, 0
      %p129 = por %p127, %p128
      %p130 = scmp.ne.s32.totalorder %s122, %s124
      %p131 = scmp.eq.s32.totalorder %s30, 1
      %p132 = por %p130, %p131
      %p133 = scmp.ne.s32.totalorder %s124, %s125
      %p134 = scmp.eq.s32.totalorder %s30, 0
      %p135 = por %p133, %p134
      %p136 = scmp.ne.s32.totalorder %s124, %s125
      %p137 = scmp.eq.s32.totalorder %s31, 1
      %p138 = por %p136, %p137
      %p140 = scmp.ne.s32.totalorder %s125, %s139
      %p141 = scmp.eq.s32.totalorder %s31, 0
      %p142 = por %p140, %p141
      %s144 = sadd.s32 %s143, 1
      %p147 = scmp.eq.s32.totalorder %s25, 1
      %p148 = scmp.ne.s32.totalorder %s143, %s145
      %p149 = scmp.eq.s32.totalorder %s25, 0
      %p150 = por %p148, %p149
      %p151 = scmp.ne.s32.totalorder %s143, %s145
      %p152 = scmp.eq.s32.totalorder %s30, 1
      %p153 = por %p151, %p152
      %p154 = scmp.ne.s32.totalorder %s145, %s146
      %p155 = scmp.eq.s32.totalorder %s30, 0
      %p156 = por %p154, %p155
      %p157 = scmp.ne.s32.totalorder %s145, %s146
      %p158 = scmp.eq.s32.totalorder %s31, 1
      %p159 = por %p157, %p158
      %p161 = scmp.ne.s32.totalorder %s146, %s160
      %p162 = scmp.eq.s32.totalorder %s31, 0
      %p163 = por %p161, %p162
      %s165 = sadd.s32 %s164, 1
      %p168 = scmp.eq.s32.totalorder %s25, 1
      %p169 = scmp.ne.s32.totalorder %s164, %s166
      %p170 = scmp.eq.s32.totalorder %s25, 0
      %p171 = por %p169, %p170
      %p172 = scmp.ne.s32.totalorder %s164, %s166
      %p173 = scmp.eq.s32.totalorder %s30, 1
      %p174 = por %p172, %p173
      %p175 = scmp.ne.s32.totalorder %s166, %s167
      %p176 = scmp.eq.s32.totalorder %s30, 0
      %p177 = por %p175, %p176
      %p178 = scmp.ne.s32.totalorder %s166, %s167
      %p179 = scmp.eq.s32.totalorder %s31, 1
      %p180 = por %p178, %p179
      %p182 = scmp.ne.s32.totalorder %s167, %s181
      %p183 = scmp.eq.s32.totalorder %s31, 0
      %p184 = por %p182, %p183
      %s186 = sadd.s32 %s185, 1
      %p189 = scmp.eq.s32.totalorder %s25, 1
      %p190 = scmp.ne.s32.totalorder %s185, %s187
      %p191 = scmp.eq.s32.totalorder %s25, 0
      %p192 = por %p190, %p191
      %p193 = scmp.ne.s32.totalorder %s185, %s187
      %p194 = scmp.eq.s32.totalorder %s30, 1
      %p195 = por %p193, %p194
      %p196 = scmp.ne.s32.totalorder %s187, %s188
      %p197 = scmp.eq.s32.totalorder %s30, 0
      %p198 = por %p196, %p197
      %p199 = scmp.ne.s32.totalorder %s187, %s188
      %p200 = scmp.eq.s32.totalorder %s31, 1
      %p201 = por %p199, %p200
      %p203 = scmp.ne.s32.totalorder %s188, %s202
      %p204 = scmp.eq.s32.totalorder %s31, 0
      %p205 = por %p203, %p204
      %s207 = sadd.s32 %s206, 1
      %p210 = scmp.eq.s32.totalorder %s25, 1
      %p211 = scmp.ne.s32.totalorder %s206, %s208
      %p212 = scmp.eq.s32.totalorder %s25, 0
      %p213 = por %p211, %p212
      %p214 = scmp.ne.s32.totalorder %s206, %s208
      %p215 = scmp.eq.s32.totalorder %s30, 1
      %p216 = por %p214, %p215
      %p217 = scmp.ne.s32.totalorder %s208, %s209
      %p218 = scmp.eq.s32.totalorder %s30, 0
      %p219 = por %p217, %p218
      %p220 = scmp.ne.s32.totalorder %s208, %s209
      %p221 = scmp.eq.s32.totalorder %s31, 1
      %p222 = por %p220, %p221
      %p224 = scmp.ne.s32.totalorder %s209, %s223
      %p225 = scmp.eq.s32.totalorder %s31, 0
      %p226 = por %p224, %p225
      %s228 = sadd.s32 %s227, 1
      %p231 = scmp.eq.s32.totalorder %s25, 1
      %p232 = scmp.ne.s32.totalorder %s227, %s229
      %p233 = scmp.eq.s32.totalorder %s25, 0
      %p234 = por %p232, %p233
      %p235 = scmp.ne.s32.totalorder %s227, %s229
      %p236 = scmp.eq.s32.totalorder %s30, 1
      %p237 = por %p235, %p236
      %p238 = scmp.ne.s32.totalorder %s229, %s230
      %p239 = scmp.eq.s32.totalorder %s30, 0
      %p240 = por %p238, %p239
      %p241 = scmp.ne.s32.totalorder %s229, %s230
      %p242 = scmp.eq.s32.totalorder %s31, 1
      %p243 = por %p241, %p242
      %p245 = scmp.ne.s32.totalorder %s230, %s244
      %p246 = scmp.eq.s32.totalorder %s31, 0
      %p247 = por %p245, %p246
      %s249 = sadd.s32 %s248, 1
      %p252 = scmp.eq.s32.totalorder %s25, 1
      %p253 = scmp.ne.s32.totalorder %s248, %s250
      %p254 = scmp.eq.s32.totalorder %s25, 0
      %p255 = por %p253, %p254
      %p256 = scmp.ne.s32.totalorder %s248, %s250
      %p257 = scmp.eq.s32.totalorder %s30, 1
      %p258 = por %p256, %p257
      %p259 = scmp.ne.s32.totalorder %s250, %s251
      %p260 = scmp.eq.s32.totalorder %s30, 0
      %p261 = por %p259, %p260
      %p262 = scmp.ne.s32.totalorder %s250, %s251
      %p263 = scmp.eq.s32.totalorder %s31, 1
      %p264 = por %p262, %p263
      %p266 = scmp.ne.s32.totalorder %s251, %s265
      %p267 = scmp.eq.s32.totalorder %s31, 0
      %p268 = por %p266, %p267
      %s270 = sadd.s32 %s269, 1
      %p273 = scmp.eq.s32.totalorder %s25, 1
      %p274 = scmp.ne.s32.totalorder %s269, %s271
      %p275 = scmp.eq.s32.totalorder %s25, 0
      %p276 = por %p274, %p275
      %p277 = scmp.ne.s32.totalorder %s269, %s271
      %p278 = scmp.eq.s32.totalorder %s30, 1
      %p279 = por %p277, %p278
      %p280 = scmp.ne.s32.totalorder %s271, %s272
      %p281 = scmp.eq.s32.totalorder %s30, 0
      %p282 = por %p280, %p281
      %p283 = scmp.ne.s32.totalorder %s271, %s272
      %p284 = scmp.eq.s32.totalorder %s31, 1
      %p285 = por %p283, %p284
      %p287 = scmp.ne.s32.totalorder %s272, %s286
      %p288 = scmp.eq.s32.totalorder %s31, 0
      %p289 = por %p287, %p288
      %s291 = sadd.s32 %s290, 1
      %p294 = scmp.eq.s32.totalorder %s25, 1
      %p295 = scmp.ne.s32.totalorder %s290, %s292
      %p296 = scmp.eq.s32.totalorder %s25, 0
      %p297 = por %p295, %p296
      %p298 = scmp.ne.s32.totalorder %s290, %s292
      %p299 = scmp.eq.s32.totalorder %s30, 1
      %p300 = por %p298, %p299
      %p301 = scmp.ne.s32.totalorder %s292, %s293
      %p302 = scmp.eq.s32.totalorder %s30, 0
      %p303 = por %p301, %p302
      %p304 = scmp.ne.s32.totalorder %s292, %s293
      %p305 = scmp.eq.s32.totalorder %s31, 1
      %p306 = por %p304, %p305
      %p308 = scmp.ne.s32.totalorder %s293, %s307
      %p309 = scmp.eq.s32.totalorder %s31, 0
      %p310 = por %p308, %p309
      %s312 = sadd.s32 %s311, 1
      %p315 = scmp.eq.s32.totalorder %s25, 1
      %p316 = scmp.ne.s32.totalorder %s311, %s313
      %p317 = scmp.eq.s32.totalorder %s25, 0
      %p318 = por %p316, %p317
      %p319 = scmp.ne.s32.totalorder %s311, %s313
      %p320 = scmp.eq.s32.totalorder %s30, 1
      %p321 = por %p319, %p320
      %p322 = scmp.ne.s32.totalorder %s313, %s314
      %p323 = scmp.eq.s32.totalorder %s30, 0
      %p324 = por %p322, %p323
      %p325 = scmp.ne.s32.totalorder %s313, %s314
      %p326 = scmp.eq.s32.totalorder %s31, 1
      %p327 = por %p325, %p326
      %p329 = scmp.ne.s32.totalorder %s314, %s328
      %p330 = scmp.eq.s32.totalorder %s31, 0
      %p331 = por %p329, %p330
      %s333 = sadd.s32 %s332, 1
      %p336 = scmp.eq.s32.totalorder %s25, 1
      %p337 = scmp.ne.s32.totalorder %s332, %s334
      %p338 = scmp.eq.s32.totalorder %s25, 0
      %p339 = por %p337, %p338
      %p340 = scmp.ne.s32.totalorder %s332, %s334
      %p341 = scmp.eq.s32.totalorder %s30, 1
      %p342 = por %p340, %p341
      %p343 = scmp.ne.s32.totalorder %s334, %s335
      %p344 = scmp.eq.s32.totalorder %s30, 0
      %p345 = por %p343, %p344
      %p346 = scmp.ne.s32.totalorder %s334, %s335
      %p347 = scmp.eq.s32.totalorder %s31, 1
      %p348 = por %p346, %p347
      %p350 = scmp.ne.s32.totalorder %s335, %s349
      %p351 = scmp.eq.s32.totalorder %s31, 0
      %p352 = por %p350, %p351
      %s354 = sadd.s32 %s353, 1
      %p357 = scmp.eq.s32.totalorder %s25, 1
      %p358 = scmp.ne.s32.totalorder %s353, %s355
      %p359 = scmp.eq.s32.totalorder %s25, 0
      %p360 = por %p358, %p359
      %p361 = scmp.ne.s32.totalorder %s353, %s355
      %p362 = scmp.eq.s32.totalorder %s30, 1
      %p363 = por %p361, %p362
      %p364 = scmp.ne.s32.totalorder %s355, %s356
      %p365 = scmp.eq.s32.totalorder %s30, 0
      %p366 = por %p364, %p365
      %p367 = scmp.ne.s32.totalorder %s355, %s356
      %p368 = scmp.eq.s32.totalorder %s31, 1
      %p369 = por %p367, %p368
      %p371 = scmp.ne.s32.totalorder %s356, %s370
      %p372 = scmp.eq.s32.totalorder %s31, 0
      %p373 = por %p371, %p372
      %s374 = ssub.s32 %s25, %s32
      %p375 = scmp.eq.s32.totalorder %s374, 0
      %s377 = sadd.s32 %s376, 1
      %s378 = scalar_select %p375, %s376, %s377
      %p381 = pneg %p375
      %p382 = scmp.eq.s32.totalorder %s25, 1
      %p383 = por %p381, %p382
      %p384 = scmp.ne.s32.totalorder %s376, %s379
      %p385 = scmp.eq.s32.totalorder %s25, 0
      %p386 = por %p384, %p385
      %p387 = scmp.ne.s32.totalorder %s376, %s379
      %p388 = scmp.eq.s32.totalorder %s30, 1
      %p389 = por %p387, %p388
      %p390 = scmp.ne.s32.totalorder %s379, %s380
      %p391 = scmp.eq.s32.totalorder %s30, 0
      %p392 = por %p390, %p391
      %p393 = scmp.ne.s32.totalorder %s379, %s380
      %p394 = scmp.eq.s32.totalorder %s31, 1
      %p395 = por %p393, %p394
      %p397 = scmp.ne.s32.totalorder %s380, %s396
      %p398 = scmp.eq.s32.totalorder %s31, 0
      %p399 = por %p397, %p398
      %p400 = scmp.le.s32.totalorder 1, %s25
      %p401 = scmp.lt.s32.totalorder %s25, 3
      %p402 = pnand %p400, %p401
      %p403 = pneg %p402
      // Predicated region
      $region9: #{t2t_forward.1} parent=5 // pred_check
        _
      $region10: #{t2t_forward.1} parent=5 // pred_check_branch
        %405 = sbr.rel (%p402) target = $region12
      $region11: #{t2t_forward.1} parent=5 // pred_region
        %s406 = ssub.s32 %s25, 1
        // Predicated region
        $region13: #{t2t_forward.1} parent=11 // pred_check
          %p407 = pneg %p72
        $region14: #{t2t_forward.1} parent=11 // pred_check_branch
          %409 = sbr.rel (%p407) target = $region16
        $region15: #{t2t_forward.1} parent=11 // pred_region
          _
        $region16: #{t2t_forward.1} parent=11 // pred_fallthru
          _
        // Predicated region
        $region17: #{t2t_forward.1} parent=11 // pred_check
          %p410 = pneg %p93
        $region18: #{t2t_forward.1} parent=11 // pred_check_branch
          %412 = sbr.rel (%p410) target = $region20
        $region19: #{t2t_forward.1} parent=11 // pred_region
          _
        $region20: #{t2t_forward.1} parent=11 // pred_fallthru
          _
        // Predicated region
        $region21: #{t2t_forward.1} parent=11 // pred_check
          %p413 = pneg %p114
        $region22: #{t2t_forward.1} parent=11 // pred_check_branch
          %415 = sbr.rel (%p413) target = $region24
        $region23: #{t2t_forward.1} parent=11 // pred_region
          _
        $region24: #{t2t_forward.1} parent=11 // pred_fallthru
          _
        // Predicated region
        $region25: #{t2t_forward.1} parent=11 // pred_check
          %p416 = pneg %p135
        $region26: #{t2t_forward.1} parent=11 // pred_check_branch
          %418 = sbr.rel (%p416) target = $region28
        $region27: #{t2t_forward.1} parent=11 // pred_region
          _
        $region28: #{t2t_forward.1} parent=11 // pred_fallthru
          _
        // Predicated region
        $region29: #{t2t_forward.1} parent=11 // pred_check
          %p419 = pneg %p156
        $region30: #{t2t_forward.1} parent=11 // pred_check_branch
          %421 = sbr.rel (%p419) target = $region32
        $region31: #{t2t_forward.1} parent=11 // pred_region
          _
        $region32: #{t2t_forward.1} parent=11 // pred_fallthru
          _
        // Predicated region
        $region33: #{t2t_forward.1} parent=11 // pred_check
          %p422 = pneg %p177
        $region34: #{t2t_forward.1} parent=11 // pred_check_branch
          %424 = sbr.rel (%p422) target = $region36
        $region35: #{t2t_forward.1} parent=11 // pred_region
          _
        $region36: #{t2t_forward.1} parent=11 // pred_fallthru
          _
        // Predicated region
        $region37: #{t2t_forward.1} parent=11 // pred_check
          %p425 = pneg %p198
        $region38: #{t2t_forward.1} parent=11 // pred_check_branch
          %427 = sbr.rel (%p425) target = $region40
        $region39: #{t2t_forward.1} parent=11 // pred_region
          _
        $region40: #{t2t_forward.1} parent=11 // pred_fallthru
          _
        // Predicated region
        $region41: #{t2t_forward.1} parent=11 // pred_check
          %p428 = pneg %p219
        $region42: #{t2t_forward.1} parent=11 // pred_check_branch
          %430 = sbr.rel (%p428) target = $region44
        $region43: #{t2t_forward.1} parent=11 // pred_region
          _
        $region44: #{t2t_forward.1} parent=11 // pred_fallthru
          _
        // Predicated region
        $region45: #{t2t_forward.1} parent=11 // pred_check
          %p431 = pneg %p240
        $region46: #{t2t_forward.1} parent=11 // pred_check_branch
          %433 = sbr.rel (%p431) target = $region48
        $region47: #{t2t_forward.1} parent=11 // pred_region
          _
        $region48: #{t2t_forward.1} parent=11 // pred_fallthru
          _
        // Predicated region
        $region49: #{t2t_forward.1} parent=11 // pred_check
          %p434 = pneg %p261
        $region50: #{t2t_forward.1} parent=11 // pred_check_branch
          %436 = sbr.rel (%p434) target = $region52
        $region51: #{t2t_forward.1} parent=11 // pred_region
          _
        $region52: #{t2t_forward.1} parent=11 // pred_fallthru
          _
        // Predicated region
        $region53: #{t2t_forward.1} parent=11 // pred_check
          %p437 = pneg %p282
        $region54: #{t2t_forward.1} parent=11 // pred_check_branch
          %439 = sbr.rel (%p437) target = $region56
        $region55: #{t2t_forward.1} parent=11 // pred_region
          _
        $region56: #{t2t_forward.1} parent=11 // pred_fallthru
          _
        // Predicated region
        $region57: #{t2t_forward.1} parent=11 // pred_check
          %p440 = pneg %p303
        $region58: #{t2t_forward.1} parent=11 // pred_check_branch
          %442 = sbr.rel (%p440) target = $region60
        $region59: #{t2t_forward.1} parent=11 // pred_region
          _
        $region60: #{t2t_forward.1} parent=11 // pred_fallthru
          _
        // Predicated region
        $region61: #{t2t_forward.1} parent=11 // pred_check
          %p443 = pneg %p324
        $region62: #{t2t_forward.1} parent=11 // pred_check_branch
          %445 = sbr.rel (%p443) target = $region64
        $region63: #{t2t_forward.1} parent=11 // pred_region
          _
        $region64: #{t2t_forward.1} parent=11 // pred_fallthru
          _
        // Predicated region
        $region65: #{t2t_forward.1} parent=11 // pred_check
          %p446 = pneg %p345
        $region66: #{t2t_forward.1} parent=11 // pred_check_branch
          %448 = sbr.rel (%p446) target = $region68
        $region67: #{t2t_forward.1} parent=11 // pred_region
          _
        $region68: #{t2t_forward.1} parent=11 // pred_fallthru
          _
        // Predicated region
        $region69: #{t2t_forward.1} parent=11 // pred_check
          %p449 = pneg %p366
        $region70: #{t2t_forward.1} parent=11 // pred_check_branch
          %451 = sbr.rel (%p449) target = $region72
        $region71: #{t2t_forward.1} parent=11 // pred_region
          _
        $region72: #{t2t_forward.1} parent=11 // pred_fallthru
          _
      $region12: #{t2t_forward.1} parent=5 // pred_fallthru
        _
      %p452 = scmp.lt.s32.totalorder %s25, 2
      // Predicated region
      $region73: #{t2t_forward.1} parent=5 // pred_check
        %p453 = pneg %p452
      $region74: #{t2t_forward.1} parent=5 // pred_check_branch
        %455 = sbr.rel (%p453) target = $region76
      $region75: #{t2t_forward.1} parent=5 // pred_region
        // Predicated region
        $region77: #{t2t_forward.1} parent=75 // pred_check
          %p456 = pneg %p45
        $region78: #{t2t_forward.1} parent=75 // pred_check_branch
          %458 = sbr.rel (%p456) target = $region80
        $region79: #{t2t_forward.1} parent=75 // pred_region
          %p459 = scmp.lt.s32.totalorder %s25, 1
          %s460 = scalar_select %p459, %s25, 1
          %s461 = smul.addr %s460, 8
          %s462 = smul.addr %s461, 4
          %s463 = scalar_lea.vmem %s0, %s462
        $region80: #{t2t_forward.1} parent=75 // pred_fallthru
          _
      $region76: #{t2t_forward.1} parent=5 // pred_fallthru
        _
      %p464 = scmp.le.s32.totalorder 1, %s25
      %p465 = scmp.lt.s32.totalorder %s25, 3
      %p466 = pnand %p464, %p465
      %p467 = pneg %p466
      // Predicated region
      $region81: #{t2t_forward.1} parent=5 // pred_check
        _
      $region82: #{t2t_forward.1} parent=5 // pred_check_branch
        %469 = sbr.rel (%p466) target = $region84
      $region83: #{t2t_forward.1} parent=5 // pred_region
        %s470 = ssub.s32 %s25, 1
        %p471 = scmp.lt.s32.totalorder %s30, 1
        %s472 = scalar_select %p471, %s30, 1
        %s473 = smul.addr %s472, 8
        %s474 = smul.addr %s473, 4
        %s475 = scalar_lea.vmem %s0, %s474
        %p476 = pneg %p51
        %p477 = pneg %p48
        %p478 = pneg %p72
        %p479 = pneg %p69
        %p480 = pneg %p93
        %p481 = pneg %p90
        %p482 = pneg %p114
        %p483 = pneg %p111
        %p484 = pneg %p135
        %p485 = pneg %p132
        %p486 = pneg %p156
        %p487 = pneg %p153
        %p488 = pneg %p177
        %p489 = pneg %p174
        %p490 = pneg %p198
        %p491 = pneg %p195
        %p492 = pneg %p219
        %p493 = pneg %p216
        %p494 = pneg %p240
        %p495 = pneg %p237
        %p496 = pneg %p261
        %p497 = pneg %p258
        %p498 = pneg %p282
        %p499 = pneg %p279
        %p500 = pneg %p303
        %p501 = pneg %p300
        %p502 = pneg %p324
        %p503 = pneg %p321
        %p504 = pneg %p345
        %p505 = pneg %p342
        %p506 = pneg %p366
        %p507 = pneg %p363
        %p508 = pneg %p392
        %p509 = pneg %p389
        %s510 = sand.u32 %s379, 1
        %s511 = scalar_lea.sflag [#allocation3], %s510
        %s512 = sand.u32 %s379, 1
        %s513 = smul.addr %s512, 16
        %s514 = scalar_lea.vmem [#allocation2], %s513
        %p515 = scmp.lt.s32.totalorder %s30, 1
        %s516 = scalar_select %p515, %s30, 1
        %s517 = smul.addr %s516, 8
        %s518 = smul.addr %s517, 4
        %s519 = scalar_lea.vmem %s0, %s518
        %v521 = vld [vmem:[%s519] sm:$0xf]
        %v522 = vld [vmem:[%s519 + $0x4] sm:$0xf]
        %v523 = vld [vmem:[%s519 + $0x8] sm:$0xf]
        %v524 = vld [vmem:[%s519 + $0xc] sm:$0xf]
        %v525 = vld [vmem:[%s519 + $0x10] sm:$0xf]
        %v526 = vld [vmem:[%s519 + $0x14] sm:$0xf]
        %v527 = vld [vmem:[%s519 + $0x18] sm:$0xf]
        %v528 = vld [vmem:[%s519 + $0x1c] sm:$0xf]
        %v529 = vunpack.c.l.bf16 %v521
        %v530 = vunpack.c.l.bf16 %v522
        %v531 = vunpack.c.l.bf16 %v523
        %v532 = vunpack.c.l.bf16 %v524
        %v533 = vunpack.c.l.bf16 %v525
        %v534 = vunpack.c.l.bf16 %v526
        %v535 = vunpack.c.l.bf16 %v527
        %v536 = vunpack.c.l.bf16 %v528
        %vm537 = vcmask 293888
        %v538 = vsel %vm537, %v529, 0.0
        %539 = vadd.xlane.f32.xlu0 %v538
        %v540 = vpop.xlane.xlu0 %539
        %v541 = vsel %vm537, %v530, 0.0
        %542 = vadd.xlane.f32.xlu0 %v541
        %v543 = vpop.xlane.xlu0 %542
        %v544 = vsel %vm537, %v531, 0.0
        %545 = vadd.xlane.f32.xlu0 %v544
        %v546 = vpop.xlane.xlu0 %545
        %v547 = vsel %vm537, %v532, 0.0
        %548 = vadd.xlane.f32.xlu0 %v547
        %v549 = vpop.xlane.xlu0 %548
        %v550 = vsel %vm537, %v533, 0.0
        %551 = vadd.xlane.f32.xlu0 %v550
        %v552 = vpop.xlane.xlu0 %551
        %v553 = vsel %vm537, %v534, 0.0
        %554 = vadd.xlane.f32.xlu0 %v553
        %v555 = vpop.xlane.xlu0 %554
        %v556 = vsel %vm537, %v535, 0.0
        %557 = vadd.xlane.f32.xlu0 %v556
        %v558 = vpop.xlane.xlu0 %557
        %v559 = vsel %vm537, %v536, 0.0
        %560 = vadd.xlane.f32.xlu0 %v559
        %v561 = vpop.xlane.xlu0 %560
        %v562 = vmul.f32 %v540, 0.027777778
        %v563 = vmul.f32 %v543, 0.027777778
        %v564 = vmul.f32 %v546, 0.027777778
        %v565 = vmul.f32 %v549, 0.027777778
        %v566 = vmul.f32 %v552, 0.027777778
        %v567 = vmul.f32 %v555, 0.027777778
        %v568 = vmul.f32 %v558, 0.027777778
        %v569 = vmul.f32 %v561, 0.027777778
        %v570 = vmul.f32 %v529, %v529
        %v571 = vmul.f32 %v530, %v530
        %v572 = vmul.f32 %v531, %v531
        %v573 = vmul.f32 %v532, %v532
        %v574 = vmul.f32 %v533, %v533
        %v575 = vmul.f32 %v534, %v534
        %v576 = vmul.f32 %v535, %v535
        %v577 = vmul.f32 %v536, %v536
        %v578 = vsel %vm537, %v570, 0.0
        %579 = vadd.xlane.f32.xlu0 %v578
        %v580 = vpop.xlane.xlu0 %579
        %v581 = vsel %vm537, %v571, 0.0
        %582 = vadd.xlane.f32.xlu0 %v581
        %v583 = vpop.xlane.xlu0 %582
        %v584 = vsel %vm537, %v572, 0.0
        %585 = vadd.xlane.f32.xlu0 %v584
        %v586 = vpop.xlane.xlu0 %585
        %v587 = vsel %vm537, %v573, 0.0
        %588 = vadd.xlane.f32.xlu0 %v587
        %v589 = vpop.xlane.xlu0 %588
        %v590 = vsel %vm537, %v574, 0.0
        %591 = vadd.xlane.f32.xlu0 %v590
        %v592 = vpop.xlane.xlu0 %591
        %v593 = vsel %vm537, %v575, 0.0
        %594 = vadd.xlane.f32.xlu0 %v593
        %v595 = vpop.xlane.xlu0 %594
        %v596 = vsel %vm537, %v576, 0.0
        %597 = vadd.xlane.f32.xlu0 %v596
        %v598 = vpop.xlane.xlu0 %597
        %v599 = vsel %vm537, %v577, 0.0
        %600 = vadd.xlane.f32.xlu0 %v599
        %v601 = vpop.xlane.xlu0 %600
        %v602 = vmul.f32 %v580, 0.027777778
        %v603 = vmul.f32 %v583, 0.027777778
        %v604 = vmul.f32 %v586, 0.027777778
        %v605 = vmul.f32 %v589, 0.027777778
        %v606 = vmul.f32 %v592, 0.027777778
        %v607 = vmul.f32 %v595, 0.027777778
        %v608 = vmul.f32 %v598, 0.027777778
        %v609 = vmul.f32 %v601, 0.027777778
        %v610 = vsub.f32 %v529, %v562
        %v611 = vsub.f32 %v530, %v563
        %v612 = vsub.f32 %v531, %v564
        %v613 = vsub.f32 %v532, %v565
        %v614 = vsub.f32 %v533, %v566
        %v615 = vsub.f32 %v534, %v567
        %v616 = vsub.f32 %v535, %v568
        %v617 = vsub.f32 %v536, %v569
        %v618 = vmul.f32 %v562, %v562
        %v619 = vmul.f32 %v563, %v563
        %v620 = vmul.f32 %v564, %v564
        %v621 = vmul.f32 %v565, %v565
        %v622 = vmul.f32 %v566, %v566
        %v623 = vmul.f32 %v567, %v567
        %v624 = vmul.f32 %v568, %v568
        %v625 = vmul.f32 %v569, %v569
        %v626 = vsub.f32 %v602, %v618
        %v627 = vsub.f32 %v603, %v619
        %v628 = vsub.f32 %v604, %v620
        %v629 = vsub.f32 %v605, %v621
        %v630 = vsub.f32 %v606, %v622
        %v631 = vsub.f32 %v607, %v623
        %v632 = vsub.f32 %v608, %v624
        %v633 = vsub.f32 %v609, %v625
        %v634 = vadd.f32 %v626, 1e-05
        %v635 = vadd.f32 %v627, 1e-05
        %v636 = vadd.f32 %v628, 1e-05
        %v637 = vadd.f32 %v629, 1e-05
        %v638 = vadd.f32 %v630, 1e-05
        %v639 = vadd.f32 %v631, 1e-05
        %v640 = vadd.f32 %v632, 1e-05
        %v641 = vadd.f32 %v633, 1e-05
        %v642 = vrsqrt.pop %v634
        %v643 = vrsqrt.pop %v635
        %v644 = vrsqrt.pop %v636
        %v645 = vrsqrt.pop %v637
        %v646 = vrsqrt.pop %v638
        %v647 = vrsqrt.pop %v639
        %v648 = vrsqrt.pop %v640
        %v649 = vrsqrt.pop %v641
        %v650 = vmul.f32 %v610, %v642
        %v651 = vmul.f32 %v611, %v643
        %v652 = vmul.f32 %v612, %v644
        %v653 = vmul.f32 %v613, %v645
        %v654 = vmul.f32 %v614, %v646
        %v655 = vmul.f32 %v615, %v647
        %v656 = vmul.f32 %v616, %v648
        %v657 = vmul.f32 %v617, %v649
        %v658 = vld [vmem:[%s1] sm:$0x1]
        %v660 = vlaneseq
        %v661 = vshrl.u32 %v660, 7
        %v662 = vsub.s32 0, %v661
        %v663 = vrot.slane %v658, %v662
        %v665 = vmul.f32 %v650, %v663
        %v666 = vmul.f32 %v651, %v663
        %v667 = vmul.f32 %v652, %v663
        %v668 = vmul.f32 %v653, %v663
        %v669 = vmul.f32 %v654, %v663
        %v670 = vmul.f32 %v655, %v663
        %v671 = vmul.f32 %v656, %v663
        %v672 = vmul.f32 %v657, %v663
        %v673 = vld [vmem:[%s2] sm:$0x1]
        %v675 = vlaneseq
        %v676 = vshrl.u32 %v675, 7
        %v677 = vsub.s32 0, %v676
        %v678 = vrot.slane %v673, %v677
        %v680 = vadd.f32 %v665, %v678
        %v681 = vadd.f32 %v666, %v678
        %v682 = vadd.f32 %v667, %v678
        %v683 = vadd.f32 %v668, %v678
        %v684 = vadd.f32 %v669, %v678
        %v685 = vadd.f32 %v670, %v678
        %v686 = vadd.f32 %v671, %v678
        %v687 = vadd.f32 %v672, %v678
        %v688 = vpack.c.bf16 %v681, %v680
        %v689 = vpack.c.bf16 %v683, %v682
        %v690 = vpack.c.bf16 %v685, %v684
        %v691 = vpack.c.bf16 %v687, %v686
        %v692 = vld [vmem:[%s3] sm:$0xf]
        %v693 = vld [vmem:[%s3 + $0x4] sm:$0xf]
        %v694 = vld [vmem:[%s3 + $0x8] sm:$0xf]
        %v695 = vld [vmem:[%s3 + $0xc] sm:$0xf]
        %v696 = vld [vmem:[%s3 + $0x10] sm:$0x3]
        %v697 = vld [vmem:[%s4] sm:$0x1]
        %v699 = vlaneseq
        %v700 = vshrl.u32 %v699, 7
        %v701 = vsub.s32 0, %v700
        %v702 = vrot.slane %v697, %v701
        %v709 = vunpack.c.l.b16 %v692
        %v710 = vunpack.c.l.b16 %v693
        %v711 = vunpack.c.l.b16 %v694
        %v712 = vunpack.c.l.b16 %v695
        %v713 = vunpack.c.l.b16 %v696
        %v714 = vpack.c.b16 %v710, %v709
        %v715 = vpack.c.b16 %v712, %v711
        %v716 = vpack.c.b16 %v713, %v713
        %v720 = vsel %vm537, %v688, 0
        %v723 = vsel %vm537, %v689, 0
        %v726 = vsel %vm537, %v690, 0
        %v729 = vsel %vm537, %v691, 0
        %vm731 = vcmask 1041408
        %v733 = vsel %vm731, %v716, 0
        %735 = vmatprep.subr.bf16.mxu0 0
        %736 = vmatpush1.bf16.msra.mxu0 %v714
        %737 = vmatprep.subr.bf16.mxu0 0
        %738 = vmatpush1.bf16.msra.mxu0 %v715
        %739 = vmatprep.subr.bf16.mxu0 0
        %740 = vmatpush1.bf16.msra.mxu0 %v733
        %741 = vmatprep.subr.bf16.mxu0 0
        %742 = vmatpush1.bf16.msra.mxu0 0
        %743 = vmatprep.subr.bf16.mxu0 0
        %744 = vmatpush1.bf16.msra.mxu0 0
        %745 = vmatprep.subr.bf16.mxu0 0
        %746 = vmatpush1.bf16.msra.mxu0 0
        %747 = vmatprep.subr.bf16.mxu0 0
        %748 = vmatpush1.bf16.msra.mxu0 0
        %749 = vmatprep.subr.bf16.mxu0 0
        %750 = vmatpush1.bf16.msra.mxu0 0
        %751 = vmatprep.subr.bf16.mxu0 0
        %752 = vmatpush1.bf16.msra.mxu0 0
        %753 = vmatprep.subr.bf16.mxu0 0
        %754 = vmatpush1.bf16.msra.mxu0 0
        %755 = vmatprep.subr.bf16.mxu0 0
        %756 = vmatpush1.bf16.msra.mxu0 0
        %757 = vmatprep.subr.bf16.mxu0 0
        %758 = vmatpush1.bf16.msra.mxu0 0
        %759 = vmatprep.subr.bf16.mxu0 0
        %760 = vmatpush1.bf16.msra.mxu0 0
        %761 = vmatprep.subr.bf16.mxu0 0
        %762 = vmatpush1.bf16.msra.mxu0 0
        %763 = vmatprep.subr.bf16.mxu0 0
        %764 = vmatpush1.bf16.msra.mxu0 0
        %765 = vmatprep.subr.bf16.mxu0 0
        %766 = vmatpush1.bf16.msra.mxu0 0
        %767 = vmatprep.mubr.bf16.mxu0 0
        %768 = vmatmul.mubr.bf16.gmra.mrb[0].mxu0 %v720
        %v769 = vpop.f32.mrb[0].mxu0
        %v770 = vadd.f32 %v702, %v769
        %v771 = vpop.f32.mrb[0].mxu0
        %v772 = vpop.f32.mrb[0].mxu0
        %v773 = vadd.f32 %v702, %v772
        %v774 = vpop.f32.mrb[0].mxu0
        %775 = vmatprep.mubr.bf16.mxu0 0
        %776 = vmatmul.mubr.bf16.gmra.mrb[0].mxu0 %v723
        %v777 = vpop.f32.mrb[0].mxu0
        %v778 = vadd.f32 %v702, %v777
        %v779 = vpop.f32.mrb[0].mxu0
        %v780 = vpop.f32.mrb[0].mxu0
        %v781 = vadd.f32 %v702, %v780
        %v782 = vpop.f32.mrb[0].mxu0
        %783 = vmatprep.mubr.bf16.mxu0 0
        %784 = vmatmul.mubr.bf16.gmra.mrb[0].mxu0 %v726
        %v785 = vpop.f32.mrb[0].mxu0
        %v786 = vadd.f32 %v702, %v785
        %v787 = vpop.f32.mrb[0].mxu0
        %v788 = vpop.f32.mrb[0].mxu0
        %v789 = vadd.f32 %v702, %v788
        %v790 = vpop.f32.mrb[0].mxu0
        %791 = vmatprep.mubr.bf16.mxu0 0
        %792 = vmatmul.mubr.bf16.gmra.mrb[0].mxu0 %v729
        %v793 = vpop.f32.mrb[0].mxu0
        %v794 = vadd.f32 %v702, %v793
        %v795 = vpop.f32.mrb[0].mxu0
        %v796 = vpop.f32.mrb[0].mxu0
        %v797 = vadd.f32 %v702, %v796
        %v798 = vpop.f32.mrb[0].mxu0
        %799 = vdwg.mxu0
        %v800 = vmul.f32 %v770, %v770
        %v801 = vmul.f32 %v773, %v773
        %v802 = vmul.f32 %v778, %v778
        %v803 = vmul.f32 %v781, %v781
        %v804 = vmul.f32 %v786, %v786
        %v805 = vmul.f32 %v789, %v789
        %v806 = vmul.f32 %v794, %v794
        %v807 = vmul.f32 %v797, %v797
        %vm808 = vcmask 130048
        %v809 = vsel %vm808, %v800, 0.0
        %810 = vadd.xlane.f32.xlu0 %v809
        %v811 = vpop.xlane.xlu0 %810
        %v812 = vsel %vm808, %v801, 0.0
        %813 = vadd.xlane.f32.xlu0 %v812
        %v814 = vpop.xlane.xlu0 %813
        %v815 = vsel %vm808, %v802, 0.0
        %816 = vadd.xlane.f32.xlu0 %v815
        %v817 = vpop.xlane.xlu0 %816
        %v818 = vsel %vm808, %v803, 0.0
        %819 = vadd.xlane.f32.xlu0 %v818
        %v820 = vpop.xlane.xlu0 %819
        %v821 = vsel %vm808, %v804, 0.0
        %822 = vadd.xlane.f32.xlu0 %v821
        %v823 = vpop.xlane.xlu0 %822
        %v824 = vsel %vm808, %v805, 0.0
        %825 = vadd.xlane.f32.xlu0 %v824
        %v826 = vpop.xlane.xlu0 %825
        %v827 = vsel %vm808, %v806, 0.0
        %828 = vadd.xlane.f32.xlu0 %v827
        %v829 = vpop.xlane.xlu0 %828
        %v830 = vsel %vm808, %v807, 0.0
        %831 = vadd.xlane.f32.xlu0 %v830
        %v832 = vpop.xlane.xlu0 %831
        %v833 = vmul.f32 %v811, 0.5
        %v834 = vmul.f32 %v814, 0.5
        %v835 = vmul.f32 %v817, 0.5
        %v836 = vmul.f32 %v820, 0.5
        %v837 = vmul.f32 %v823, 0.5
        %v838 = vmul.f32 %v826, 0.5
        %v839 = vmul.f32 %v829, 0.5
        %v840 = vmul.f32 %v832, 0.5
        %v841 = vsub.f32 %v770, %v833
        %v842 = vsub.f32 %v773, %v834
        %v843 = vsub.f32 %v778, %v835
        %v844 = vsub.f32 %v781, %v836
        %v845 = vsub.f32 %v786, %v837
        %v846 = vsub.f32 %v789, %v838
        %v847 = vsub.f32 %v794, %v839
        %v848 = vsub.f32 %v797, %v840
        %v849 = vmul.f32 %v841, 1.442695
        %v850 = vpow.pop %v849
        %v851 = vmul.f32 %v842, 1.442695
        %v852 = vpow.pop %v851
        %v853 = vmul.f32 %v843, 1.442695
        %v854 = vpow.pop %v853
        %v855 = vmul.f32 %v844, 1.442695
        %v856 = vpow.pop %v855
        %v857 = vmul.f32 %v845, 1.442695
        %v858 = vpow.pop %v857
        %v859 = vmul.f32 %v846, 1.442695
        %v860 = vpow.pop %v859
        %v861 = vmul.f32 %v847, 1.442695
        %v862 = vpow.pop %v861
        %v863 = vmul.f32 %v848, 1.442695
        %v864 = vpow.pop %v863
        %v865 = vmul.f32 %v850, 0.35355338
        %v866 = vmul.f32 %v852, 0.35355338
        %v867 = vmul.f32 %v854, 0.35355338
        %v868 = vmul.f32 %v856, 0.35355338
        %v869 = vmul.f32 %v858, 0.35355338
        %v870 = vmul.f32 %v860, 0.35355338
        %v871 = vmul.f32 %v862, 0.35355338
        %v872 = vmul.f32 %v864, 0.35355338
        %881 = vrot.lane.b32.xlu0 %v800, 112
        %v882 = vpop.permute.xlu0 %881
        %883 = vrot.lane.b32.xlu0 %v801, 112
        %v884 = vpop.permute.xlu0 %883
        %885 = vrot.lane.b32.xlu0 %v802, 112
        %v886 = vpop.permute.xlu0 %885
        %887 = vrot.lane.b32.xlu0 %v803, 112
        %v888 = vpop.permute.xlu0 %887
        %889 = vrot.lane.b32.xlu0 %v804, 112
        %v890 = vpop.permute.xlu0 %889
        %891 = vrot.lane.b32.xlu0 %v805, 112
        %v892 = vpop.permute.xlu0 %891
        %893 = vrot.lane.b32.xlu0 %v806, 112
        %v894 = vpop.permute.xlu0 %893
        %895 = vrot.lane.b32.xlu0 %v807, 112
        %v896 = vpop.permute.xlu0 %895
        %v905 = vsel %vm808, %v882, 0.0
        %906 = vadd.xlane.f32.xlu0 %v905
        %v907 = vpop.xlane.xlu0 %906
        %v908 = vsel %vm808, %v884, 0.0
        %909 = vadd.xlane.f32.xlu0 %v908
        %v910 = vpop.xlane.xlu0 %909
        %v911 = vsel %vm808, %v886, 0.0
        %912 = vadd.xlane.f32.xlu0 %v911
        %v913 = vpop.xlane.xlu0 %912
        %v914 = vsel %vm808, %v888, 0.0
        %915 = vadd.xlane.f32.xlu0 %v914
        %v916 = vpop.xlane.xlu0 %915
        %v917 = vsel %vm808, %v890, 0.0
        %918 = vadd.xlane.f32.xlu0 %v917
        %v919 = vpop.xlane.xlu0 %918
        %v920 = vsel %vm808, %v892, 0.0
        %921 = vadd.xlane.f32.xlu0 %v920
        %v922 = vpop.xlane.xlu0 %921
        %v923 = vsel %vm808, %v894, 0.0
        %924 = vadd.xlane.f32.xlu0 %v923
        %v925 = vpop.xlane.xlu0 %924
        %v926 = vsel %vm808, %v896, 0.0
        %927 = vadd.xlane.f32.xlu0 %v926
        %v928 = vpop.xlane.xlu0 %927
        %v929 = vmul.f32 %v907, 0.5
        %v930 = vmul.f32 %v910, 0.5
        %v931 = vmul.f32 %v913, 0.5
        %v932 = vmul.f32 %v916, 0.5
        %v933 = vmul.f32 %v919, 0.5
        %v934 = vmul.f32 %v922, 0.5
        %v935 = vmul.f32 %v925, 0.5
        %v936 = vmul.f32 %v928, 0.5
        %v937 = vsub.f32 %v770, %v929
        %v938 = vsub.f32 %v773, %v930
        %v939 = vsub.f32 %v778, %v931
        %v940 = vsub.f32 %v781, %v932
        %v941 = vsub.f32 %v786, %v933
        %v942 = vsub.f32 %v789, %v934
        %v943 = vsub.f32 %v794, %v935
        %v944 = vsub.f32 %v797, %v936
        %v945 = vmul.f32 %v937, 1.442695
        %v946 = vpow.pop %v945
        %v947 = vmul.f32 %v938, 1.442695
        %v948 = vpow.pop %v947
        %v949 = vmul.f32 %v939, 1.442695
        %v950 = vpow.pop %v949
        %v951 = vmul.f32 %v940, 1.442695
        %v952 = vpow.pop %v951
        %v953 = vmul.f32 %v941, 1.442695
        %v954 = vpow.pop %v953
        %v955 = vmul.f32 %v942, 1.442695
        %v956 = vpow.pop %v955
        %v957 = vmul.f32 %v943, 1.442695
        %v958 = vpow.pop %v957
        %v959 = vmul.f32 %v944, 1.442695
        %v960 = vpow.pop %v959
        %v961 = vmul.f32 %v946, 0.35355338
        %v962 = vmul.f32 %v948, 0.35355338
        %v963 = vmul.f32 %v950, 0.35355338
        %v964 = vmul.f32 %v952, 0.35355338
        %v965 = vmul.f32 %v954, 0.35355338
        %v966 = vmul.f32 %v956, 0.35355338
        %v967 = vmul.f32 %v958, 0.35355338
        %v968 = vmul.f32 %v960, 0.35355338
        %vm969 = vcmask 458112
        %v970 = vsel %vm969, %v865, 0.0
        %v971 = vsel %vm969, %v866, 0.0
        %v972 = vadd.f32 %v970, %v971
        %v973 = vsel %vm969, %v867, 0.0
        %v974 = vadd.f32 %v972, %v973
        %v975 = vsel %vm969, %v868, 0.0
        %v976 = vadd.f32 %v974, %v975
        %v977 = vsel %vm969, %v869, 0.0
        %v978 = vadd.f32 %v976, %v977
        %v979 = vsel %vm969, %v870, 0.0
        %v980 = vadd.f32 %v978, %v979
        %v981 = vsel %vm969, %v871, 0.0
        %v982 = vadd.f32 %v980, %v981
        %v983 = vsel %vm969, %v872, 0.0
        %v984 = vadd.f32 %v982, %v983
        %v985 = vrot.slane %v984, 4
        %v986 = vadd.f32 %v984, %v985
        %v987 = vrot.slane %v986, 2
        %v988 = vadd.f32 %v986, %v987
        %v989 = vrot.slane %v988, 1
        %v990 = vadd.f32 %v988, %v989
        %992 = vrot.lane.b32.xlu0 %v990, 8
        %v993 = vpop.permute.xlu0 %992
        %v995 = vmul.f32 %v961, %v993
        %v996 = vmul.f32 %v962, %v993
        %v997 = vmul.f32 %v963, %v993
        %v998 = vmul.f32 %v964, %v993
        %v999 = vmul.f32 %v965, %v993
        %v1000 = vmul.f32 %v966, %v993
        %v1001 = vmul.f32 %v967, %v993
        %v1002 = vmul.f32 %v968, %v993
        %1011 = vrot.lane.b32.xlu0 %v995, 72
        %v1012 = vpop.permute.xlu0 %1011
        %1013 = vrot.lane.b32.xlu0 %v996, 72
        %v1014 = vpop.permute.xlu0 %1013
        %1015 = vrot.lane.b32.xlu0 %v997, 72
        %v1016 = vpop.permute.xlu0 %1015
        %1017 = vrot.lane.b32.xlu0 %v998, 72
        %v1018 = vpop.permute.xlu0 %1017
        %1019 = vrot.lane.b32.xlu0 %v999, 72
        %v1020 = vpop.permute.xlu0 %1019
        %1021 = vrot.lane.b32.xlu0 %v1000, 72
        %v1022 = vpop.permute.xlu0 %1021
        %1023 = vrot.lane.b32.xlu0 %v1001, 72
        %v1024 = vpop.permute.xlu0 %1023
        %1025 = vrot.lane.b32.xlu0 %v1002, 72
        %v1026 = vpop.permute.xlu0 %1025
        %vm1035 = vcmask 64512
        %v1036 = vsel %vm1035, %v1012, 0.0
        %1037 = vadd.xlane.f32.xlu0 %v1036
        %v1038 = vpop.xlane.xlu0 %1037
        %v1039 = vsel %vm1035, %v1014, 0.0
        %1040 = vadd.xlane.f32.xlu0 %v1039
        %v1041 = vpop.xlane.xlu0 %1040
        %v1042 = vsel %vm1035, %v1016, 0.0
        %1043 = vadd.xlane.f32.xlu0 %v1042
        %v1044 = vpop.xlane.xlu0 %1043
        %v1045 = vsel %vm1035, %v1018, 0.0
        %1046 = vadd.xlane.f32.xlu0 %v1045
        %v1047 = vpop.xlane.xlu0 %1046
        %v1048 = vsel %vm1035, %v1020, 0.0
        %1049 = vadd.xlane.f32.xlu0 %v1048
        %v1050 = vpop.xlane.xlu0 %1049
        %v1051 = vsel %vm1035, %v1022, 0.0
        %1052 = vadd.xlane.f32.xlu0 %v1051
        %v1053 = vpop.xlane.xlu0 %1052
        %v1054 = vsel %vm1035, %v1024, 0.0
        %1055 = vadd.xlane.f32.xlu0 %v1054
        %v1056 = vpop.xlane.xlu0 %1055
        %v1057 = vsel %vm1035, %v1026, 0.0
        %1058 = vadd.xlane.f32.xlu0 %v1057
        %v1059 = vpop.xlane.xlu0 %1058
        %v1060 = vpack.c.bf16 %v866, %v865
        %v1061 = vpack.c.bf16 %v868, %v867
        %v1062 = vpack.c.bf16 %v870, %v869
        %v1063 = vpack.c.bf16 %v872, %v871
        %v1064 = vpack.c.bf16 %v773, %v770
        %v1065 = vpack.c.bf16 %v781, %v778
        %v1066 = vpack.c.bf16 %v789, %v786
        %v1067 = vpack.c.bf16 %v797, %v794
        %1072 = vrot.lane.b32.xlu0 %v1060, 80
        %v1073 = vpop.permute.xlu0 %1072
        %1074 = vrot.lane.b32.xlu0 %v1061, 80
        %v1075 = vpop.permute.xlu0 %1074
        %1076 = vrot.lane.b32.xlu0 %v1062, 80
        %v1077 = vpop.permute.xlu0 %1076
        %1078 = vrot.lane.b32.xlu0 %v1063, 80
        %v1079 = vpop.permute.xlu0 %1078
        %1084 = vxpose.xlu0.c.b16.start [1/8] %v1073, 128
        %1085 = vxpose.xlu0.c.b16.cont [2/8] %v1075, 128
        %1086 = vxpose.xlu0.c.b16.cont [3/8] %v1077, 128
        %1087 = vxpose.xlu0.c.b16.cont [4/8] %v1079, 128
        %1088 = vxpose.xlu0.c.b16.cont [5/8] 0, 128
        %1089 = vxpose.xlu0.c.b16.cont [6/8] 0, 128
        %1090 = vxpose.xlu0.c.b16.cont [7/8] 0, 128
        %1091 = vxpose.xlu0.c.b16.end [8/8] 0, 128
        %v1092 = vpop.trf.xlu0
        %v1093 = vpop.trf.xlu0
        %v1094 = vpop.trf.xlu0
        %v1095 = vpop.trf.xlu0
        %v1096 = vpop.trf.xlu0
        %v1097 = vpop.trf.xlu0
        %v1098 = vpop.trf.xlu0
        %v1099 = vpop.trf.xlu0
        %1104 = vrot.lane.b32.xlu0 %v1064, 96
        %v1105 = vpop.permute.xlu0 %1104
        %1106 = vrot.lane.b32.xlu0 %v1065, 96
        %v1107 = vpop.permute.xlu0 %1106
        %1108 = vrot.lane.b32.xlu0 %v1066, 96
        %v1109 = vpop.permute.xlu0 %1108
        %1110 = vrot.lane.b32.xlu0 %v1067, 96
        %v1111 = vpop.permute.xlu0 %1110
        %vm1116 = vcmask 523264
        %v1118 = vsel %vm1116, %v1092, 0
        %1120 = vmatprep.subr.bf16.mxu0 0
        %1121 = vmatpush1.bf16.msra.mxu0 %v1105
        %1122 = vmatprep.subr.bf16.mxu0 0
        %1123 = vmatpush1.bf16.msra.mxu0 %v1107
        %1124 = vmatprep.subr.bf16.mxu0 0
        %1125 = vmatpush1.bf16.msra.mxu0 %v1109
        %1126 = vmatprep.subr.bf16.mxu0 0
        %1127 = vmatpush1.bf16.msra.mxu0 %v1111
        %1128 = vmatprep.subr.bf16.mxu0 0
        %1129 = vmatpush1.bf16.msra.mxu0 0
        %1130 = vmatprep.subr.bf16.mxu0 0
        %1131 = vmatpush1.bf16.msra.mxu0 0
        %1132 = vmatprep.subr.bf16.mxu0 0
        %1133 = vmatpush1.bf16.msra.mxu0 0
        %1134 = vmatprep.subr.bf16.mxu0 0
        %1135 = vmatpush1.bf16.msra.mxu0 0
        %1136 = vmatprep.subr.bf16.mxu0 0
        %1137 = vmatpush1.bf16.msra.mxu0 0
        %1138 = vmatprep.subr.bf16.mxu0 0
        %1139 = vmatpush1.bf16.msra.mxu0 0
        %1140 = vmatprep.subr.bf16.mxu0 0
        %1141 = vmatpush1.bf16.msra.mxu0 0
        %1142 = vmatprep.subr.bf16.mxu0 0
        %1143 = vmatpush1.bf16.msra.mxu0 0
        %1144 = vmatprep.subr.bf16.mxu0 0
        %1145 = vmatpush1.bf16.msra.mxu0 0
        %1146 = vmatprep.subr.bf16.mxu0 0
        %1147 = vmatpush1.bf16.msra.mxu0 0
        %1148 = vmatprep.subr.bf16.mxu0 0
        %1149 = vmatpush1.bf16.msra.mxu0 0
        %1150 = vmatprep.subr.bf16.mxu0 0
        %1151 = vmatpush1.bf16.msra.mxu0 0
        %1152 = vmatprep.mubr.bf16.mxu0 0
        %1153 = vmatmul.mubr.bf16.gmra.mrb[0].mxu0 %v1118
        %v1154 = vpop.f32.mrb[0].mxu0
        %v1155 = vadd.f32 0.0, %v1154
        %v1156 = vpop.f32.mrb[0].mxu0
        %v1157 = vpop.f32.mrb[0].mxu0
        %v1158 = vpop.f32.mrb[0].mxu0
        %1159 = vdwg.mxu0
        %v1160 = vpack.c.bf16 %v962, %v961
        %v1161 = vpack.c.bf16 %v964, %v963
        %v1162 = vpack.c.bf16 %v966, %v965
        %v1163 = vpack.c.bf16 %v968, %v967
        %v1164 = vpack.c.bf16 %v1155, %v1155
        %1169 = vrot.lane.b32.xlu0 %v1160, 72
        %v1170 = vpop.permute.xlu0 %1169
        %1171 = vrot.lane.b32.xlu0 %v1161, 72
        %v1172 = vpop.permute.xlu0 %1171
        %1173 = vrot.lane.b32.xlu0 %v1162, 72
        %v1174 = vpop.permute.xlu0 %1173
        %1175 = vrot.lane.b32.xlu0 %v1163, 72
        %v1176 = vpop.permute.xlu0 %1175
        %v1178 = vsel %vm1035, %v1170, 0
        %v1181 = vsel %vm1035, %v1172, 0
        %v1184 = vsel %vm1035, %v1174, 0
        %v1187 = vsel %vm1035, %v1176, 0
        %vm1189 = vcmask 1043456
        %v1191 = vsel %vm1189, %v1164, 0
        %1193 = vmatprep.subr.bf16.mxu0 0
        %1194 = vmatpush1.bf16.msra.mxu0 %v1191
        %1195 = vmatprep.subr.bf16.mxu0 0
        %1196 = vmatpush1.bf16.msra.mxu0 0
        %1197 = vmatprep.subr.bf16.mxu0 0
        %1198 = vmatpush1.bf16.msra.mxu0 0
        %1199 = vmatprep.subr.bf16.mxu0 0
        %1200 = vmatpush1.bf16.msra.mxu0 0
        %1201 = vmatprep.subr.bf16.mxu0 0
        %1202 = vmatpush1.bf16.msra.mxu0 0
        %1203 = vmatprep.subr.bf16.mxu0 0
        %1204 = vmatpush1.bf16.msra.mxu0 0
        %1205 = vmatprep.subr.bf16.mxu0 0
        %1206 = vmatpush1.bf16.msra.mxu0 0
        %1207 = vmatprep.subr.bf16.mxu0 0
        %1208 = vmatpush1.bf16.msra.mxu0 0
        %1209 = vmatprep.subr.bf16.mxu0 0
        %1210 = vmatpush1.bf16.msra.mxu0 0
        %1211 = vmatprep.subr.bf16.mxu0 0
        %1212 = vmatpush1.bf16.msra.mxu0 0
        %1213 = vmatprep.subr.bf16.mxu0 0
        %1214 = vmatpush1.bf16.msra.mxu0 0
        %1215 = vmatprep.subr.bf16.mxu0 0
        %1216 = vmatpush1.bf16.msra.mxu0 0
        %1217 = vmatprep.subr.bf16.mxu0 0
        %1218 = vmatpush1.bf16.msra.mxu0 0
        %1219 = vmatprep.subr.bf16.mxu0 0
        %1220 = vmatpush1.bf16.msra.mxu0 0
        %1221 = vmatprep.subr.bf16.mxu0 0
        %1222 = vmatpush1.bf16.msra.mxu0 0
        %1223 = vmatprep.subr.bf16.mxu0 0
        %1224 = vmatpush1.bf16.msra.mxu0 0
        %1225 = vmatprep.mubr.bf16.mxu0 0
        %1226 = vmatmul.mubr.bf16.gmra.mrb[0].mxu0 %v1178
        %v1227 = vpop.f32.mrb[0].mxu0
        %v1228 = vadd.f32 0.0, %v1227
        %v1229 = vpop.f32.mrb[0].mxu0
        %v1230 = vpop.f32.mrb[0].mxu0
        %v1231 = vadd.f32 0.0, %v1230
        %v1232 = vpop.f32.mrb[0].mxu0
        %1233 = vmatprep.mubr.bf16.mxu0 0
        %1234 = vmatmul.mubr.bf16.gmra.mrb[0].mxu0 %v1181
        %v1235 = vpop.f32.mrb[0].mxu0
        %v1236 = vadd.f32 0.0, %v1235
        %v1237 = vpop.f32.mrb[0].mxu0
        %v1238 = vpop.f32.mrb[0].mxu0
        %v1239 = vadd.f32 0.0, %v1238
        %v1240 = vpop.f32.mrb[0].mxu0
        %1241 = vmatprep.mubr.bf16.mxu0 0
        %1242 = vmatmul.mubr.bf16.gmra.mrb[0].mxu0 %v1184
        %v1243 = vpop.f32.mrb[0].mxu0
        %v1244 = vadd.f32 0.0, %v1243
        %v1245 = vpop.f32.mrb[0].mxu0
        %v1246 = vpop.f32.mrb[0].mxu0
        %v1247 = vadd.f32 0.0, %v1246
        %v1248 = vpop.f32.mrb[0].mxu0
        %1249 = vmatprep.mubr.bf16.mxu0 0
        %1250 = vmatmul.mubr.bf16.gmra.mrb[0].mxu0 %v1187
        %v1251 = vpop.f32.mrb[0].mxu0
        %v1252 = vadd.f32 0.0, %v1251
        %v1253 = vpop.f32.mrb[0].mxu0
        %v1254 = vpop.f32.mrb[0].mxu0
        %v1255 = vadd.f32 0.0, %v1254
        %v1256 = vpop.f32.mrb[0].mxu0
        %1257 = vdwg.mxu0
        %v1258 = vadd.f32 %v1038, 1e-08
        %v1259 = vadd.f32 %v1041, 1e-08
        %v1260 = vadd.f32 %v1044, 1e-08
        %v1261 = vadd.f32 %v1047, 1e-08
        %v1262 = vadd.f32 %v1050, 1e-08
        %v1263 = vadd.f32 %v1053, 1e-08
        %v1264 = vadd.f32 %v1056, 1e-08
        %v1265 = vadd.f32 %v1059, 1e-08
        %v1266 = vrcp.pop %v1258
        %v1267 = vrcp.pop %v1259
        %v1268 = vrcp.pop %v1260
        %v1269 = vrcp.pop %v1261
        %v1270 = vrcp.pop %v1262
        %v1271 = vrcp.pop %v1263
        %v1272 = vrcp.pop %v1264
        %v1273 = vrcp.pop %v1265
        %v1274 = vmul.f32 %v1228, %v1266
        %v1275 = vmul.f32 %v1231, %v1267
        %v1276 = vmul.f32 %v1236, %v1268
        %v1277 = vmul.f32 %v1239, %v1269
        %v1278 = vmul.f32 %v1244, %v1270
        %v1279 = vmul.f32 %v1247, %v1271
        %v1280 = vmul.f32 %v1252, %v1272
        %v1281 = vmul.f32 %v1255, %v1273
        %v1282 = vpack.c.bf16 %v1275, %v1274
        %v1283 = vpack.c.bf16 %v1277, %v1276
        %v1284 = vpack.c.bf16 %v1279, %v1278
        %v1285 = vpack.c.bf16 %v1281, %v1280
        %v1286 = vld [vmem:[%s5] sm:$0xf]
        %v1287 = vld [vmem:[%s5 + $0x4] sm:$0xf]
        %v1290 = vunpack.c.l.b16 %v1286
        %v1291 = vunpack.c.l.b16 %v1287
        %v1292 = vpack.c.b16 %v1291, %v1290
        %v1295 = vsel %vm808, %v1282, 0
        %v1298 = vsel %vm808, %v1283, 0
        %v1301 = vsel %vm808, %v1284, 0
        %v1304 = vsel %vm808, %v1285, 0
        %1306 = vmatprep.subr.bf16.mxu0 0
        %1307 = vmatpush1.bf16.msra.mxu0 %v1292
        %1308 = vmatprep.subr.bf16.mxu0 0
        %1309 = vmatpush1.bf16.msra.mxu0 0
        %1310 = vmatprep.subr.bf16.mxu0 0
        %1311 = vmatpush1.bf16.msra.mxu0 0
        %1312 = vmatprep.subr.bf16.mxu0 0
        %1313 = vmatpush1.bf16.msra.mxu0 0
        %1314 = vmatprep.subr.bf16.mxu0 0
        %1315 = vmatpush1.bf16.msra.mxu0 0
        %1316 = vmatprep.subr.bf16.mxu0 0
        %1317 = vmatpush1.bf16.msra.mxu0 0
        %1318 = vmatprep.subr.bf16.mxu0 0
        %1319 = vmatpush1.bf16.msra.mxu0 0
        %1320 = vmatprep.subr.bf16.mxu0 0
        %1321 = vmatpush1.bf16.msra.mxu0 0
        %1322 = vmatprep.subr.bf16.mxu0 0
        %1323 = vmatpush1.bf16.msra.mxu0 0
        %1324 = vmatprep.subr.bf16.mxu0 0
        %1325 = vmatpush1.bf16.msra.mxu0 0
        %1326 = vmatprep.subr.bf16.mxu0 0
        %1327 = vmatpush1.bf16.msra.mxu0 0
        %1328 = vmatprep.subr.bf16.mxu0 0
        %1329 = vmatpush1.bf16.msra.mxu0 0
        %1330 = vmatprep.subr.bf16.mxu0 0
        %1331 = vmatpush1.bf16.msra.mxu0 0
        %1332 = vmatprep.subr.bf16.mxu0 0
        %1333 = vmatpush1.bf16.msra.mxu0 0
        %1334 = vmatprep.subr.bf16.mxu0 0
        %1335 = vmatpush1.bf16.msra.mxu0 0
        %1336 = vmatprep.subr.bf16.mxu0 0
        %1337 = vmatpush1.bf16.msra.mxu0 0
        %1338 = vmatprep.mubr.bf16.mxu0 0
        %1339 = vmatmul.mubr.bf16.gmra.mrb[0].mxu0 %v1295
        %v1340 = vpop.f32.mrb[0].mxu0
        %v1341 = vadd.f32 0.0, %v1340
        %v1342 = vpop.f32.mrb[0].mxu0
        %v1343 = vpop.f32.mrb[0].mxu0
        %v1344 = vadd.f32 0.0, %v1343
        %v1345 = vpop.f32.mrb[0].mxu0
        %1346 = vmatprep.mubr.bf16.mxu0 0
        %1347 = vmatmul.mubr.bf16.gmra.mrb[0].mxu0 %v1298
        %v1348 = vpop.f32.mrb[0].mxu0
        %v1349 = vadd.f32 0.0, %v1348
        %v1350 = vpop.f32.mrb[0].mxu0
        %v1351 = vpop.f32.mrb[0].mxu0
        %v1352 = vadd.f32 0.0, %v1351
        %v1353 = vpop.f32.mrb[0].mxu0
        %1354 = vmatprep.mubr.bf16.mxu0 0
        %1355 = vmatmul.mubr.bf16.gmra.mrb[0].mxu0 %v1301
        %v1356 = vpop.f32.mrb[0].mxu0
        %v1357 = vadd.f32 0.0, %v1356
        %v1358 = vpop.f32.mrb[0].mxu0
        %v1359 = vpop.f32.mrb[0].mxu0
        %v1360 = vadd.f32 0.0, %v1359
        %v1361 = vpop.f32.mrb[0].mxu0
        %1362 = vmatprep.mubr.bf16.mxu0 0
        %1363 = vmatmul.mubr.bf16.gmra.mrb[0].mxu0 %v1304
        %v1364 = vpop.f32.mrb[0].mxu0
        %v1365 = vadd.f32 0.0, %v1364
        %v1366 = vpop.f32.mrb[0].mxu0
        %v1367 = vpop.f32.mrb[0].mxu0
        %v1368 = vadd.f32 0.0, %v1367
        %v1369 = vpop.f32.mrb[0].mxu0
        %1370 = vdwg.mxu0
        %1379 = vrot.lane.b32.xlu0 %v1341, 32
        %v1380 = vpop.permute.xlu0 %1379
        %1381 = vrot.lane.b32.xlu0 %v1344, 32
        %v1382 = vpop.permute.xlu0 %1381
        %1383 = vrot.lane.b32.xlu0 %v1349, 32
        %v1384 = vpop.permute.xlu0 %1383
        %1385 = vrot.lane.b32.xlu0 %v1352, 32
        %v1386 = vpop.permute.xlu0 %1385
        %1387 = vrot.lane.b32.xlu0 %v1357, 32
        %v1388 = vpop.permute.xlu0 %1387
        %1389 = vrot.lane.b32.xlu0 %v1360, 32
        %v1390 = vpop.permute.xlu0 %1389
        %1391 = vrot.lane.b32.xlu0 %v1365, 32
        %v1392 = vpop.permute.xlu0 %1391
        %1393 = vrot.lane.b32.xlu0 %v1368, 32
        %v1394 = vpop.permute.xlu0 %1393
        %v1403 = vadd.f32 %v770, %v1380
        %v1404 = vadd.f32 %v773, %v1382
        %v1405 = vadd.f32 %v778, %v1384
        %v1406 = vadd.f32 %v781, %v1386
        %v1407 = vadd.f32 %v786, %v1388
        %v1408 = vadd.f32 %v789, %v1390
        %v1409 = vadd.f32 %v794, %v1392
        %v1410 = vadd.f32 %v797, %v1394
        %v1411 = vld [vmem:[%s6] sm:$0x1]
        %v1413 = vlaneseq
        %v1414 = vshrl.u32 %v1413, 7
        %v1415 = vsub.s32 0, %v1414
        %v1416 = vrot.slane %v1411, %v1415
        %1417 = vrot.lane.b32.xlu0 %v1416, 32
        %v1418 = vpop.permute.xlu0 %1417
        %v1420 = vadd.f32 %v1403, %v1418
        %v1421 = vadd.f32 %v1404, %v1418
        %v1422 = vadd.f32 %v1405, %v1418
        %v1423 = vadd.f32 %v1406, %v1418
        %v1424 = vadd.f32 %v1407, %v1418
        %v1425 = vadd.f32 %v1408, %v1418
        %v1426 = vadd.f32 %v1409, %v1418
        %v1427 = vadd.f32 %v1410, %v1418
        %1436 = vrot.lane.b32.xlu0 %v1420, 96
        %v1437 = vpop.permute.xlu0 %1436
        %1438 = vrot.lane.b32.xlu0 %v1421, 96
        %v1439 = vpop.permute.xlu0 %1438
        %1440 = vrot.lane.b32.xlu0 %v1422, 96
        %v1441 = vpop.permute.xlu0 %1440
        %1442 = vrot.lane.b32.xlu0 %v1423, 96
        %v1443 = vpop.permute.xlu0 %1442
        %1444 = vrot.lane.b32.xlu0 %v1424, 96
        %v1445 = vpop.permute.xlu0 %1444
        %1446 = vrot.lane.b32.xlu0 %v1425, 96
        %v1447 = vpop.permute.xlu0 %1446
        %1448 = vrot.lane.b32.xlu0 %v1426, 96
        %v1449 = vpop.permute.xlu0 %1448
        %1450 = vrot.lane.b32.xlu0 %v1427, 96
        %v1451 = vpop.permute.xlu0 %1450
        %v1460 = vsel %vm808, %v1437, 0.0
        %1461 = vadd.xlane.f32.xlu0 %v1460
        %v1462 = vpop.xlane.xlu0 %1461
        %v1463 = vsel %vm808, %v1439, 0.0
        %1464 = vadd.xlane.f32.xlu0 %v1463
        %v1465 = vpop.xlane.xlu0 %1464
        %v1466 = vsel %vm808, %v1441, 0.0
        %1467 = vadd.xlane.f32.xlu0 %v1466
        %v1468 = vpop.xlane.xlu0 %1467
        %v1469 = vsel %vm808, %v1443, 0.0
        %1470 = vadd.xlane.f32.xlu0 %v1469
        %v1471 = vpop.xlane.xlu0 %1470
        %v1472 = vsel %vm808, %v1445, 0.0
        %1473 = vadd.xlane.f32.xlu0 %v1472
        %v1474 = vpop.xlane.xlu0 %1473
        %v1475 = vsel %vm808, %v1447, 0.0
        %1476 = vadd.xlane.f32.xlu0 %v1475
        %v1477 = vpop.xlane.xlu0 %1476
        %v1478 = vsel %vm808, %v1449, 0.0
        %1479 = vadd.xlane.f32.xlu0 %v1478
        %v1480 = vpop.xlane.xlu0 %1479
        %v1481 = vsel %vm808, %v1451, 0.0
        %1482 = vadd.xlane.f32.xlu0 %v1481
        %v1483 = vpop.xlane.xlu0 %1482
        %v1484 = vmul.f32 %v1462, 0.0625
        %v1485 = vmul.f32 %v1465, 0.0625
        %v1486 = vmul.f32 %v1468, 0.0625
        %v1487 = vmul.f32 %v1471, 0.0625
        %v1488 = vmul.f32 %v1474, 0.0625
        %v1489 = vmul.f32 %v1477, 0.0625
        %v1490 = vmul.f32 %v1480, 0.0625
        %v1491 = vmul.f32 %v1483, 0.0625
        %v1492 = vmul.f32 %v1420, %v1420
        %v1493 = vmul.f32 %v1421, %v1421
        %v1494 = vmul.f32 %v1422, %v1422
        %v1495 = vmul.f32 %v1423, %v1423
        %v1496 = vmul.f32 %v1424, %v1424
        %v1497 = vmul.f32 %v1425, %v1425
        %v1498 = vmul.f32 %v1426, %v1426
        %v1499 = vmul.f32 %v1427, %v1427
        %1508 = vrot.lane.b32.xlu0 %v1492, 96
        %v1509 = vpop.permute.xlu0 %1508
        %1510 = vrot.lane.b32.xlu0 %v1493, 96
        %v1511 = vpop.permute.xlu0 %1510
        %1512 = vrot.lane.b32.xlu0 %v1494, 96
        %v1513 = vpop.permute.xlu0 %1512
        %1514 = vrot.lane.b32.xlu0 %v1495, 96
        %v1515 = vpop.permute.xlu0 %1514
        %1516 = vrot.lane.b32.xlu0 %v1496, 96
        %v1517 = vpop.permute.xlu0 %1516
        %1518 = vrot.lane.b32.xlu0 %v1497, 96
        %v1519 = vpop.permute.xlu0 %1518
        %1520 = vrot.lane.b32.xlu0 %v1498, 96
        %v1521 = vpop.permute.xlu0 %1520
        %1522 = vrot.lane.b32.xlu0 %v1499, 96
        %v1523 = vpop.permute.xlu0 %1522
        %v1532 = vsel %vm808, %v1509, 0.0
        %1533 = vadd.xlane.f32.xlu0 %v1532
        %v1534 = vpop.xlane.xlu0 %1533
        %v1535 = vsel %vm808, %v1511, 0.0
        %1536 = vadd.xlane.f32.xlu0 %v1535
        %v1537 = vpop.xlane.xlu0 %1536
        %v1538 = vsel %vm808, %v1513, 0.0
        %1539 = vadd.xlane.f32.xlu0 %v1538
        %v1540 = vpop.xlane.xlu0 %1539
        %v1541 = vsel %vm808, %v1515, 0.0
        %1542 = vadd.xlane.f32.xlu0 %v1541
        %v1543 = vpop.xlane.xlu0 %1542
        %v1544 = vsel %vm808, %v1517, 0.0
        %1545 = vadd.xlane.f32.xlu0 %v1544
        %v1546 = vpop.xlane.xlu0 %1545
        %v1547 = vsel %vm808, %v1519, 0.0
        %1548 = vadd.xlane.f32.xlu0 %v1547
        %v1549 = vpop.xlane.xlu0 %1548
        %v1550 = vsel %vm808, %v1521, 0.0
        %1551 = vadd.xlane.f32.xlu0 %v1550
        %v1552 = vpop.xlane.xlu0 %1551
        %v1553 = vsel %vm808, %v1523, 0.0
        %1554 = vadd.xlane.f32.xlu0 %v1553
        %v1555 = vpop.xlane.xlu0 %1554
        %v1556 = vmul.f32 %v1534, 0.0625
        %v1557 = vmul.f32 %v1537, 0.0625
        %v1558 = vmul.f32 %v1540, 0.0625
        %v1559 = vmul.f32 %v1543, 0.0625
        %v1560 = vmul.f32 %v1546, 0.0625
        %v1561 = vmul.f32 %v1549, 0.0625
        %v1562 = vmul.f32 %v1552, 0.0625
        %v1563 = vmul.f32 %v1555, 0.0625
        %v1564 = vsub.f32 %v1420, %v1484
        %v1565 = vsub.f32 %v1421, %v1485
        %v1566 = vsub.f32 %v1422, %v1486
        %v1567 = vsub.f32 %v1423, %v1487
        %v1568 = vsub.f32 %v1424, %v1488
        %v1569 = vsub.f32 %v1425, %v1489
        %v1570 = vsub.f32 %v1426, %v1490
        %v1571 = vsub.f32 %v1427, %v1491
        %v1572 = vmul.f32 %v1484, %v1484
        %v1573 = vmul.f32 %v1485, %v1485
        %v1574 = vmul.f32 %v1486, %v1486
        %v1575 = vmul.f32 %v1487, %v1487
        %v1576 = vmul.f32 %v1488, %v1488
        %v1577 = vmul.f32 %v1489, %v1489
        %v1578 = vmul.f32 %v1490, %v1490
        %v1579 = vmul.f32 %v1491, %v1491
        %v1580 = vsub.f32 %v1556, %v1572
        %v1581 = vsub.f32 %v1557, %v1573
        %v1582 = vsub.f32 %v1558, %v1574
        %v1583 = vsub.f32 %v1559, %v1575
        %v1584 = vsub.f32 %v1560, %v1576
        %v1585 = vsub.f32 %v1561, %v1577
        %v1586 = vsub.f32 %v1562, %v1578
        %v1587 = vsub.f32 %v1563, %v1579
        %v1588 = vadd.f32 %v1580, 1e-05
        %v1589 = vadd.f32 %v1581, 1e-05
        %v1590 = vadd.f32 %v1582, 1e-05
        %v1591 = vadd.f32 %v1583, 1e-05
        %v1592 = vadd.f32 %v1584, 1e-05
        %v1593 = vadd.f32 %v1585, 1e-05
        %v1594 = vadd.f32 %v1586, 1e-05
        %v1595 = vadd.f32 %v1587, 1e-05
        %v1596 = vrsqrt.pop %v1588
        %v1597 = vrsqrt.pop %v1589
        %v1598 = vrsqrt.pop %v1590
        %v1599 = vrsqrt.pop %v1591
        %v1600 = vrsqrt.pop %v1592
        %v1601 = vrsqrt.pop %v1593
        %v1602 = vrsqrt.pop %v1594
        %v1603 = vrsqrt.pop %v1595
        %v1604 = vmul.f32 %v1564, %v1596
        %v1605 = vmul.f32 %v1565, %v1597
        %v1606 = vmul.f32 %v1566, %v1598
        %v1607 = vmul.f32 %v1567, %v1599
        %v1608 = vmul.f32 %v1568, %v1600
        %v1609 = vmul.f32 %v1569, %v1601
        %v1610 = vmul.f32 %v1570, %v1602
        %v1611 = vmul.f32 %v1571, %v1603
        %v1612 = vld [vmem:[%s7] sm:$0x1]
        %v1614 = vlaneseq
        %v1615 = vshrl.u32 %v1614, 7
        %v1616 = vsub.s32 0, %v1615
        %v1617 = vrot.slane %v1612, %v1616
        %1618 = vrot.lane.b32.xlu0 %v1617, 32
        %v1619 = vpop.permute.xlu0 %1618
        %v1621 = vmul.f32 %v1604, %v1619
        %v1622 = vmul.f32 %v1605, %v1619
        %v1623 = vmul.f32 %v1606, %v1619
        %v1624 = vmul.f32 %v1607, %v1619
        %v1625 = vmul.f32 %v1608, %v1619
        %v1626 = vmul.f32 %v1609, %v1619
        %v1627 = vmul.f32 %v1610, %v1619
        %v1628 = vmul.f32 %v1611, %v1619
        %v1629 = vld [vmem:[%s8] sm:$0x1]
        %v1631 = vlaneseq
        %v1632 = vshrl.u32 %v1631, 7
        %v1633 = vsub.s32 0, %v1632
        %v1634 = vrot.slane %v1629, %v1633
        %1635 = vrot.lane.b32.xlu0 %v1634, 32
        %v1636 = vpop.permute.xlu0 %1635
        %v1638 = vadd.f32 %v1621, %v1636
        %v1639 = vadd.f32 %v1622, %v1636
        %v1640 = vadd.f32 %v1623, %v1636
        %v1641 = vadd.f32 %v1624, %v1636
        %v1642 = vadd.f32 %v1625, %v1636
        %v1643 = vadd.f32 %v1626, %v1636
        %v1644 = vadd.f32 %v1627, %v1636
        %v1645 = vadd.f32 %v1628, %v1636
        %v1646 = vpack.c.bf16 %v1639, %v1638
        %v1647 = vpack.c.bf16 %v1641, %v1640
        %v1648 = vpack.c.bf16 %v1643, %v1642
        %v1649 = vpack.c.bf16 %v1645, %v1644
        %v1650 = vld [vmem:[%s9] sm:$0xf]
        %v1651 = vld [vmem:[%s9 + $0x4] sm:$0xf]
        %v1652 = vld [vmem:[%s10] sm:$0x1]
        %v1654 = vlaneseq
        %v1655 = vshrl.u32 %v1654, 7
        %v1656 = vsub.s32 0, %v1655
        %v1657 = vrot.slane %v1652, %v1656
        %1663 = vrot.lane.b32.xlu0 %v1646, 96
        %v1664 = vpop.permute.xlu0 %1663
        %1665 = vrot.lane.b32.xlu0 %v1647, 96
        %v1666 = vpop.permute.xlu0 %1665
        %1667 = vrot.lane.b32.xlu0 %v1648, 96
        %v1668 = vpop.permute.xlu0 %1667
        %1669 = vrot.lane.b32.xlu0 %v1649, 96
        %v1670 = vpop.permute.xlu0 %1669
        %v1673 = vunpack.c.l.b16 %v1650
        %v1674 = vunpack.c.l.b16 %v1651
        %v1675 = vpack.c.b16 %v1674, %v1673
        %v1678 = vsel %vm808, %v1664, 0
        %v1681 = vsel %vm808, %v1666, 0
        %v1684 = vsel %vm808, %v1668, 0
        %v1687 = vsel %vm808, %v1670, 0
        %1689 = vmatprep.subr.bf16.mxu0 0
        %1690 = vmatpush1.bf16.msra.mxu0 %v1675
        %1691 = vmatprep.subr.bf16.mxu0 0
        %1692 = vmatpush1.bf16.msra.mxu0 0
        %1693 = vmatprep.subr.bf16.mxu0 0
        %1694 = vmatpush1.bf16.msra.mxu0 0
        %1695 = vmatprep.subr.bf16.mxu0 0
        %1696 = vmatpush1.bf16.msra.mxu0 0
        %1697 = vmatprep.subr.bf16.mxu0 0
        %1698 = vmatpush1.bf16.msra.mxu0 0
        %1699 = vmatprep.subr.bf16.mxu0 0
        %1700 = vmatpush1.bf16.msra.mxu0 0
        %1701 = vmatprep.subr.bf16.mxu0 0
        %1702 = vmatpush1.bf16.msra.mxu0 0
        %1703 = vmatprep.subr.bf16.mxu0 0
        %1704 = vmatpush1.bf16.msra.mxu0 0
        %1705 = vmatprep.subr.bf16.mxu0 0
        %1706 = vmatpush1.bf16.msra.mxu0 0
        %1707 = vmatprep.subr.bf16.mxu0 0
        %1708 = vmatpush1.bf16.msra.mxu0 0
        %1709 = vmatprep.subr.bf16.mxu0 0
        %1710 = vmatpush1.bf16.msra.mxu0 0
        %1711 = vmatprep.subr.bf16.mxu0 0
        %1712 = vmatpush1.bf16.msra.mxu0 0
        %1713 = vmatprep.subr.bf16.mxu0 0
        %1714 = vmatpush1.bf16.msra.mxu0 0
        %1715 = vmatprep.subr.bf16.mxu0 0
        %1716 = vmatpush1.bf16.msra.mxu0 0
        %1717 = vmatprep.subr.bf16.mxu0 0
        %1718 = vmatpush1.bf16.msra.mxu0 0
        %1719 = vmatprep.subr.bf16.mxu0 0
        %1720 = vmatpush1.bf16.msra.mxu0 0
        %1721 = vmatprep.mubr.bf16.mxu0 0
        %1722 = vmatmul.mubr.bf16.gmra.mrb[0].mxu0 %v1678
        %v1723 = vpop.f32.mrb[0].mxu0
        %v1724 = vadd.f32 %v1657, %v1723
        %v1725 = vpop.f32.mrb[0].mxu0
        %v1726 = vpop.f32.mrb[0].mxu0
        %v1727 = vadd.f32 %v1657, %v1726
        %v1728 = vpop.f32.mrb[0].mxu0
        %1729 = vmatprep.mubr.bf16.mxu0 0
        %1730 = vmatmul.mubr.bf16.gmra.mrb[0].mxu0 %v1681
        %v1731 = vpop.f32.mrb[0].mxu0
        %v1732 = vadd.f32 %v1657, %v1731
        %v1733 = vpop.f32.mrb[0].mxu0
        %v1734 = vpop.f32.mrb[0].mxu0
        %v1735 = vadd.f32 %v1657, %v1734
        %v1736 = vpop.f32.mrb[0].mxu0
        %1737 = vmatprep.mubr.bf16.mxu0 0
        %1738 = vmatmul.mubr.bf16.gmra.mrb[0].mxu0 %v1684
        %v1739 = vpop.f32.mrb[0].mxu0
        %v1740 = vadd.f32 %v1657, %v1739
        %v1741 = vpop.f32.mrb[0].mxu0
        %v1742 = vpop.f32.mrb[0].mxu0
        %v1743 = vadd.f32 %v1657, %v1742
        %v1744 = vpop.f32.mrb[0].mxu0
        %1745 = vmatprep.mubr.bf16.mxu0 0
        %1746 = vmatmul.mubr.bf16.gmra.mrb[0].mxu0 %v1687
        %v1747 = vpop.f32.mrb[0].mxu0
        %v1748 = vadd.f32 %v1657, %v1747
        %v1749 = vpop.f32.mrb[0].mxu0
        %v1750 = vpop.f32.mrb[0].mxu0
        %v1751 = vadd.f32 %v1657, %v1750
        %v1752 = vpop.f32.mrb[0].mxu0
        %1753 = vdwg.mxu0
        %v1754 = vmul.f32 %v1724, 0.5
        %v1755 = vmul.f32 %v1727, 0.5
        %v1756 = vmul.f32 %v1732, 0.5
        %v1757 = vmul.f32 %v1735, 0.5
        %v1758 = vmul.f32 %v1740, 0.5
        %v1759 = vmul.f32 %v1743, 0.5
        %v1760 = vmul.f32 %v1748, 0.5
        %v1761 = vmul.f32 %v1751, 0.5
        %v1762 = vmul.f32 %v1724, 0.044715
        %v1763 = vmul.f32 %v1727, 0.044715
        %v1764 = vmul.f32 %v1732, 0.044715
        %v1765 = vmul.f32 %v1735, 0.044715
        %v1766 = vmul.f32 %v1740, 0.044715
        %v1767 = vmul.f32 %v1743, 0.044715
        %v1768 = vmul.f32 %v1748, 0.044715
        %v1769 = vmul.f32 %v1751, 0.044715
        %v1770 = vmul.f32 %v1762, %v1724
        %v1771 = vmul.f32 %v1763, %v1727
        %v1772 = vmul.f32 %v1764, %v1732
        %v1773 = vmul.f32 %v1765, %v1735
        %v1774 = vmul.f32 %v1766, %v1740
        %v1775 = vmul.f32 %v1767, %v1743
        %v1776 = vmul.f32 %v1768, %v1748
        %v1777 = vmul.f32 %v1769, %v1751
        %v1778 = vmul.f32 %v1770, %v1724
        %v1779 = vmul.f32 %v1771, %v1727
        %v1780 = vmul.f32 %v1772, %v1732
        %v1781 = vmul.f32 %v1773, %v1735
        %v1782 = vmul.f32 %v1774, %v1740
        %v1783 = vmul.f32 %v1775, %v1743
        %v1784 = vmul.f32 %v1776, %v1748
        %v1785 = vmul.f32 %v1777, %v1751
        %v1786 = vadd.f32 %v1724, %v1778
        %v1787 = vadd.f32 %v1727, %v1779
        %v1788 = vadd.f32 %v1732, %v1780
        %v1789 = vadd.f32 %v1735, %v1781
        %v1790 = vadd.f32 %v1740, %v1782
        %v1791 = vadd.f32 %v1743, %v1783
        %v1792 = vadd.f32 %v1748, %v1784
        %v1793 = vadd.f32 %v1751, %v1785
        %v1794 = vmul.f32 %v1786, 0.7978846
        %v1795 = vmul.f32 %v1787, 0.7978846
        %v1796 = vmul.f32 %v1788, 0.7978846
        %v1797 = vmul.f32 %v1789, 0.7978846
        %v1798 = vmul.f32 %v1790, 0.7978846
        %v1799 = vmul.f32 %v1791, 0.7978846
        %v1800 = vmul.f32 %v1792, 0.7978846
        %v1801 = vmul.f32 %v1793, 0.7978846
        %v1802 = vtanh.pop %v1794
        %v1803 = vtanh.pop %v1795
        %v1804 = vtanh.pop %v1796
        %v1805 = vtanh.pop %v1797
        %v1806 = vtanh.pop %v1798
        %v1807 = vtanh.pop %v1799
        %v1808 = vtanh.pop %v1800
        %v1809 = vtanh.pop %v1801
        %v1810 = vadd.f32 %v1802, 1.0
        %v1811 = vadd.f32 %v1803, 1.0
        %v1812 = vadd.f32 %v1804, 1.0
        %v1813 = vadd.f32 %v1805, 1.0
        %v1814 = vadd.f32 %v1806, 1.0
        %v1815 = vadd.f32 %v1807, 1.0
        %v1816 = vadd.f32 %v1808, 1.0
        %v1817 = vadd.f32 %v1809, 1.0
        %v1818 = vmul.f32 %v1754, %v1810
        %v1819 = vmul.f32 %v1755, %v1811
        %v1820 = vmul.f32 %v1756, %v1812
        %v1821 = vmul.f32 %v1757, %v1813
        %v1822 = vmul.f32 %v1758, %v1814
        %v1823 = vmul.f32 %v1759, %v1815
        %v1824 = vmul.f32 %v1760, %v1816
        %v1825 = vmul.f32 %v1761, %v1817
        %v1826 = vpack.c.bf16 %v1819, %v1818
        %v1827 = vpack.c.bf16 %v1821, %v1820
        %v1828 = vpack.c.bf16 %v1823, %v1822
        %v1829 = vpack.c.bf16 %v1825, %v1824
        %v1830 = vld [vmem:[%s11] sm:$0xf]
        %v1831 = vld [vmem:[%s11 + $0x4] sm:$0xf]
        %v1832 = vld [vmem:[%s12] sm:$0x1]
        %v1834 = vlaneseq
        %v1835 = vshrl.u32 %v1834, 7
        %v1836 = vsub.s32 0, %v1835
        %v1837 = vrot.slane %v1832, %v1836
        %v1841 = vunpack.c.l.b16 %v1830
        %v1842 = vunpack.c.l.b16 %v1831
        %v1843 = vpack.c.b16 %v1842, %v1841
        %v1846 = vsel %vm808, %v1826, 0
        %v1849 = vsel %vm808, %v1827, 0
        %v1852 = vsel %vm808, %v1828, 0
        %v1855 = vsel %vm808, %v1829, 0
        %1857 = vmatprep.subr.bf16.mxu0 0
        %1858 = vmatpush1.bf16.msra.mxu0 %v1843
        %1859 = vmatprep.subr.bf16.mxu0 0
        %1860 = vmatpush1.bf16.msra.mxu0 0
        %1861 = vmatprep.subr.bf16.mxu0 0
        %1862 = vmatpush1.bf16.msra.mxu0 0
        %1863 = vmatprep.subr.bf16.mxu0 0
        %1864 = vmatpush1.bf16.msra.mxu0 0
        %1865 = vmatprep.subr.bf16.mxu0 0
        %1866 = vmatpush1.bf16.msra.mxu0 0
        %1867 = vmatprep.subr.bf16.mxu0 0
        %1868 = vmatpush1.bf16.msra.mxu0 0
        %1869 = vmatprep.subr.bf16.mxu0 0
        %1870 = vmatpush1.bf16.msra.mxu0 0
        %1871 = vmatprep.subr.bf16.mxu0 0
        %1872 = vmatpush1.bf16.msra.mxu0 0
        %1873 = vmatprep.subr.bf16.mxu0 0
        %1874 = vmatpush1.bf16.msra.mxu0 0
        %1875 = vmatprep.subr.bf16.mxu0 0
        %1876 = vmatpush1.bf16.msra.mxu0 0
        %1877 = vmatprep.subr.bf16.mxu0 0
        %1878 = vmatpush1.bf16.msra.mxu0 0
        %1879 = vmatprep.subr.bf16.mxu0 0
        %1880 = vmatpush1.bf16.msra.mxu0 0
        %1881 = vmatprep.subr.bf16.mxu0 0
        %1882 = vmatpush1.bf16.msra.mxu0 0
        %1883 = vmatprep.subr.bf16.mxu0 0
        %1884 = vmatpush1.bf16.msra.mxu0 0
        %1885 = vmatprep.subr.bf16.mxu0 0
        %1886 = vmatpush1.bf16.msra.mxu0 0
        %1887 = vmatprep.subr.bf16.mxu0 0
        %1888 = vmatpush1.bf16.msra.mxu0 0
        %1889 = vmatprep.mubr.bf16.mxu0 0
        %1890 = vmatmul.mubr.bf16.gmra.mrb[0].mxu0 %v1846
        %v1891 = vpop.f32.mrb[0].mxu0
        %v1892 = vadd.f32 %v1837, %v1891
        %v1893 = vpop.f32.mrb[0].mxu0
        %v1894 = vpop.f32.mrb[0].mxu0
        %v1895 = vadd.f32 %v1837, %v1894
        %v1896 = vpop.f32.mrb[0].mxu0
        %1897 = vmatprep.mubr.bf16.mxu0 0
        %1898 = vmatmul.mubr.bf16.gmra.mrb[0].mxu0 %v1849
        %v1899 = vpop.f32.mrb[0].mxu0
        %v1900 = vadd.f32 %v1837, %v1899
        %v1901 = vpop.f32.mrb[0].mxu0
        %v1902 = vpop.f32.mrb[0].mxu0
        %v1903 = vadd.f32 %v1837, %v1902
        %v1904 = vpop.f32.mrb[0].mxu0
        %1905 = vmatprep.mubr.bf16.mxu0 0
        %1906 = vmatmul.mubr.bf16.gmra.mrb[0].mxu0 %v1852
        %v1907 = vpop.f32.mrb[0].mxu0
        %v1908 = vadd.f32 %v1837, %v1907
        %v1909 = vpop.f32.mrb[0].mxu0
        %v1910 = vpop.f32.mrb[0].mxu0
        %v1911 = vadd.f32 %v1837, %v1910
        %v1912 = vpop.f32.mrb[0].mxu0
        %1913 = vmatprep.mubr.bf16.mxu0 0
        %1914 = vmatmul.mubr.bf16.gmra.mrb[0].mxu0 %v1855
        %v1915 = vpop.f32.mrb[0].mxu0
        %v1916 = vadd.f32 %v1837, %v1915
        %v1917 = vpop.f32.mrb[0].mxu0
        %v1918 = vpop.f32.mrb[0].mxu0
        %v1919 = vadd.f32 %v1837, %v1918
        %v1920 = vpop.f32.mrb[0].mxu0
        %1921 = vdwg.mxu0
        %1930 = vrot.lane.b32.xlu0 %v1892, 32
        %v1931 = vpop.permute.xlu0 %1930
        %1932 = vrot.lane.b32.xlu0 %v1895, 32
        %v1933 = vpop.permute.xlu0 %1932
        %1934 = vrot.lane.b32.xlu0 %v1900, 32
        %v1935 = vpop.permute.xlu0 %1934
        %1936 = vrot.lane.b32.xlu0 %v1903, 32
        %v1937 = vpop.permute.xlu0 %1936
        %1938 = vrot.lane.b32.xlu0 %v1908, 32
        %v1939 = vpop.permute.xlu0 %1938
        %1940 = vrot.lane.b32.xlu0 %v1911, 32
        %v1941 = vpop.permute.xlu0 %1940
        %1942 = vrot.lane.b32.xlu0 %v1916, 32
        %v1943 = vpop.permute.xlu0 %1942
        %1944 = vrot.lane.b32.xlu0 %v1919, 32
        %v1945 = vpop.permute.xlu0 %1944
        %v1954 = vadd.f32 %v1420, %v1931
        %v1955 = vadd.f32 %v1421, %v1933
        %v1956 = vadd.f32 %v1422, %v1935
        %v1957 = vadd.f32 %v1423, %v1937
        %v1958 = vadd.f32 %v1424, %v1939
        %v1959 = vadd.f32 %v1425, %v1941
        %v1960 = vadd.f32 %v1426, %v1943
        %v1961 = vadd.f32 %v1427, %v1945
        %v1962 = vpack.c.bf16 %v1955, %v1954
        %v1963 = vpack.c.bf16 %v1957, %v1956
        %v1964 = vpack.c.bf16 %v1959, %v1958
        %v1965 = vpack.c.bf16 %v1961, %v1960
        %v1966 = vld [vmem:[%s15] sm:$0xf]
        %v1967 = vld [vmem:[%s15 + $0x4] sm:$0xf]
        %v1970 = vunpack.c.l.b16 %v1966
        %v1971 = vunpack.c.l.b16 %v1967
        %v1972 = vpack.c.b16 %v1971, %v1970
        %1977 = vrot.lane.b32.xlu0 %v1962, 96
        %v1978 = vpop.permute.xlu0 %1977
        %1979 = vrot.lane.b32.xlu0 %v1963, 96
        %v1980 = vpop.permute.xlu0 %1979
        %1981 = vrot.lane.b32.xlu0 %v1964, 96
        %v1982 = vpop.permute.xlu0 %1981
        %1983 = vrot.lane.b32.xlu0 %v1965, 96
        %v1984 = vpop.permute.xlu0 %1983
        %v1990 = vsel %vm1116, %v1972, 0
        %1992 = vmatprep.subr.bf16.mxu0 0
        %1993 = vmatpush1.bf16.msra.mxu0 %v1978
        %1994 = vmatprep.subr.bf16.mxu0 0
        %1995 = vmatpush1.bf16.msra.mxu0 %v1980
        %1996 = vmatprep.subr.bf16.mxu0 0
        %1997 = vmatpush1.bf16.msra.mxu0 %v1982
        %1998 = vmatprep.subr.bf16.mxu0 0
        %1999 = vmatpush1.bf16.msra.mxu0 %v1984
        %2000 = vmatprep.subr.bf16.mxu0 0
        %2001 = vmatpush1.bf16.msra.mxu0 0
        %2002 = vmatprep.subr.bf16.mxu0 0
        %2003 = vmatpush1.bf16.msra.mxu0 0
        %2004 = vmatprep.subr.bf16.mxu0 0
        %2005 = vmatpush1.bf16.msra.mxu0 0
        %2006 = vmatprep.subr.bf16.mxu0 0
        %2007 = vmatpush1.bf16.msra.mxu0 0
        %2008 = vmatprep.subr.bf16.mxu0 0
        %2009 = vmatpush1.bf16.msra.mxu0 0
        %2010 = vmatprep.subr.bf16.mxu0 0
        %2011 = vmatpush1.bf16.msra.mxu0 0
        %2012 = vmatprep.subr.bf16.mxu0 0
        %2013 = vmatpush1.bf16.msra.mxu0 0
        %2014 = vmatprep.subr.bf16.mxu0 0
        %2015 = vmatpush1.bf16.msra.mxu0 0
        %2016 = vmatprep.subr.bf16.mxu0 0
        %2017 = vmatpush1.bf16.msra.mxu0 0
        %2018 = vmatprep.subr.bf16.mxu0 0
        %2019 = vmatpush1.bf16.msra.mxu0 0
        %2020 = vmatprep.subr.bf16.mxu0 0
        %2021 = vmatpush1.bf16.msra.mxu0 0
        %2022 = vmatprep.subr.bf16.mxu0 0
        %2023 = vmatpush1.bf16.msra.mxu0 0
        %2024 = vmatprep.mubr.bf16.mxu0 0
        %2025 = vmatmul.mubr.bf16.gmra.mrb[0].mxu0 %v1990
        %v2026 = vpop.f32.mrb[0].mxu0
        %v2027 = vadd.f32 0.0, %v2026
        %v2028 = vpop.f32.mrb[0].mxu0
        %v2029 = vpop.f32.mrb[0].mxu0
        %v2030 = vadd.f32 0.0, %v2029
        %v2031 = vpop.f32.mrb[0].mxu0
        %2032 = vdwg.mxu0
        %v2033 = vpack.c.bf16 %v2030, %v2027
        %v2034 = vld [vmem:[%s13] sm:$0xf]
        %v2035 = vld [vmem:[%s13 + $0x4] sm:$0xf]
        %s2036 = scalar_lea.vmem %s15, 8
        %v2037 = vld [vmem:[%s2036] sm:$0xf]
        %v2038 = vld [vmem:[%s2036 + $0x4] sm:$0xf]
        %v2041 = vunpack.c.l.b16 %v2037
        %v2042 = vunpack.c.l.b16 %v2038
        %v2043 = vpack.c.b16 %v2042, %v2041
        %v2045 = vsel %vm1116, %v2043, 0
        %2047 = vmatprep.subr.bf16.mxu0 0
        %2048 = vmatpush1.bf16.msra.mxu0 %v1978
        %2049 = vmatprep.subr.bf16.mxu0 0
        %2050 = vmatpush1.bf16.msra.mxu0 %v1980
        %2051 = vmatprep.subr.bf16.mxu0 0
        %2052 = vmatpush1.bf16.msra.mxu0 %v1982
        %2053 = vmatprep.subr.bf16.mxu0 0
        %2054 = vmatpush1.bf16.msra.mxu0 %v1984
        %2055 = vmatprep.subr.bf16.mxu0 0
        %2056 = vmatpush1.bf16.msra.mxu0 0
        %2057 = vmatprep.subr.bf16.mxu0 0
        %2058 = vmatpush1.bf16.msra.mxu0 0
        %2059 = vmatprep.subr.bf16.mxu0 0
        %2060 = vmatpush1.bf16.msra.mxu0 0
        %2061 = vmatprep.subr.bf16.mxu0 0
        %2062 = vmatpush1.bf16.msra.mxu0 0
        %2063 = vmatprep.subr.bf16.mxu0 0
        %2064 = vmatpush1.bf16.msra.mxu0 0
        %2065 = vmatprep.subr.bf16.mxu0 0
        %2066 = vmatpush1.bf16.msra.mxu0 0
        %2067 = vmatprep.subr.bf16.mxu0 0
        %2068 = vmatpush1.bf16.msra.mxu0 0
        %2069 = vmatprep.subr.bf16.mxu0 0
        %2070 = vmatpush1.bf16.msra.mxu0 0
        %2071 = vmatprep.subr.bf16.mxu0 0
        %2072 = vmatpush1.bf16.msra.mxu0 0
        %2073 = vmatprep.subr.bf16.mxu0 0
        %2074 = vmatpush1.bf16.msra.mxu0 0
        %2075 = vmatprep.subr.bf16.mxu0 0
        %2076 = vmatpush1.bf16.msra.mxu0 0
        %2077 = vmatprep.subr.bf16.mxu0 0
        %2078 = vmatpush1.bf16.msra.mxu0 0
        %2079 = vmatprep.mubr.bf16.mxu0 0
        %2080 = vmatmul.mubr.bf16.gmra.mrb[0].mxu0 %v2045
        %v2081 = vpop.f32.mrb[0].mxu0
        %v2082 = vadd.f32 0.0, %v2081
        %v2083 = vpop.f32.mrb[0].mxu0
        %v2084 = vpop.f32.mrb[0].mxu0
        %v2085 = vadd.f32 0.0, %v2084
        %v2086 = vpop.f32.mrb[0].mxu0
        %2087 = vdwg.mxu0
        %v2088 = vpack.c.bf16 %v2085, %v2082
        %s2089 = scalar_lea.vmem %s13, 8
        %v2090 = vld [vmem:[%s2089] sm:$0xf]
        %v2091 = vld [vmem:[%s2089 + $0x4] sm:$0xf]
        %v2094 = vunpack.c.l.b16 %v2090
        %v2095 = vunpack.c.l.b16 %v2091
        %v2096 = vpack.c.b16 %v2095, %v2094
        %v2099 = vsel %vm808, %v2088, 0
        %2101 = vmatprep.subr.bf16.mxu0 0
        %2102 = vmatpush1.bf16.msra.mxu0 %v2096
        %2103 = vmatprep.subr.bf16.mxu0 0
        %2104 = vmatpush1.bf16.msra.mxu0 0
        %2105 = vmatprep.subr.bf16.mxu0 0
        %2106 = vmatpush1.bf16.msra.mxu0 0
        %2107 = vmatprep.subr.bf16.mxu0 0
        %2108 = vmatpush1.bf16.msra.mxu0 0
        %2109 = vmatprep.subr.bf16.mxu0 0
        %2110 = vmatpush1.bf16.msra.mxu0 0
        %2111 = vmatprep.subr.bf16.mxu0 0
        %2112 = vmatpush1.bf16.msra.mxu0 0
        %2113 = vmatprep.subr.bf16.mxu0 0
        %2114 = vmatpush1.bf16.msra.mxu0 0
        %2115 = vmatprep.subr.bf16.mxu0 0
        %2116 = vmatpush1.bf16.msra.mxu0 0
        %2117 = vmatprep.subr.bf16.mxu0 0
        %2118 = vmatpush1.bf16.msra.mxu0 0
        %2119 = vmatprep.subr.bf16.mxu0 0
        %2120 = vmatpush1.bf16.msra.mxu0 0
        %2121 = vmatprep.subr.bf16.mxu0 0
        %2122 = vmatpush1.bf16.msra.mxu0 0
        %2123 = vmatprep.subr.bf16.mxu0 0
        %2124 = vmatpush1.bf16.msra.mxu0 0
        %2125 = vmatprep.subr.bf16.mxu0 0
        %2126 = vmatpush1.bf16.msra.mxu0 0
        %2127 = vmatprep.subr.bf16.mxu0 0
        %2128 = vmatpush1.bf16.msra.mxu0 0
        %2129 = vmatprep.subr.bf16.mxu0 0
        %2130 = vmatpush1.bf16.msra.mxu0 0
        %2131 = vmatprep.subr.bf16.mxu0 0
        %2132 = vmatpush1.bf16.msra.mxu0 0
        %2133 = vmatprep.mubr.bf16.mxu0 0
        %2134 = vmatmul.mubr.bf16.gmra.mrb[0].mxu0 %v2099
        %v2135 = vpop.f32.mrb[0].mxu0
        %v2136 = vadd.f32 0.0, %v2135
        %v2137 = vpop.f32.mrb[0].mxu0
        %v2138 = vpop.f32.mrb[0].mxu0
        %v2139 = vadd.f32 0.0, %v2138
        %v2140 = vpop.f32.mrb[0].mxu0
        %2141 = vdwg.mxu0
        %v2144 = vunpack.c.l.b16 %v2034
        %v2145 = vunpack.c.l.b16 %v2035
        %v2146 = vpack.c.b16 %v2145, %v2144
        %v2149 = vsel %vm808, %v2033, 0
        %2151 = vmatprep.subr.bf16.mxu0 0
        %2152 = vmatpush1.bf16.msra.mxu0 %v2146
        %2153 = vmatprep.subr.bf16.mxu0 0
        %2154 = vmatpush1.bf16.msra.mxu0 0
        %2155 = vmatprep.subr.bf16.mxu0 0
        %2156 = vmatpush1.bf16.msra.mxu0 0
        %2157 = vmatprep.subr.bf16.mxu0 0
        %2158 = vmatpush1.bf16.msra.mxu0 0
        %2159 = vmatprep.subr.bf16.mxu0 0
        %2160 = vmatpush1.bf16.msra.mxu0 0
        %2161 = vmatprep.subr.bf16.mxu0 0
        %2162 = vmatpush1.bf16.msra.mxu0 0
        %2163 = vmatprep.subr.bf16.mxu0 0
        %2164 = vmatpush1.bf16.msra.mxu0 0
        %2165 = vmatprep.subr.bf16.mxu0 0
        %2166 = vmatpush1.bf16.msra.mxu0 0
        %2167 = vmatprep.subr.bf16.mxu0 0
        %2168 = vmatpush1.bf16.msra.mxu0 0
        %2169 = vmatprep.subr.bf16.mxu0 0
        %2170 = vmatpush1.bf16.msra.mxu0 0
        %2171 = vmatprep.subr.bf16.mxu0 0
        %2172 = vmatpush1.bf16.msra.mxu0 0
        %2173 = vmatprep.subr.bf16.mxu0 0
        %2174 = vmatpush1.bf16.msra.mxu0 0
        %2175 = vmatprep.subr.bf16.mxu0 0
        %2176 = vmatpush1.bf16.msra.mxu0 0
        %2177 = vmatprep.subr.bf16.mxu0 0
        %2178 = vmatpush1.bf16.msra.mxu0 0
        %2179 = vmatprep.subr.bf16.mxu0 0
        %2180 = vmatpush1.bf16.msra.mxu0 0
        %2181 = vmatprep.subr.bf16.mxu0 0
        %2182 = vmatpush1.bf16.msra.mxu0 0
        %2183 = vmatprep.mubr.bf16.mxu0 0
        %2184 = vmatmul.mubr.bf16.gmra.mrb[0].mxu0 %v2149
        %v2185 = vpop.f32.mrb[0].mxu0
        %v2186 = vadd.f32 %v2136, %v2185
        %v2187 = vpop.f32.mrb[0].mxu0
        %v2188 = vpop.f32.mrb[0].mxu0
        %v2189 = vadd.f32 %v2139, %v2188
        %v2190 = vpop.f32.mrb[0].mxu0
        %2191 = vdwg.mxu0
        %s2192 = scalar_lea.vmem %s15, 16
        %v2193 = vld [vmem:[%s2192] sm:$0xf]
        %v2194 = vld [vmem:[%s2192 + $0x4] sm:$0xf]
        %v2197 = vunpack.c.l.b16 %v2193
        %v2198 = vunpack.c.l.b16 %v2194
        %v2199 = vpack.c.b16 %v2198, %v2197
        %v2201 = vsel %vm1116, %v2199, 0
        %2203 = vmatprep.subr.bf16.mxu0 0
        %2204 = vmatpush1.bf16.msra.mxu0 %v1978
        %2205 = vmatprep.subr.bf16.mxu0 0
        %2206 = vmatpush1.bf16.msra.mxu0 %v1980
        %2207 = vmatprep.subr.bf16.mxu0 0
        %2208 = vmatpush1.bf16.msra.mxu0 %v1982
        %2209 = vmatprep.subr.bf16.mxu0 0
        %2210 = vmatpush1.bf16.msra.mxu0 %v1984
        %2211 = vmatprep.subr.bf16.mxu0 0
        %2212 = vmatpush1.bf16.msra.mxu0 0
        %2213 = vmatprep.subr.bf16.mxu0 0
        %2214 = vmatpush1.bf16.msra.mxu0 0
        %2215 = vmatprep.subr.bf16.mxu0 0
        %2216 = vmatpush1.bf16.msra.mxu0 0
        %2217 = vmatprep.subr.bf16.mxu0 0
        %2218 = vmatpush1.bf16.msra.mxu0 0
        %2219 = vmatprep.subr.bf16.mxu0 0
        %2220 = vmatpush1.bf16.msra.mxu0 0
        %2221 = vmatprep.subr.bf16.mxu0 0
        %2222 = vmatpush1.bf16.msra.mxu0 0
        %2223 = vmatprep.subr.bf16.mxu0 0
        %2224 = vmatpush1.bf16.msra.mxu0 0
        %2225 = vmatprep.subr.bf16.mxu0 0
        %2226 = vmatpush1.bf16.msra.mxu0 0
        %2227 = vmatprep.subr.bf16.mxu0 0
        %2228 = vmatpush1.bf16.msra.mxu0 0
        %2229 = vmatprep.subr.bf16.mxu0 0
        %2230 = vmatpush1.bf16.msra.mxu0 0
        %2231 = vmatprep.subr.bf16.mxu0 0
        %2232 = vmatpush1.bf16.msra.mxu0 0
        %2233 = vmatprep.subr.bf16.mxu0 0
        %2234 = vmatpush1.bf16.msra.mxu0 0
        %2235 = vmatprep.mubr.bf16.mxu0 0
        %2236 = vmatmul.mubr.bf16.gmra.mrb[0].mxu0 %v2201
        %v2237 = vpop.f32.mrb[0].mxu0
        %v2238 = vadd.f32 0.0, %v2237
        %v2239 = vpop.f32.mrb[0].mxu0
        %v2240 = vpop.f32.mrb[0].mxu0
        %v2241 = vadd.f32 0.0, %v2240
        %v2242 = vpop.f32.mrb[0].mxu0
        %2243 = vdwg.mxu0
        %v2244 = vpack.c.bf16 %v2241, %v2238
        %s2245 = scalar_lea.vmem %s13, 16
        %v2246 = vld [vmem:[%s2245] sm:$0xf]
        %v2247 = vld [vmem:[%s2245 + $0x4] sm:$0xf]
        %v2250 = vunpack.c.l.b16 %v2246
        %v2251 = vunpack.c.l.b16 %v2247
        %v2252 = vpack.c.b16 %v2251, %v2250
        %v2255 = vsel %vm808, %v2244, 0
        %2257 = vmatprep.subr.bf16.mxu0 0
        %2258 = vmatpush1.bf16.msra.mxu0 %v2252
        %2259 = vmatprep.subr.bf16.mxu0 0
        %2260 = vmatpush1.bf16.msra.mxu0 0
        %2261 = vmatprep.subr.bf16.mxu0 0
        %2262 = vmatpush1.bf16.msra.mxu0 0
        %2263 = vmatprep.subr.bf16.mxu0 0
        %2264 = vmatpush1.bf16.msra.mxu0 0
        %2265 = vmatprep.subr.bf16.mxu0 0
        %2266 = vmatpush1.bf16.msra.mxu0 0
        %2267 = vmatprep.subr.bf16.mxu0 0
        %2268 = vmatpush1.bf16.msra.mxu0 0
        %2269 = vmatprep.subr.bf16.mxu0 0
        %2270 = vmatpush1.bf16.msra.mxu0 0
        %2271 = vmatprep.subr.bf16.mxu0 0
        %2272 = vmatpush1.bf16.msra.mxu0 0
        %2273 = vmatprep.subr.bf16.mxu0 0
        %2274 = vmatpush1.bf16.msra.mxu0 0
        %2275 = vmatprep.subr.bf16.mxu0 0
        %2276 = vmatpush1.bf16.msra.mxu0 0
        %2277 = vmatprep.subr.bf16.mxu0 0
        %2278 = vmatpush1.bf16.msra.mxu0 0
        %2279 = vmatprep.subr.bf16.mxu0 0
        %2280 = vmatpush1.bf16.msra.mxu0 0
        %2281 = vmatprep.subr.bf16.mxu0 0
        %2282 = vmatpush1.bf16.msra.mxu0 0
        %2283 = vmatprep.subr.bf16.mxu0 0
        %2284 = vmatpush1.bf16.msra.mxu0 0
        %2285 = vmatprep.subr.bf16.mxu0 0
        %2286 = vmatpush1.bf16.msra.mxu0 0
        %2287 = vmatprep.subr.bf16.mxu0 0
        %2288 = vmatpush1.bf16.msra.mxu0 0
        %2289 = vmatprep.mubr.bf16.mxu0 0
        %2290 = vmatmul.mubr.bf16.gmra.mrb[0].mxu0 %v2255
        %v2291 = vpop.f32.mrb[0].mxu0
        %v2292 = vadd.f32 0.0, %v2291
        %v2293 = vpop.f32.mrb[0].mxu0
        %v2294 = vpop.f32.mrb[0].mxu0
        %v2295 = vadd.f32 0.0, %v2294
        %v2296 = vpop.f32.mrb[0].mxu0
        %2297 = vdwg.mxu0
        %v2298 = vadd.f32 %v2186, %v2292
        %v2299 = vadd.f32 %v2189, %v2295
        %s2300 = scalar_lea.vmem %s15, 24
        %v2301 = vld [vmem:[%s2300] sm:$0xf]
        %v2302 = vld [vmem:[%s2300 + $0x4] sm:$0xf]
        %v2305 = vunpack.c.l.b16 %v2301
        %v2306 = vunpack.c.l.b16 %v2302
        %v2307 = vpack.c.b16 %v2306, %v2305
        %v2309 = vsel %vm1116, %v2307, 0
        %2311 = vmatprep.subr.bf16.mxu0 0
        %2312 = vmatpush1.bf16.msra.mxu0 %v1978
        %2313 = vmatprep.subr.bf16.mxu0 0
        %2314 = vmatpush1.bf16.msra.mxu0 %v1980
        %2315 = vmatprep.subr.bf16.mxu0 0
        %2316 = vmatpush1.bf16.msra.mxu0 %v1982
        %2317 = vmatprep.subr.bf16.mxu0 0
        %2318 = vmatpush1.bf16.msra.mxu0 %v1984
        %2319 = vmatprep.subr.bf16.mxu0 0
        %2320 = vmatpush1.bf16.msra.mxu0 0
        %2321 = vmatprep.subr.bf16.mxu0 0
        %2322 = vmatpush1.bf16.msra.mxu0 0
        %2323 = vmatprep.subr.bf16.mxu0 0
        %2324 = vmatpush1.bf16.msra.mxu0 0
        %2325 = vmatprep.subr.bf16.mxu0 0
        %2326 = vmatpush1.bf16.msra.mxu0 0
        %2327 = vmatprep.subr.bf16.mxu0 0
        %2328 = vmatpush1.bf16.msra.mxu0 0
        %2329 = vmatprep.subr.bf16.mxu0 0
        %2330 = vmatpush1.bf16.msra.mxu0 0
        %2331 = vmatprep.subr.bf16.mxu0 0
        %2332 = vmatpush1.bf16.msra.mxu0 0
        %2333 = vmatprep.subr.bf16.mxu0 0
        %2334 = vmatpush1.bf16.msra.mxu0 0
        %2335 = vmatprep.subr.bf16.mxu0 0
        %2336 = vmatpush1.bf16.msra.mxu0 0
        %2337 = vmatprep.subr.bf16.mxu0 0
        %2338 = vmatpush1.bf16.msra.mxu0 0
        %2339 = vmatprep.subr.bf16.mxu0 0
        %2340 = vmatpush1.bf16.msra.mxu0 0
        %2341 = vmatprep.subr.bf16.mxu0 0
        %2342 = vmatpush1.bf16.msra.mxu0 0
        %2343 = vmatprep.mubr.bf16.mxu0 0
        %2344 = vmatmul.mubr.bf16.gmra.mrb[0].mxu0 %v2309
        %v2345 = vpop.f32.mrb[0].mxu0
        %v2346 = vadd.f32 0.0, %v2345
        %v2347 = vpop.f32.mrb[0].mxu0
        %v2348 = vpop.f32.mrb[0].mxu0
        %v2349 = vadd.f32 0.0, %v2348
        %v2350 = vpop.f32.mrb[0].mxu0
        %2351 = vdwg.mxu0
        %v2352 = vpack.c.bf16 %v2349, %v2346
        %s2353 = scalar_lea.vmem %s13, 24
        %v2354 = vld [vmem:[%s2353] sm:$0xf]
        %v2355 = vld [vmem:[%s2353 + $0x4] sm:$0xf]
        %v2358 = vunpack.c.l.b16 %v2354
        %v2359 = vunpack.c.l.b16 %v2355
        %v2360 = vpack.c.b16 %v2359, %v2358
        %v2363 = vsel %vm808, %v2352, 0
        %2365 = vmatprep.subr.bf16.mxu0 0
        %2366 = vmatpush1.bf16.msra.mxu0 %v2360
        %2367 = vmatprep.subr.bf16.mxu0 0
        %2368 = vmatpush1.bf16.msra.mxu0 0
        %2369 = vmatprep.subr.bf16.mxu0 0
        %2370 = vmatpush1.bf16.msra.mxu0 0
        %2371 = vmatprep.subr.bf16.mxu0 0
        %2372 = vmatpush1.bf16.msra.mxu0 0
        %2373 = vmatprep.subr.bf16.mxu0 0
        %2374 = vmatpush1.bf16.msra.mxu0 0
        %2375 = vmatprep.subr.bf16.mxu0 0
        %2376 = vmatpush1.bf16.msra.mxu0 0
        %2377 = vmatprep.subr.bf16.mxu0 0
        %2378 = vmatpush1.bf16.msra.mxu0 0
        %2379 = vmatprep.subr.bf16.mxu0 0
        %2380 = vmatpush1.bf16.msra.mxu0 0
        %2381 = vmatprep.subr.bf16.mxu0 0
        %2382 = vmatpush1.bf16.msra.mxu0 0
        %2383 = vmatprep.subr.bf16.mxu0 0
        %2384 = vmatpush1.bf16.msra.mxu0 0
        %2385 = vmatprep.subr.bf16.mxu0 0
        %2386 = vmatpush1.bf16.msra.mxu0 0
        %2387 = vmatprep.subr.bf16.mxu0 0
        %2388 = vmatpush1.bf16.msra.mxu0 0
        %2389 = vmatprep.subr.bf16.mxu0 0
        %2390 = vmatpush1.bf16.msra.mxu0 0
        %2391 = vmatprep.subr.bf16.mxu0 0
        %2392 = vmatpush1.bf16.msra.mxu0 0
        %2393 = vmatprep.subr.bf16.mxu0 0
        %2394 = vmatpush1.bf16.msra.mxu0 0
        %2395 = vmatprep.subr.bf16.mxu0 0
        %2396 = vmatpush1.bf16.msra.mxu0 0
        %2397 = vmatprep.mubr.bf16.mxu0 0
        %2398 = vmatmul.mubr.bf16.gmra.mrb[0].mxu0 %v2363
        %v2399 = vpop.f32.mrb[0].mxu0
        %v2400 = vadd.f32 0.0, %v2399
        %v2401 = vpop.f32.mrb[0].mxu0
        %v2402 = vpop.f32.mrb[0].mxu0
        %v2403 = vadd.f32 0.0, %v2402
        %v2404 = vpop.f32.mrb[0].mxu0
        %2405 = vdwg.mxu0
        %v2406 = vadd.f32 %v2298, %v2400
        %v2407 = vadd.f32 %v2299, %v2403
        %s2408 = scalar_lea.vmem %s15, 32
        %v2409 = vld [vmem:[%s2408] sm:$0xf]
        %v2410 = vld [vmem:[%s2408 + $0x4] sm:$0xf]
        %v2413 = vunpack.c.l.b16 %v2409
        %v2414 = vunpack.c.l.b16 %v2410
        %v2415 = vpack.c.b16 %v2414, %v2413
        %v2417 = vsel %vm1116, %v2415, 0
        %2419 = vmatprep.subr.bf16.mxu0 0
        %2420 = vmatpush1.bf16.msra.mxu0 %v1978
        %2421 = vmatprep.subr.bf16.mxu0 0
        %2422 = vmatpush1.bf16.msra.mxu0 %v1980
        %2423 = vmatprep.subr.bf16.mxu0 0
        %2424 = vmatpush1.bf16.msra.mxu0 %v1982
        %2425 = vmatprep.subr.bf16.mxu0 0
        %2426 = vmatpush1.bf16.msra.mxu0 %v1984
        %2427 = vmatprep.subr.bf16.mxu0 0
        %2428 = vmatpush1.bf16.msra.mxu0 0
        %2429 = vmatprep.subr.bf16.mxu0 0
        %2430 = vmatpush1.bf16.msra.mxu0 0
        %2431 = vmatprep.subr.bf16.mxu0 0
        %2432 = vmatpush1.bf16.msra.mxu0 0
        %2433 = vmatprep.subr.bf16.mxu0 0
        %2434 = vmatpush1.bf16.msra.mxu0 0
        %2435 = vmatprep.subr.bf16.mxu0 0
        %2436 = vmatpush1.bf16.msra.mxu0 0
        %2437 = vmatprep.subr.bf16.mxu0 0
        %2438 = vmatpush1.bf16.msra.mxu0 0
        %2439 = vmatprep.subr.bf16.mxu0 0
        %2440 = vmatpush1.bf16.msra.mxu0 0
        %2441 = vmatprep.subr.bf16.mxu0 0
        %2442 = vmatpush1.bf16.msra.mxu0 0
        %2443 = vmatprep.subr.bf16.mxu0 0
        %2444 = vmatpush1.bf16.msra.mxu0 0
        %2445 = vmatprep.subr.bf16.mxu0 0
        %2446 = vmatpush1.bf16.msra.mxu0 0
        %2447 = vmatprep.subr.bf16.mxu0 0
        %2448 = vmatpush1.bf16.msra.mxu0 0
        %2449 = vmatprep.subr.bf16.mxu0 0
        %2450 = vmatpush1.bf16.msra.mxu0 0
        %2451 = vmatprep.mubr.bf16.mxu0 0
        %2452 = vmatmul.mubr.bf16.gmra.mrb[0].mxu0 %v2417
        %v2453 = vpop.f32.mrb[0].mxu0
        %v2454 = vadd.f32 0.0, %v2453
        %v2455 = vpop.f32.mrb[0].mxu0
        %v2456 = vpop.f32.mrb[0].mxu0
        %v2457 = vadd.f32 0.0, %v2456
        %v2458 = vpop.f32.mrb[0].mxu0
        %2459 = vdwg.mxu0
        %v2460 = vpack.c.bf16 %v2457, %v2454
        %s2461 = scalar_lea.vmem %s13, 32
        %v2462 = vld [vmem:[%s2461] sm:$0xf]
        %v2463 = vld [vmem:[%s2461 + $0x4] sm:$0xf]
        %v2466 = vunpack.c.l.b16 %v2462
        %v2467 = vunpack.c.l.b16 %v2463
        %v2468 = vpack.c.b16 %v2467, %v2466
        %v2471 = vsel %vm808, %v2460, 0
        %2473 = vmatprep.subr.bf16.mxu0 0
        %2474 = vmatpush1.bf16.msra.mxu0 %v2468
        %2475 = vmatprep.subr.bf16.mxu0 0
        %2476 = vmatpush1.bf16.msra.mxu0 0
        %2477 = vmatprep.subr.bf16.mxu0 0
        %2478 = vmatpush1.bf16.msra.mxu0 0
        %2479 = vmatprep.subr.bf16.mxu0 0
        %2480 = vmatpush1.bf16.msra.mxu0 0
        %2481 = vmatprep.subr.bf16.mxu0 0
        %2482 = vmatpush1.bf16.msra.mxu0 0
        %2483 = vmatprep.subr.bf16.mxu0 0
        %2484 = vmatpush1.bf16.msra.mxu0 0
        %2485 = vmatprep.subr.bf16.mxu0 0
        %2486 = vmatpush1.bf16.msra.mxu0 0
        %2487 = vmatprep.subr.bf16.mxu0 0
        %2488 = vmatpush1.bf16.msra.mxu0 0
        %2489 = vmatprep.subr.bf16.mxu0 0
        %2490 = vmatpush1.bf16.msra.mxu0 0
        %2491 = vmatprep.subr.bf16.mxu0 0
        %2492 = vmatpush1.bf16.msra.mxu0 0
        %2493 = vmatprep.subr.bf16.mxu0 0
        %2494 = vmatpush1.bf16.msra.mxu0 0
        %2495 = vmatprep.subr.bf16.mxu0 0
        %2496 = vmatpush1.bf16.msra.mxu0 0
        %2497 = vmatprep.subr.bf16.mxu0 0
        %2498 = vmatpush1.bf16.msra.mxu0 0
        %2499 = vmatprep.subr.bf16.mxu0 0
        %2500 = vmatpush1.bf16.msra.mxu0 0
        %2501 = vmatprep.subr.bf16.mxu0 0
        %2502 = vmatpush1.bf16.msra.mxu0 0
        %2503 = vmatprep.subr.bf16.mxu0 0
        %2504 = vmatpush1.bf16.msra.mxu0 0
        %2505 = vmatprep.mubr.bf16.mxu0 0
        %2506 = vmatmul.mubr.bf16.gmra.mrb[0].mxu0 %v2471
        %v2507 = vpop.f32.mrb[0].mxu0
        %v2508 = vadd.f32 0.0, %v2507
        %v2509 = vpop.f32.mrb[0].mxu0
        %v2510 = vpop.f32.mrb[0].mxu0
        %v2511 = vadd.f32 0.0, %v2510
        %v2512 = vpop.f32.mrb[0].mxu0
        %2513 = vdwg.mxu0
        %v2514 = vadd.f32 %v2406, %v2508
        %v2515 = vadd.f32 %v2407, %v2511
        %s2516 = scalar_lea.vmem %s15, 40
        %v2517 = vld [vmem:[%s2516] sm:$0xf]
        %v2518 = vld [vmem:[%s2516 + $0x4] sm:$0xf]
        %v2521 = vunpack.c.l.b16 %v2517
        %v2522 = vunpack.c.l.b16 %v2518
        %v2523 = vpack.c.b16 %v2522, %v2521
        %v2525 = vsel %vm1116, %v2523, 0
        %2527 = vmatprep.subr.bf16.mxu0 0
        %2528 = vmatpush1.bf16.msra.mxu0 %v1978
        %2529 = vmatprep.subr.bf16.mxu0 0
        %2530 = vmatpush1.bf16.msra.mxu0 %v1980
        %2531 = vmatprep.subr.bf16.mxu0 0
        %2532 = vmatpush1.bf16.msra.mxu0 %v1982
        %2533 = vmatprep.subr.bf16.mxu0 0
        %2534 = vmatpush1.bf16.msra.mxu0 %v1984
        %2535 = vmatprep.subr.bf16.mxu0 0
        %2536 = vmatpush1.bf16.msra.mxu0 0
        %2537 = vmatprep.subr.bf16.mxu0 0
        %2538 = vmatpush1.bf16.msra.mxu0 0
        %2539 = vmatprep.subr.bf16.mxu0 0
        %2540 = vmatpush1.bf16.msra.mxu0 0
        %2541 = vmatprep.subr.bf16.mxu0 0
        %2542 = vmatpush1.bf16.msra.mxu0 0
        %2543 = vmatprep.subr.bf16.mxu0 0
        %2544 = vmatpush1.bf16.msra.mxu0 0
        %2545 = vmatprep.subr.bf16.mxu0 0
        %2546 = vmatpush1.bf16.msra.mxu0 0
        %2547 = vmatprep.subr.bf16.mxu0 0
        %2548 = vmatpush1.bf16.msra.mxu0 0
        %2549 = vmatprep.subr.bf16.mxu0 0
        %2550 = vmatpush1.bf16.msra.mxu0 0
        %2551 = vmatprep.subr.bf16.mxu0 0
        %2552 = vmatpush1.bf16.msra.mxu0 0
        %2553 = vmatprep.subr.bf16.mxu0 0
        %2554 = vmatpush1.bf16.msra.mxu0 0
        %2555 = vmatprep.subr.bf16.mxu0 0
        %2556 = vmatpush1.bf16.msra.mxu0 0
        %2557 = vmatprep.subr.bf16.mxu0 0
        %2558 = vmatpush1.bf16.msra.mxu0 0
        %2559 = vmatprep.mubr.bf16.mxu0 0
        %2560 = vmatmul.mubr.bf16.gmra.mrb[0].mxu0 %v2525
        %v2561 = vpop.f32.mrb[0].mxu0
        %v2562 = vadd.f32 0.0, %v2561
        %v2563 = vpop.f32.mrb[0].mxu0
        %v2564 = vpop.f32.mrb[0].mxu0
        %v2565 = vadd.f32 0.0, %v2564
        %v2566 = vpop.f32.mrb[0].mxu0
        %2567 = vdwg.mxu0
        %v2568 = vpack.c.bf16 %v2565, %v2562
        %s2569 = scalar_lea.vmem %s13, 40
        %v2570 = vld [vmem:[%s2569] sm:$0xf]
        %v2571 = vld [vmem:[%s2569 + $0x4] sm:$0xf]
        %v2574 = vunpack.c.l.b16 %v2570
        %v2575 = vunpack.c.l.b16 %v2571
        %v2576 = vpack.c.b16 %v2575, %v2574
        %v2579 = vsel %vm808, %v2568, 0
        %2581 = vmatprep.subr.bf16.mxu0 0
        %2582 = vmatpush1.bf16.msra.mxu0 %v2576
        %2583 = vmatprep.subr.bf16.mxu0 0
        %2584 = vmatpush1.bf16.msra.mxu0 0
        %2585 = vmatprep.subr.bf16.mxu0 0
        %2586 = vmatpush1.bf16.msra.mxu0 0
        %2587 = vmatprep.subr.bf16.mxu0 0
        %2588 = vmatpush1.bf16.msra.mxu0 0
        %2589 = vmatprep.subr.bf16.mxu0 0
        %2590 = vmatpush1.bf16.msra.mxu0 0
        %2591 = vmatprep.subr.bf16.mxu0 0
        %2592 = vmatpush1.bf16.msra.mxu0 0
        %2593 = vmatprep.subr.bf16.mxu0 0
        %2594 = vmatpush1.bf16.msra.mxu0 0
        %2595 = vmatprep.subr.bf16.mxu0 0
        %2596 = vmatpush1.bf16.msra.mxu0 0
        %2597 = vmatprep.subr.bf16.mxu0 0
        %2598 = vmatpush1.bf16.msra.mxu0 0
        %2599 = vmatprep.subr.bf16.mxu0 0
        %2600 = vmatpush1.bf16.msra.mxu0 0
        %2601 = vmatprep.subr.bf16.mxu0 0
        %2602 = vmatpush1.bf16.msra.mxu0 0
        %2603 = vmatprep.subr.bf16.mxu0 0
        %2604 = vmatpush1.bf16.msra.mxu0 0
        %2605 = vmatprep.subr.bf16.mxu0 0
        %2606 = vmatpush1.bf16.msra.mxu0 0
        %2607 = vmatprep.subr.bf16.mxu0 0
        %2608 = vmatpush1.bf16.msra.mxu0 0
        %2609 = vmatprep.subr.bf16.mxu0 0
        %2610 = vmatpush1.bf16.msra.mxu0 0
        %2611 = vmatprep.subr.bf16.mxu0 0
        %2612 = vmatpush1.bf16.msra.mxu0 0
        %2613 = vmatprep.mubr.bf16.mxu0 0
        %2614 = vmatmul.mubr.bf16.gmra.mrb[0].mxu0 %v2579
        %v2615 = vpop.f32.mrb[0].mxu0
        %v2616 = vadd.f32 0.0, %v2615
        %v2617 = vpop.f32.mrb[0].mxu0
        %v2618 = vpop.f32.mrb[0].mxu0
        %v2619 = vadd.f32 0.0, %v2618
        %v2620 = vpop.f32.mrb[0].mxu0
        %2621 = vdwg.mxu0
        %v2622 = vadd.f32 %v2514, %v2616
        %v2623 = vadd.f32 %v2515, %v2619
        %s2624 = scalar_lea.vmem %s15, 48
        %v2625 = vld [vmem:[%s2624] sm:$0xf]
        %v2626 = vld [vmem:[%s2624 + $0x4] sm:$0xf]
        %v2629 = vunpack.c.l.b16 %v2625
        %v2630 = vunpack.c.l.b16 %v2626
        %v2631 = vpack.c.b16 %v2630, %v2629
        %v2633 = vsel %vm1116, %v2631, 0
        %2635 = vmatprep.subr.bf16.mxu0 0
        %2636 = vmatpush1.bf16.msra.mxu0 %v1978
        %2637 = vmatprep.subr.bf16.mxu0 0
        %2638 = vmatpush1.bf16.msra.mxu0 %v1980
        %2639 = vmatprep.subr.bf16.mxu0 0
        %2640 = vmatpush1.bf16.msra.mxu0 %v1982
        %2641 = vmatprep.subr.bf16.mxu0 0
        %2642 = vmatpush1.bf16.msra.mxu0 %v1984
        %2643 = vmatprep.subr.bf16.mxu0 0
        %2644 = vmatpush1.bf16.msra.mxu0 0
        %2645 = vmatprep.subr.bf16.mxu0 0
        %2646 = vmatpush1.bf16.msra.mxu0 0
        %2647 = vmatprep.subr.bf16.mxu0 0
        %2648 = vmatpush1.bf16.msra.mxu0 0
        %2649 = vmatprep.subr.bf16.mxu0 0
        %2650 = vmatpush1.bf16.msra.mxu0 0
        %2651 = vmatprep.subr.bf16.mxu0 0
        %2652 = vmatpush1.bf16.msra.mxu0 0
        %2653 = vmatprep.subr.bf16.mxu0 0
        %2654 = vmatpush1.bf16.msra.mxu0 0
        %2655 = vmatprep.subr.bf16.mxu0 0
        %2656 = vmatpush1.bf16.msra.mxu0 0
        %2657 = vmatprep.subr.bf16.mxu0 0
        %2658 = vmatpush1.bf16.msra.mxu0 0
        %2659 = vmatprep.subr.bf16.mxu0 0
        %2660 = vmatpush1.bf16.msra.mxu0 0
        %2661 = vmatprep.subr.bf16.mxu0 0
        %2662 = vmatpush1.bf16.msra.mxu0 0
        %2663 = vmatprep.subr.bf16.mxu0 0
        %2664 = vmatpush1.bf16.msra.mxu0 0
        %2665 = vmatprep.subr.bf16.mxu0 0
        %2666 = vmatpush1.bf16.msra.mxu0 0
        %2667 = vmatprep.mubr.bf16.mxu0 0
        %2668 = vmatmul.mubr.bf16.gmra.mrb[0].mxu0 %v2633
        %v2669 = vpop.f32.mrb[0].mxu0
        %v2670 = vadd.f32 0.0, %v2669
        %v2671 = vpop.f32.mrb[0].mxu0
        %v2672 = vpop.f32.mrb[0].mxu0
        %v2673 = vadd.f32 0.0, %v2672
        %v2674 = vpop.f32.mrb[0].mxu0
        %2675 = vdwg.mxu0
        %v2676 = vpack.c.bf16 %v2673, %v2670
        %s2677 = scalar_lea.vmem %s13, 48
        %v2678 = vld [vmem:[%s2677] sm:$0xf]
        %v2679 = vld [vmem:[%s2677 + $0x4] sm:$0xf]
        %v2682 = vunpack.c.l.b16 %v2678
        %v2683 = vunpack.c.l.b16 %v2679
        %v2684 = vpack.c.b16 %v2683, %v2682
        %v2687 = vsel %vm808, %v2676, 0
        %2689 = vmatprep.subr.bf16.mxu0 0
        %2690 = vmatpush1.bf16.msra.mxu0 %v2684
        %2691 = vmatprep.subr.bf16.mxu0 0
        %2692 = vmatpush1.bf16.msra.mxu0 0
        %2693 = vmatprep.subr.bf16.mxu0 0
        %2694 = vmatpush1.bf16.msra.mxu0 0
        %2695 = vmatprep.subr.bf16.mxu0 0
        %2696 = vmatpush1.bf16.msra.mxu0 0
        %2697 = vmatprep.subr.bf16.mxu0 0
        %2698 = vmatpush1.bf16.msra.mxu0 0
        %2699 = vmatprep.subr.bf16.mxu0 0
        %2700 = vmatpush1.bf16.msra.mxu0 0
        %2701 = vmatprep.subr.bf16.mxu0 0
        %2702 = vmatpush1.bf16.msra.mxu0 0
        %2703 = vmatprep.subr.bf16.mxu0 0
        %2704 = vmatpush1.bf16.msra.mxu0 0
        %2705 = vmatprep.subr.bf16.mxu0 0
        %2706 = vmatpush1.bf16.msra.mxu0 0
        %2707 = vmatprep.subr.bf16.mxu0 0
        %2708 = vmatpush1.bf16.msra.mxu0 0
        %2709 = vmatprep.subr.bf16.mxu0 0
        %2710 = vmatpush1.bf16.msra.mxu0 0
        %2711 = vmatprep.subr.bf16.mxu0 0
        %2712 = vmatpush1.bf16.msra.mxu0 0
        %2713 = vmatprep.subr.bf16.mxu0 0
        %2714 = vmatpush1.bf16.msra.mxu0 0
        %2715 = vmatprep.subr.bf16.mxu0 0
        %2716 = vmatpush1.bf16.msra.mxu0 0
        %2717 = vmatprep.subr.bf16.mxu0 0
        %2718 = vmatpush1.bf16.msra.mxu0 0
        %2719 = vmatprep.subr.bf16.mxu0 0
        %2720 = vmatpush1.bf16.msra.mxu0 0
        %2721 = vmatprep.mubr.bf16.mxu0 0
        %2722 = vmatmul.mubr.bf16.gmra.mrb[0].mxu0 %v2687
        %v2723 = vpop.f32.mrb[0].mxu0
        %v2724 = vadd.f32 0.0, %v2723
        %v2725 = vpop.f32.mrb[0].mxu0
        %v2726 = vpop.f32.mrb[0].mxu0
        %v2727 = vadd.f32 0.0, %v2726
        %v2728 = vpop.f32.mrb[0].mxu0
        %2729 = vdwg.mxu0
        %v2730 = vadd.f32 %v2622, %v2724
        %v2731 = vadd.f32 %v2623, %v2727
        %s2732 = scalar_lea.vmem %s15, 56
        %v2733 = vld [vmem:[%s2732] sm:$0xf]
        %v2734 = vld [vmem:[%s2732 + $0x4] sm:$0xf]
        %v2737 = vunpack.c.l.b16 %v2733
        %v2738 = vunpack.c.l.b16 %v2734
        %v2739 = vpack.c.b16 %v2738, %v2737
        %v2741 = vsel %vm1116, %v2739, 0
        %2743 = vmatprep.subr.bf16.mxu0 0
        %2744 = vmatpush1.bf16.msra.mxu0 %v1978
        %2745 = vmatprep.subr.bf16.mxu0 0
        %2746 = vmatpush1.bf16.msra.mxu0 %v1980
        %2747 = vmatprep.subr.bf16.mxu0 0
        %2748 = vmatpush1.bf16.msra.mxu0 %v1982
        %2749 = vmatprep.subr.bf16.mxu0 0
        %2750 = vmatpush1.bf16.msra.mxu0 %v1984
        %2751 = vmatprep.subr.bf16.mxu0 0
        %2752 = vmatpush1.bf16.msra.mxu0 0
        %2753 = vmatprep.subr.bf16.mxu0 0
        %2754 = vmatpush1.bf16.msra.mxu0 0
        %2755 = vmatprep.subr.bf16.mxu0 0
        %2756 = vmatpush1.bf16.msra.mxu0 0
        %2757 = vmatprep.subr.bf16.mxu0 0
        %2758 = vmatpush1.bf16.msra.mxu0 0
        %2759 = vmatprep.subr.bf16.mxu0 0
        %2760 = vmatpush1.bf16.msra.mxu0 0
        %2761 = vmatprep.subr.bf16.mxu0 0
        %2762 = vmatpush1.bf16.msra.mxu0 0
        %2763 = vmatprep.subr.bf16.mxu0 0
        %2764 = vmatpush1.bf16.msra.mxu0 0
        %2765 = vmatprep.subr.bf16.mxu0 0
        %2766 = vmatpush1.bf16.msra.mxu0 0
        %2767 = vmatprep.subr.bf16.mxu0 0
        %2768 = vmatpush1.bf16.msra.mxu0 0
        %2769 = vmatprep.subr.bf16.mxu0 0
        %2770 = vmatpush1.bf16.msra.mxu0 0
        %2771 = vmatprep.subr.bf16.mxu0 0
        %2772 = vmatpush1.bf16.msra.mxu0 0
        %2773 = vmatprep.subr.bf16.mxu0 0
        %2774 = vmatpush1.bf16.msra.mxu0 0
        %2775 = vmatprep.mubr.bf16.mxu0 0
        %2776 = vmatmul.mubr.bf16.gmra.mrb[0].mxu0 %v2741
        %v2777 = vpop.f32.mrb[0].mxu0
        %v2778 = vadd.f32 0.0, %v2777
        %v2779 = vpop.f32.mrb[0].mxu0
        %v2780 = vpop.f32.mrb[0].mxu0
        %v2781 = vadd.f32 0.0, %v2780
        %v2782 = vpop.f32.mrb[0].mxu0
        %2783 = vdwg.mxu0
        %v2784 = vpack.c.bf16 %v2781, %v2778
        %s2785 = scalar_lea.vmem %s13, 56
        %v2786 = vld [vmem:[%s2785] sm:$0xf]
        %v2787 = vld [vmem:[%s2785 + $0x4] sm:$0xf]
        %v2790 = vunpack.c.l.b16 %v2786
        %v2791 = vunpack.c.l.b16 %v2787
        %v2792 = vpack.c.b16 %v2791, %v2790
        %v2795 = vsel %vm808, %v2784, 0
        %2797 = vmatprep.subr.bf16.mxu0 0
        %2798 = vmatpush1.bf16.msra.mxu0 %v2792
        %2799 = vmatprep.subr.bf16.mxu0 0
        %2800 = vmatpush1.bf16.msra.mxu0 0
        %2801 = vmatprep.subr.bf16.mxu0 0
        %2802 = vmatpush1.bf16.msra.mxu0 0
        %2803 = vmatprep.subr.bf16.mxu0 0
        %2804 = vmatpush1.bf16.msra.mxu0 0
        %2805 = vmatprep.subr.bf16.mxu0 0
        %2806 = vmatpush1.bf16.msra.mxu0 0
        %2807 = vmatprep.subr.bf16.mxu0 0
        %2808 = vmatpush1.bf16.msra.mxu0 0
        %2809 = vmatprep.subr.bf16.mxu0 0
        %2810 = vmatpush1.bf16.msra.mxu0 0
        %2811 = vmatprep.subr.bf16.mxu0 0
        %2812 = vmatpush1.bf16.msra.mxu0 0
        %2813 = vmatprep.subr.bf16.mxu0 0
        %2814 = vmatpush1.bf16.msra.mxu0 0
        %2815 = vmatprep.subr.bf16.mxu0 0
        %2816 = vmatpush1.bf16.msra.mxu0 0
        %2817 = vmatprep.subr.bf16.mxu0 0
        %2818 = vmatpush1.bf16.msra.mxu0 0
        %2819 = vmatprep.subr.bf16.mxu0 0
        %2820 = vmatpush1.bf16.msra.mxu0 0
        %2821 = vmatprep.subr.bf16.mxu0 0
        %2822 = vmatpush1.bf16.msra.mxu0 0
        %2823 = vmatprep.subr.bf16.mxu0 0
        %2824 = vmatpush1.bf16.msra.mxu0 0
        %2825 = vmatprep.subr.bf16.mxu0 0
        %2826 = vmatpush1.bf16.msra.mxu0 0
        %2827 = vmatprep.subr.bf16.mxu0 0
        %2828 = vmatpush1.bf16.msra.mxu0 0
        %2829 = vmatprep.mubr.bf16.mxu0 0
        %2830 = vmatmul.mubr.bf16.gmra.mrb[0].mxu0 %v2795
        %v2831 = vpop.f32.mrb[0].mxu0
        %v2832 = vadd.f32 0.0, %v2831
        %v2833 = vpop.f32.mrb[0].mxu0
        %v2834 = vpop.f32.mrb[0].mxu0
        %v2835 = vadd.f32 0.0, %v2834
        %v2836 = vpop.f32.mrb[0].mxu0
        %2837 = vdwg.mxu0
        %v2838 = vadd.f32 %v2730, %v2832
        %v2839 = vadd.f32 %v2731, %v2835
        %s2840 = scalar_lea.vmem %s15, 64
        %v2841 = vld [vmem:[%s2840] sm:$0xf]
        %v2842 = vld [vmem:[%s2840 + $0x4] sm:$0xf]
        %v2845 = vunpack.c.l.b16 %v2841
        %v2846 = vunpack.c.l.b16 %v2842
        %v2847 = vpack.c.b16 %v2846, %v2845
        %v2849 = vsel %vm1116, %v2847, 0
        %2851 = vmatprep.subr.bf16.mxu0 0
        %2852 = vmatpush1.bf16.msra.mxu0 %v1978
        %2853 = vmatprep.subr.bf16.mxu0 0
        %2854 = vmatpush1.bf16.msra.mxu0 %v1980
        %2855 = vmatprep.subr.bf16.mxu0 0
        %2856 = vmatpush1.bf16.msra.mxu0 %v1982
        %2857 = vmatprep.subr.bf16.mxu0 0
        %2858 = vmatpush1.bf16.msra.mxu0 %v1984
        %2859 = vmatprep.subr.bf16.mxu0 0
        %2860 = vmatpush1.bf16.msra.mxu0 0
        %2861 = vmatprep.subr.bf16.mxu0 0
        %2862 = vmatpush1.bf16.msra.mxu0 0
        %2863 = vmatprep.subr.bf16.mxu0 0
        %2864 = vmatpush1.bf16.msra.mxu0 0
        %2865 = vmatprep.subr.bf16.mxu0 0
        %2866 = vmatpush1.bf16.msra.mxu0 0
        %2867 = vmatprep.subr.bf16.mxu0 0
        %2868 = vmatpush1.bf16.msra.mxu0 0
        %2869 = vmatprep.subr.bf16.mxu0 0
        %2870 = vmatpush1.bf16.msra.mxu0 0
        %2871 = vmatprep.subr.bf16.mxu0 0
        %2872 = vmatpush1.bf16.msra.mxu0 0
        %2873 = vmatprep.subr.bf16.mxu0 0
        %2874 = vmatpush1.bf16.msra.mxu0 0
        %2875 = vmatprep.subr.bf16.mxu0 0
        %2876 = vmatpush1.bf16.msra.mxu0 0
        %2877 = vmatprep.subr.bf16.mxu0 0
        %2878 = vmatpush1.bf16.msra.mxu0 0
        %2879 = vmatprep.subr.bf16.mxu0 0
        %2880 = vmatpush1.bf16.msra.mxu0 0
        %2881 = vmatprep.subr.bf16.mxu0 0
        %2882 = vmatpush1.bf16.msra.mxu0 0
        %2883 = vmatprep.mubr.bf16.mxu0 0
        %2884 = vmatmul.mubr.bf16.gmra.mrb[0].mxu0 %v2849
        %v2885 = vpop.f32.mrb[0].mxu0
        %v2886 = vadd.f32 0.0, %v2885
        %v2887 = vpop.f32.mrb[0].mxu0
        %v2888 = vpop.f32.mrb[0].mxu0
        %v2889 = vadd.f32 0.0, %v2888
        %v2890 = vpop.f32.mrb[0].mxu0
        %2891 = vdwg.mxu0
        %v2892 = vpack.c.bf16 %v2889, %v2886
        %s2893 = scalar_lea.vmem %s13, 64
        %v2894 = vld [vmem:[%s2893] sm:$0xf]
        %v2895 = vld [vmem:[%s2893 + $0x4] sm:$0xf]
        %v2898 = vunpack.c.l.b16 %v2894
        %v2899 = vunpack.c.l.b16 %v2895
        %v2900 = vpack.c.b16 %v2899, %v2898
        %v2903 = vsel %vm808, %v2892, 0
        %2905 = vmatprep.subr.bf16.mxu0 0
        %2906 = vmatpush1.bf16.msra.mxu0 %v2900
        %2907 = vmatprep.subr.bf16.mxu0 0
        %2908 = vmatpush1.bf16.msra.mxu0 0
        %2909 = vmatprep.subr.bf16.mxu0 0
        %2910 = vmatpush1.bf16.msra.mxu0 0
        %2911 = vmatprep.subr.bf16.mxu0 0
        %2912 = vmatpush1.bf16.msra.mxu0 0
        %2913 = vmatprep.subr.bf16.mxu0 0
        %2914 = vmatpush1.bf16.msra.mxu0 0
        %2915 = vmatprep.subr.bf16.mxu0 0
        %2916 = vmatpush1.bf16.msra.mxu0 0
        %2917 = vmatprep.subr.bf16.mxu0 0
        %2918 = vmatpush1.bf16.msra.mxu0 0
        %2919 = vmatprep.subr.bf16.mxu0 0
        %2920 = vmatpush1.bf16.msra.mxu0 0
        %2921 = vmatprep.subr.bf16.mxu0 0
        %2922 = vmatpush1.bf16.msra.mxu0 0
        %2923 = vmatprep.subr.bf16.mxu0 0
        %2924 = vmatpush1.bf16.msra.mxu0 0
        %2925 = vmatprep.subr.bf16.mxu0 0
        %2926 = vmatpush1.bf16.msra.mxu0 0
        %2927 = vmatprep.subr.bf16.mxu0 0
        %2928 = vmatpush1.bf16.msra.mxu0 0
        %2929 = vmatprep.subr.bf16.mxu0 0
        %2930 = vmatpush1.bf16.msra.mxu0 0
        %2931 = vmatprep.subr.bf16.mxu0 0
        %2932 = vmatpush1.bf16.msra.mxu0 0
        %2933 = vmatprep.subr.bf16.mxu0 0
        %2934 = vmatpush1.bf16.msra.mxu0 0
        %2935 = vmatprep.subr.bf16.mxu0 0
        %2936 = vmatpush1.bf16.msra.mxu0 0
        %2937 = vmatprep.mubr.bf16.mxu0 0
        %2938 = vmatmul.mubr.bf16.gmra.mrb[0].mxu0 %v2903
        %v2939 = vpop.f32.mrb[0].mxu0
        %v2940 = vadd.f32 0.0, %v2939
        %v2941 = vpop.f32.mrb[0].mxu0
        %v2942 = vpop.f32.mrb[0].mxu0
        %v2943 = vadd.f32 0.0, %v2942
        %v2944 = vpop.f32.mrb[0].mxu0
        %2945 = vdwg.mxu0
        %v2946 = vadd.f32 %v2838, %v2940
        %v2947 = vadd.f32 %v2839, %v2943
        %v2948 = vld [vmem:[%s14] sm:$0x1]
        %v2950 = vlaneseq
        %v2951 = vshrl.u32 %v2950, 7
        %v2952 = vsub.s32 0, %v2951
        %v2953 = vrot.slane %v2948, %v2952
        %v2955 = vadd.f32 %v2946, %v2953
        %v2956 = vadd.f32 %v2947, %v2953
        %2957 = vst [vmem:[%s514] sm:$0xff] %v2955
        %2958 = vst [vmem:[%s514 + $0x8] sm:$0xff] %v2956
        %s2959 = sand.u32 %s379, 1
        %s2960 = scalar_lea.sflag [#allocation3], %s2959
        %s2961 = sand.u32 %s379, 1
        %s2962 = smul.addr %s2961, 16
        %s2963 = scalar_lea.vmem [#allocation2], %s2962
        // Predicated region
        $region85: #{t2t_forward.1} parent=83 // pred_check
          %p2964 = pneg %p389
        $region86: #{t2t_forward.1} parent=83 // pred_check_branch
          %2966 = sbr.rel (%p2964) target = $region88
        $region87: #{t2t_forward.1} parent=83 // pred_region
          %s2968 = ssub.s32 256, 256
          %2969 = vsyncadd %s2960, %s2968
          %s2970 = smul.addr %s30, 2
          %s2971 = smul.addr %s2970, 128
          %s2972 = scalar_lea.hbm %s16, %s2971
          %s2973 = sshll.u32 %s2963, 4
          %s2974 = int_to_ptr.vmem [resolvable:$true] %s2973
          %2979 = dma.vmem_to_hbm [thread:$0]  %s2974, 256, %s2972, %s2960, 128, 128, 8
        $region88: #{t2t_forward.1} parent=83 // pred_fallthru
          _
      $region84: #{t2t_forward.1} parent=5 // pred_fallthru
        _
      %p2980 = scmp.le.s32.totalorder 2, %s25
      // Predicated region
      $region89: #{t2t_forward.1} parent=5 // pred_check
        %p2981 = pneg %p2980
      $region90: #{t2t_forward.1} parent=5 // pred_check_branch
        %2983 = sbr.rel (%p2981) target = $region92
      $region91: #{t2t_forward.1} parent=5 // pred_region
        %s2984 = ssub.s32 %s25, 2
        // Predicated region
        $region93: #{t2t_forward.1} parent=91 // pred_check
          %p2985 = pneg %p395
        $region94: #{t2t_forward.1} parent=91 // pred_check_branch
          %2987 = sbr.rel (%p2985) target = $region96
        $region95: #{t2t_forward.1} parent=91 // pred_region
          %s2988 = sand.u32 %s380, 1
          %s2989 = scalar_lea.sflag [#allocation3], %s2988
          %s2990 = sand.u32 %s380, 1
          %s2991 = smul.addr %s2990, 16
          %s2992 = scalar_lea.vmem [#allocation2], %s2991
          %2993 = dma.done %s2989, 256
        $region96: #{t2t_forward.1} parent=91 // pred_fallthru
          _
      $region92: #{t2t_forward.1} parent=5 // pred_fallthru
        _
    $region6: #{t2t_forward.1} parent=1 // loop_footer
      %s29 = sadd.s32 1, %s25
    $region7: #{t2t_forward.1} parent=1 // loop_footer_branch
      %24 = sbr.rel target = $region3
    $region8: #{t2t_forward.1} parent=1 // loop_exit
      _
    %2994 = vsyncpa [#allocation3], 1
    %s2995 = scalar_lea.sflag [#allocation3], 1
    %2996 = vsyncpa %s2995, 1

</llo_original>
